<compile_context>
chip_gen: v6e
topology: v6e:2x2x1
jax: 0.10.0
libtpu: 0.0.40
codegen_flags: <defaults>
</compile_context>

<pallas_src>
import jax
import jax.numpy as jnp
from jax import lax
from jax.experimental import pallas as pl
from jax.experimental.pallas import tpu as pltpu

LANES = 128
BLOCK_ROWS = 4096        # 4096 x 128 x f32 = 2 MiB per input per buffer
NUM_PARTIALS = 2         # leading "parallel" grid axis (2 TensorCores on v7x)


def _make_kernel(block_rows, k_steps, rows_total, needs_mask):
    """Builds the kernel with the static tiling constants baked in."""

    def kernel(a_ref, b_ref, out_ref, acc_ref):
        c = pl.program_id(0)   # partial-sum slot (parallel axis)
        k = pl.program_id(1)   # reduction sweep over row-blocks (arbitrary)

        @pl.when(k == 0)
        def _():
            acc_ref[...] = jnp.zeros_like(acc_ref)

        diff = jnp.abs(a_ref[...].astype(jnp.float32)
                       - b_ref[...].astype(jnp.float32))

        if needs_mask:
            # Zero out rows that belong to the ragged tail (or to a phantom
            # block whose index_map was clamped).  jnp.where selects, so even
            # NaN garbage in the OOB region contributes exactly 0.
            logical_block = c * k_steps + k
            row = (logical_block * block_rows
                   + lax.broadcasted_iota(jnp.int32, diff.shape, 0))
            diff = jnp.where(row < rows_total, diff, 0.0)

        # Vector accumulator: fold the (block_rows, 128) tile into one f32
        # vreg worth of partial sums (pure VPU adds, no per-step XLU reduce).
        acc_ref[...] += jnp.sum(diff.reshape(-1, 8, LANES), axis=0)

        @pl.when(k == k_steps - 1)
        def _():
            out_ref[...] = acc_ref[...]

    return kernel


def flow_loss(gen_flows: jax.Array, gt_flows: jax.Array) -> jax.Array:
    """Equivalent of torch.mean(torch.abs(gen_flows - gt_flows))."""
    assert gen_flows.shape == gt_flows.shape, "shapes must match"
    n_elems = gen_flows.size

    a = gen_flows.reshape(-1)
    b = gt_flows.reshape(-1)

    # Free (no-copy) reshape to a lane-dense (rows, 128) slab.  Only when the
    # element count is not a multiple of 128 do we pad (<=127 zeros; the zeros
    # contribute 0 to |a-b| and the mean divides by the true n_elems).
    if n_elems % LANES != 0:
        pad = LANES - (n_elems % LANES)
        a = jnp.pad(a, (0, pad))
        b = jnp.pad(b, (0, pad))
    rows_total = a.size // LANES
    a = a.reshape(rows_total, LANES)
    b = b.reshape(rows_total, LANES)

    num_blocks = pl.cdiv(rows_total, BLOCK_ROWS)
    k_steps = pl.cdiv(num_blocks, NUM_PARTIALS)
    needs_mask = (rows_total % BLOCK_ROWS != 0) or (num_blocks % NUM_PARTIALS != 0)
    max_block = num_blocks - 1

    def in_index_map(c, k):
        blk = c * k_steps + k
        if needs_mask:
            # Keep phantom (past-the-end) blocks pointing at valid data; the
            # in-kernel mask zeroes their contribution.
            blk = jnp.minimum(blk, max_block)
        return (blk, 0)

    kernel = _make_kernel(BLOCK_ROWS, k_steps, rows_total, needs_mask)

    partials = pl.pallas_call(
        kernel,
        out_shape=jax.ShapeDtypeStruct((NUM_PARTIALS * 8, LANES), jnp.float32),
        grid_spec=pltpu.PrefetchScalarGridSpec(
            num_scalar_prefetch=0,
            grid=(NUM_PARTIALS, k_steps),
            in_specs=[
                pl.BlockSpec((BLOCK_ROWS, LANES), in_index_map),
                pl.BlockSpec((BLOCK_ROWS, LANES), in_index_map),
            ],
            out_specs=pl.BlockSpec((8, LANES), lambda c, k: (c, 0)),
            scratch_shapes=[pltpu.VMEM((8, LANES), jnp.float32)],
        ),
        compiler_params=pltpu.CompilerParams(
            dimension_semantics=("parallel", "arbitrary"),
        ),
    )(a, b)

    # Tiny final reduction + mean in plain JAX (2*8*128 = 2048 f32 values).
    return (jnp.sum(partials) / jnp.float32(n_elems)).astype(jnp.float32)


if __name__ == "__main__":
    key = jax.random.PRNGKey(0)

    def check(shape, dtype=jnp.float32):
        k1, k2 = jax.random.split(jax.random.fold_in(key, hash(shape) % 1000))
        gen = jax.random.normal(k1, shape, dtype=dtype)
        gt = jax.random.normal(k2, shape, dtype=dtype)
        loss = flow_loss(gen, gt)
        jax.block_until_ready(loss)
        ref = jnp.mean(jnp.abs(gen.astype(jnp.float32) - gt.astype(jnp.float32)))
        assert jnp.allclose(loss, ref, rtol=1e-5, atol=1e-6), (shape, loss, ref)

    # Primary small flow-like NCHW case (2 flow channels).
    check((2, 2, 16, 16))
    # Divisible case: 2 full row-blocks split across the parallel axis, no mask.
    check((2, 2, 512, 512))
    # Ragged case: element count not a multiple of 128 (tiny-pad + mask path).
    check((1, 2, 100, 77))

    print("KERNEL_OK")
</pallas_src>

<mosaic_0001>
module attributes {stable_mosaic.version = 11 : i64} {
  func.func @kernel(%arg0: i32, %arg1: i32, %arg2: memref<4096x128xf32, #tpu.memory_space<vmem>>, %arg3: memref<4096x128xf32, #tpu.memory_space<vmem>>, %arg4: memref<8x128xf32, #tpu.memory_space<vmem>>, %arg5: memref<8x128xf32, #tpu.memory_space<vmem>>) attributes {dimension_semantics = [#tpu.dimension_semantics<parallel>, #tpu.dimension_semantics<arbitrary>], iteration_bounds = array<i64: 2, 1>, scalar_prefetch = 0 : i64, scratch_operands = 1 : i64, tpu.core_type = #tpu.core_type<tc>, window_params = [{transform_indices = @transform_0, window_bounds = array<i64: 4096, 128>}, {transform_indices = @transform_1, window_bounds = array<i64: 4096, 128>}, {transform_indices = @transform_2, window_bounds = array<i64: 8, 128>}]} {
    %c0_i32 = arith.constant 0 : i32
    %0 = arith.cmpi eq, %arg1, %c0_i32 : i32
    %1 = arith.extui %0 : i1 to i32
    %c0_i32_0 = arith.constant 0 : i32
    %2 = arith.cmpi ne, %1, %c0_i32_0 : i32
    scf.if %2 {
      %cst_11 = arith.constant 0.000000e+00 : f32
      %25 = vector.broadcast %cst_11 : f32 to vector<8x128xf32>
      %c0_12 = arith.constant 0 : index
      %c0_13 = arith.constant 0 : index
      %26 = vector.load %arg5[%c0_12, %c0_13] : memref<8x128xf32, #tpu.memory_space<vmem>>, vector<8x128xf32>
      tpu.vector_store %arg5[%c0_12, %c0_13], %25 {strides = array<i32>} : memref<8x128xf32, #tpu.memory_space<vmem>>, vector<8x128xf32>,
    } else {
    }
    %c0 = arith.constant 0 : index
    %c0_1 = arith.constant 0 : index
    %3 = vector.load %arg2[%c0, %c0_1] : memref<4096x128xf32, #tpu.memory_space<vmem>>, vector<4096x128xf32>
    %c0_2 = arith.constant 0 : index
    %c0_3 = arith.constant 0 : index
    %4 = vector.load %arg3[%c0_2, %c0_3] : memref<4096x128xf32, #tpu.memory_space<vmem>>, vector<4096x128xf32>
    %5 = arith.subf %3, %4 : vector<4096x128xf32>
    %6 = math.absf %5 : vector<4096x128xf32>
    %c1_i32 = arith.constant 1 : i32
    %7 = arith.muli %arg0, %c1_i32 : i32
    %8 = arith.addi %7, %arg1 : i32
    %c4096_i32 = arith.constant 4096 : i32
    %9 = arith.muli %8, %c4096_i32 : i32
    %10 = tpu.iota {dimensions = array<i32: 0>} : vector<4096x128xi32>
    %11 = vector.broadcast %9 : i32 to vector<4096x128xi32>
    %12 = arith.addi %11, %10 : vector<4096x128xi32>
    %c8_i32 = arith.constant 8 : i32
    %13 = vector.broadcast %c8_i32 : i32 to vector<4096x128xi32>
    %14 = arith.cmpi slt, %12, %13 : vector<4096x128xi32>
    %cst = arith.constant 0.000000e+00 : f32
    %15 = vector.broadcast %cst : f32 to vector<4096x128xf32>
    %16 = arith.select %14, %6, %15 : vector<4096x128xi1>, vector<4096x128xf32>
    %c0_4 = arith.constant 0 : index
    %c0_5 = arith.constant 0 : index
    %17 = vector.load %arg5[%c0_4, %c0_5] : memref<8x128xf32, #tpu.memory_space<vmem>>, vector<8x128xf32>
    %18 = vector.shape_cast %16 : vector<4096x128xf32> to vector<512x8x128xf32>
    %cst_6 = arith.constant dense<0.000000e+00> : vector<8x128xf32>
    %19 = vector.multi_reduction <add>, %18, %cst_6 [0] : vector<512x8x128xf32> to vector<8x128xf32>
    %20 = arith.addf %17, %19 : vector<8x128xf32>
    %c0_7 = arith.constant 0 : index
    %c0_8 = arith.constant 0 : index
    %21 = vector.load %arg5[%c0_7, %c0_8] : memref<8x128xf32, #tpu.memory_space<vmem>>, vector<8x128xf32>
    tpu.vector_store %arg5[%c0_7, %c0_8], %20 {strides = array<i32>} : memref<8x128xf32, #tpu.memory_space<vmem>>, vector<8x128xf32>,
    %c0_i32_9 = arith.constant 0 : i32
    %22 = arith.cmpi eq, %arg1, %c0_i32_9 : i32
    %23 = arith.extui %22 : i1 to i32
    %c0_i32_10 = arith.constant 0 : i32
    %24 = arith.cmpi ne, %23, %c0_i32_10 : i32
    scf.if %24 {
      %c0_11 = arith.constant 0 : index
      %c0_12 = arith.constant 0 : index
      %25 = vector.load %arg5[%c0_11, %c0_12] : memref<8x128xf32, #tpu.memory_space<vmem>>, vector<8x128xf32>
      %c0_13 = arith.constant 0 : index
      %c0_14 = arith.constant 0 : index
      %26 = vector.load %arg4[%c0_13, %c0_14] : memref<8x128xf32, #tpu.memory_space<vmem>>, vector<8x128xf32>
      tpu.vector_store %arg4[%c0_13, %c0_14], %25 {strides = array<i32>} : memref<8x128xf32, #tpu.memory_space<vmem>>, vector<8x128xf32>,
    } else {
    }
    return
  }
  func.func @transform_0(%arg0: i32, %arg1: i32) -> (i32, i32) {
    %c1_i32 = arith.constant 1 : i32
    %0 = arith.muli %arg0, %c1_i32 : i32
    %1 = arith.addi %0, %arg1 : i32
    %c0_i32 = arith.constant 0 : i32
    %2 = arith.minsi %1, %c0_i32 : i32
    %c0_i32_0 = arith.constant 0 : i32
    %c0_i32_1 = arith.constant 0 : i32
    return %2, %c0_i32_0 : i32, i32
  }
  func.func @transform_1(%arg0: i32, %arg1: i32) -> (i32, i32) {
    %c1_i32 = arith.constant 1 : i32
    %0 = arith.muli %arg0, %c1_i32 : i32
    %1 = arith.addi %0, %arg1 : i32
    %c0_i32 = arith.constant 0 : i32
    %2 = arith.minsi %1, %c0_i32 : i32
    %c0_i32_0 = arith.constant 0 : i32
    %c0_i32_1 = arith.constant 0 : i32
    return %2, %c0_i32_0 : i32, i32
  }
  func.func @transform_2(%arg0: i32, %arg1: i32) -> (i32, i32) {
    %c0_i32 = arith.constant 0 : i32
    %c0_i32_0 = arith.constant 0 : i32
    return %arg0, %c0_i32 : i32, i32
  }
}

</mosaic_0001>

<llo_original>
// kernel: tpu_custom_call.1
$region0: #{tpu_custom_call.1}
  #allocation0 [shape = 'u32[]', space=smem, size = 0x4, offset = 0x4, fixed_abs, tag = 'smem constant byte address 0x4 - core index']
  #allocation1 [shape = 'u32[144,128]{1,0:T(1,128)}', space=vmem, size = 0x12000, scoped, tag = 'internal scratch']
  #allocation2 [shape = 'f32[8,128]{1,0:T(8,128)}', space=vmem, size = 0x1000, scoped, tag = 'scratch operand']
  %s0 = inlined_call_operand.hbm [shape: f32[8,128], index: 0, kind: input, shape index: {}]
  %s1 = inlined_call_operand.hbm [shape: f32[8,128], index: 1, kind: input, shape index: {}]
  %s2 = inlined_call_operand.hbm [shape: f32[16,128], index: 2, kind: output, shape index: {}]
  %s3 = sld [smem:[#allocation0]]
  $region57: #{tpu_custom_call.1} parent=0
    _
  %s5 = ssub.s32 1, %s3
  %s6 = scalar_select 0, %s5, %s3
  $region1: #{tpu_custom_call.1} parent=0
    #allocation3 [shape = 'u8[4194304]{0}', space=vmem, size = 0x400000, scoped, tag = 'input window, operand 0']
    #allocation4 [shape = 's32[2]{0}', space=sflag, size = 0x8, scoped, tag = 'scoped memory for tpu_custom_call.1']
    #allocation5 [shape = 's32[2]{0}', space=sflag, size = 0x8, scoped, tag = 'scoped memory for tpu_custom_call.1']
    #allocation6 [shape = 'u8[4194304]{0}', space=vmem, size = 0x400000, scoped, tag = 'input window, operand 1']
    #allocation7 [shape = 's32[2]{0}', space=sflag, size = 0x8, scoped, tag = 'scoped memory for tpu_custom_call.1']
    #allocation8 [shape = 'u8[8192]{0}', space=vmem, size = 0x2000, scoped, tag = 'output window, operand 0']
    %7 = vsyncpa [#allocation4], 0
    %s8 = scalar_lea.sflag [#allocation4], 1
    %9 = vsyncpa %s8, 0
    %10 = vsyncpa [#allocation7], 0
    %s11 = scalar_lea.sflag [#allocation7], 1
    %12 = vsyncpa %s11, 0
    %13 = vsyncpa [#allocation5], 0
    %s14 = scalar_lea.sflag [#allocation5], 1
    %15 = vsyncpa %s14, 0
    loop: start=0, step=1, limit=4
    $region2: #{tpu_custom_call.1} parent=1 // loop_pre_header
      _
    $region3: #{tpu_custom_call.1} parent=1 // loop_header
      %s17 = sphi 0, %s21
      %p18 = scmp.ge.s32.totalorder %s17, 4
      %s24 = sphi 0, %s36
      %s25 = sphi 0, %s32
      %s26 = sphi 0, %s24
      %s27 = sphi 0, %s25
      %s28 = sphi 0, %s26
      %s29 = sphi 0, %s27
      %s45 = sphi 0, %s47
      %s48 = sphi 0, %s45
      %s49 = sphi 0, %s48
      %s65 = sphi 0, %s49
      %s77 = sphi 0, %s79
      %s80 = sphi 0, %s77
      %s81 = sphi 0, %s80
      %s97 = sphi 0, %s81
      %s103 = sphi 0, %s105
      %s106 = sphi 0, %s103
      %s107 = sphi 0, %s106
      %s123 = sphi 0, %s107
    $region4: #{tpu_custom_call.1} parent=1 // loop_header_branch
      %20 = sbr.rel (%p18) target = $region8
    $region5: #{tpu_custom_call.1} parent=1 // loop_body
      %s22 = ssub.s32 %s17, 1
      %s23 = ssub.s32 %s17, 2
      %s30 = sadd.s32 1, %s25
      %p31 = scmp.ge.s32.totalorder %s30, 1
      %s32 = scalar_select %p31, 0, %s30
      %s33 = sadd.s32 1, %s24
      %s34 = scalar_select %p31, %s33, %s24
      %p35 = scmp.ge.s32.totalorder %s34, 2
      %s36 = scalar_select %p35, 0, %s34
      %s37 = sadd.s32 %s24, %s25
      %p38 = scmp.lt.s32.totalorder %s37, 0
      %s39 = scalar_select %p38, %s37, 0
      %s40 = sadd.s32 %s36, %s32
      %p41 = scmp.lt.s32.totalorder %s40, 0
      %s42 = scalar_select %p41, %s40, 0
      %s43 = ssub.s32 %s39, %s42
      %p44 = scmp.eq.s32.totalorder %s43, 0
      %s46 = sadd.s32 %s45, 1
      %s47 = scalar_select %p44, %s45, %s46
      %p50 = pneg %p44
      %p51 = scmp.eq.s32.totalorder %s17, 1
      %p52 = por %p50, %p51
      %p53 = scmp.ne.s32.totalorder %s45, %s48
      %p54 = scmp.eq.s32.totalorder %s17, 0
      %p55 = por %p53, %p54
      %p56 = scmp.ne.s32.totalorder %s45, %s48
      %p57 = scmp.eq.s32.totalorder %s22, 1
      %p58 = por %p56, %p57
      %p59 = scmp.ne.s32.totalorder %s48, %s49
      %p60 = scmp.eq.s32.totalorder %s22, 0
      %p61 = por %p59, %p60
      %p62 = scmp.ne.s32.totalorder %s48, %s49
      %p63 = scmp.eq.s32.totalorder %s23, 1
      %p64 = por %p62, %p63
      %p66 = scmp.ne.s32.totalorder %s49, %s65
      %p67 = scmp.eq.s32.totalorder %s23, 0
      %p68 = por %p66, %p67
      %s69 = sadd.s32 %s24, %s25
      %p70 = scmp.lt.s32.totalorder %s69, 0
      %s71 = scalar_select %p70, %s69, 0
      %s72 = sadd.s32 %s36, %s32
      %p73 = scmp.lt.s32.totalorder %s72, 0
      %s74 = scalar_select %p73, %s72, 0
      %s75 = ssub.s32 %s71, %s74
      %p76 = scmp.eq.s32.totalorder %s75, 0
      %s78 = sadd.s32 %s77, 1
      %s79 = scalar_select %p76, %s77, %s78
      %p82 = pneg %p76
      %p83 = scmp.eq.s32.totalorder %s17, 1
      %p84 = por %p82, %p83
      %p85 = scmp.ne.s32.totalorder %s77, %s80
      %p86 = scmp.eq.s32.totalorder %s17, 0
      %p87 = por %p85, %p86
      %p88 = scmp.ne.s32.totalorder %s77, %s80
      %p89 = scmp.eq.s32.totalorder %s22, 1
      %p90 = por %p88, %p89
      %p91 = scmp.ne.s32.totalorder %s80, %s81
      %p92 = scmp.eq.s32.totalorder %s22, 0
      %p93 = por %p91, %p92
      %p94 = scmp.ne.s32.totalorder %s80, %s81
      %p95 = scmp.eq.s32.totalorder %s23, 1
      %p96 = por %p94, %p95
      %p98 = scmp.ne.s32.totalorder %s81, %s97
      %p99 = scmp.eq.s32.totalorder %s23, 0
      %p100 = por %p98, %p99
      %s101 = ssub.s32 %s24, %s36
      %p102 = scmp.eq.s32.totalorder %s101, 0
      %s104 = sadd.s32 %s103, 1
      %s105 = scalar_select %p102, %s103, %s104
      %p108 = pneg %p102
      %p109 = scmp.eq.s32.totalorder %s17, 1
      %p110 = por %p108, %p109
      %p111 = scmp.ne.s32.totalorder %s103, %s106
      %p112 = scmp.eq.s32.totalorder %s17, 0
      %p113 = por %p111, %p112
      %p114 = scmp.ne.s32.totalorder %s103, %s106
      %p115 = scmp.eq.s32.totalorder %s22, 1
      %p116 = por %p114, %p115
      %p117 = scmp.ne.s32.totalorder %s106, %s107
      %p118 = scmp.eq.s32.totalorder %s22, 0
      %p119 = por %p117, %p118
      %p120 = scmp.ne.s32.totalorder %s106, %s107
      %p121 = scmp.eq.s32.totalorder %s23, 1
      %p122 = por %p120, %p121
      %p124 = scmp.ne.s32.totalorder %s107, %s123
      %p125 = scmp.eq.s32.totalorder %s23, 0
      %p126 = por %p124, %p125
      %p127 = scmp.le.s32.totalorder 1, %s17
      %p128 = scmp.lt.s32.totalorder %s17, 3
      %p129 = pnand %p127, %p128
      %p130 = pneg %p129
      // Predicated region
      $region9: #{tpu_custom_call.1} parent=5 // pred_check
        _
      $region10: #{tpu_custom_call.1} parent=5 // pred_check_branch
        %132 = sbr.rel (%p129) target = $region12
      $region11: #{tpu_custom_call.1} parent=5 // pred_region
        %s133 = ssub.s32 %s17, 1
      $region12: #{tpu_custom_call.1} parent=5 // pred_fallthru
        _
      %p134 = scmp.lt.s32.totalorder %s17, 2
      // Predicated region
      $region13: #{tpu_custom_call.1} parent=5 // pred_check
        %p135 = pneg %p134
      $region14: #{tpu_custom_call.1} parent=5 // pred_check_branch
        %137 = sbr.rel (%p135) target = $region16
      $region15: #{tpu_custom_call.1} parent=5 // pred_region
        // Predicated region
        $region17: #{tpu_custom_call.1} parent=15 // pred_check
          %p138 = pneg %p55
        $region18: #{tpu_custom_call.1} parent=15 // pred_check_branch
          %140 = sbr.rel (%p138) target = $region20
        $region19: #{tpu_custom_call.1} parent=15 // pred_region
          %s141 = sand.u32 %s45, 1
          %s142 = scalar_lea.sflag [#allocation4], %s141
          %s143 = sand.u32 %s45, 1
          %s144 = smul.addr %s143, 4096
          %s145 = scalar_lea.vmem [#allocation3], %s144
          %s146 = sadd.s32 %s24, %s25
          %p147 = scmp.lt.s32.totalorder %s146, 0
          %s148 = scalar_select %p147, %s146, 0
          %s149 = smul.u32 512, %s148
          %s150 = ssub.s32 1, %s149
          %s151 = smul.u32 128, %s150
          %s153 = ssub.s32 65536, %s151
          %154 = vsyncadd %s142, %s153
          %p155 = scmp.ne.s32.totalorder 0, %s151
          %s156 = smul.addr %s149, 128
          %s157 = scalar_lea.hbm %s0, %s156
          %s158 = smul.u32 8, %s150
          %s159 = sshll.u32 %s145, 4
          %s160 = int_to_ptr.vmem [resolvable:$true] %s159
          %s161 = sshll.u32 %s158, 4
          %165 = dma.hbm_to_vmem [thread:$0]  (%p155), %s157, %s161, %s160, %s142, 128, 128, 8
        $region20: #{tpu_custom_call.1} parent=15 // pred_fallthru
          _
        // Predicated region
        $region21: #{tpu_custom_call.1} parent=15 // pred_check
          %p166 = pneg %p87
        $region22: #{tpu_custom_call.1} parent=15 // pred_check_branch
          %168 = sbr.rel (%p166) target = $region24
        $region23: #{tpu_custom_call.1} parent=15 // pred_region
          %s169 = sand.u32 %s77, 1
          %s170 = scalar_lea.sflag [#allocation7], %s169
          %s171 = sand.u32 %s77, 1
          %s172 = smul.addr %s171, 4096
          %s173 = scalar_lea.vmem [#allocation6], %s172
          %s174 = sadd.s32 %s24, %s25
          %p175 = scmp.lt.s32.totalorder %s174, 0
          %s176 = scalar_select %p175, %s174, 0
          %s177 = smul.u32 512, %s176
          %s178 = ssub.s32 1, %s177
          %s179 = smul.u32 128, %s178
          %s181 = ssub.s32 65536, %s179
          %182 = vsyncadd %s170, %s181
          %p183 = scmp.ne.s32.totalorder 0, %s179
          %s184 = smul.addr %s177, 128
          %s185 = scalar_lea.hbm %s1, %s184
          %s186 = smul.u32 8, %s178
          %s187 = sshll.u32 %s173, 4
          %s188 = int_to_ptr.vmem [resolvable:$true] %s187
          %s189 = sshll.u32 %s186, 4
          %193 = dma.hbm_to_vmem [thread:$0]  (%p183), %s185, %s189, %s188, %s170, 128, 128, 8
        $region24: #{tpu_custom_call.1} parent=15 // pred_fallthru
          _
      $region16: #{tpu_custom_call.1} parent=5 // pred_fallthru
        _
      %p194 = scmp.le.s32.totalorder 1, %s17
      %p195 = scmp.lt.s32.totalorder %s17, 3
      %p196 = pnand %p194, %p195
      %p197 = pneg %p196
      // Predicated region
      $region25: #{tpu_custom_call.1} parent=5 // pred_check
        _
      $region26: #{tpu_custom_call.1} parent=5 // pred_check_branch
        %199 = sbr.rel (%p196) target = $region28
      $region27: #{tpu_custom_call.1} parent=5 // pred_region
        %s200 = ssub.s32 %s17, 1
        %s201 = sand.u32 %s48, 1
        %s202 = scalar_lea.sflag [#allocation4], %s201
        %s203 = sand.u32 %s48, 1
        %s204 = smul.addr %s203, 4096
        %s205 = scalar_lea.vmem [#allocation3], %s204
        // Predicated region
        $region29: #{tpu_custom_call.1} parent=27 // pred_check
          %p206 = pneg %p61
        $region30: #{tpu_custom_call.1} parent=27 // pred_check_branch
          %208 = sbr.rel (%p206) target = $region32
        $region31: #{tpu_custom_call.1} parent=27 // pred_region
          %209 = dma.done %s202, 65536
        $region32: #{tpu_custom_call.1} parent=27 // pred_fallthru
          _
        %s210 = sand.u32 %s80, 1
        %s211 = scalar_lea.sflag [#allocation7], %s210
        %s212 = sand.u32 %s80, 1
        %s213 = smul.addr %s212, 4096
        %s214 = scalar_lea.vmem [#allocation6], %s213
        // Predicated region
        $region33: #{tpu_custom_call.1} parent=27 // pred_check
          %p215 = pneg %p93
        $region34: #{tpu_custom_call.1} parent=27 // pred_check_branch
          %217 = sbr.rel (%p215) target = $region36
        $region35: #{tpu_custom_call.1} parent=27 // pred_region
          %218 = dma.done %s211, 65536
        $region36: #{tpu_custom_call.1} parent=27 // pred_fallthru
          _
        %s219 = sand.u32 %s48, 1
        %s220 = scalar_lea.sflag [#allocation4], %s219
        %s221 = sand.u32 %s48, 1
        %s222 = smul.addr %s221, 4096
        %s223 = scalar_lea.vmem [#allocation3], %s222
        %p224 = pneg %p61
        %p225 = pneg %p58
        %s226 = sand.u32 %s80, 1
        %s227 = scalar_lea.sflag [#allocation7], %s226
        %s228 = sand.u32 %s80, 1
        %s229 = smul.addr %s228, 4096
        %s230 = scalar_lea.vmem [#allocation6], %s229
        %p231 = pneg %p93
        %p232 = pneg %p90
        %p233 = pneg %p119
        %p234 = pneg %p116
        %s235 = sand.u32 %s106, 1
        %s236 = scalar_lea.sflag [#allocation5], %s235
        %s237 = sand.u32 %s106, 1
        %s238 = smul.addr %s237, 8
        %s239 = scalar_lea.vmem [#allocation8], %s238
        %s240 = sadd.s32 %s26, %s27
        %p241 = scmp.lt.s32.totalorder %s240, 0
        %s242 = scalar_select %p241, %s240, 0
        %s243 = smul.u32 512, %s242
        %s244 = ssub.s32 1, %s243
        %s245 = smul.u32 128, %s244
        %s246 = sadd.s32 %s26, %s27
        %p247 = scmp.lt.s32.totalorder %s246, 0
        %s248 = scalar_select %p247, %s246, 0
        %s249 = smul.u32 512, %s248
        %s250 = ssub.s32 1, %s249
        %s251 = smul.u32 128, %s250
        %p252 = scmp.eq.s32.totalorder %s27, 0
        // Predicated region
        $region37: #{tpu_custom_call.1} parent=27 // pred_check
          %p253 = pneg %p252
        $region38: #{tpu_custom_call.1} parent=27 // pred_check_branch
          %255 = sbr.rel (%p253) target = $region40
        $region39: #{tpu_custom_call.1} parent=27 // pred_region
          %256 = vst [vmem:[#allocation2] sm:$0xff] 0.0
        $region40: #{tpu_custom_call.1} parent=27 // pred_fallthru
          _
        %v257 = vld [vmem:[%s205] sm:$0xff]
        %v258 = vld [vmem:[%s205 + $0x8] sm:$0xff]
        %v259 = vld [vmem:[%s205 + $0x10] sm:$0xff]
        %v260 = vld [vmem:[%s205 + $0x18] sm:$0xff]
        %v261 = vld [vmem:[%s205 + $0x20] sm:$0xff]
        %v262 = vld [vmem:[%s205 + $0x28] sm:$0xff]
        %v263 = vld [vmem:[%s205 + $0x30] sm:$0xff]
        %v264 = vld [vmem:[%s205 + $0x38] sm:$0xff]
        %v265 = vld [vmem:[%s205 + $0x40] sm:$0xff]
        %v266 = vld [vmem:[%s205 + $0x48] sm:$0xff]
        %v267 = vld [vmem:[%s205 + $0x50] sm:$0xff]
        %v268 = vld [vmem:[%s205 + $0x58] sm:$0xff]
        %v269 = vld [vmem:[%s205 + $0x60] sm:$0xff]
        %v270 = vld [vmem:[%s205 + $0x68] sm:$0xff]
        %v271 = vld [vmem:[%s205 + $0x70] sm:$0xff]
        %v272 = vld [vmem:[%s205 + $0x78] sm:$0xff]
        %v273 = vld [vmem:[%s205 + $0x80] sm:$0xff]
        %v274 = vld [vmem:[%s205 + $0x88] sm:$0xff]
        %v275 = vld [vmem:[%s205 + $0x90] sm:$0xff]
        %v276 = vld [vmem:[%s205 + $0x98] sm:$0xff]
        %v277 = vld [vmem:[%s205 + $0xa0] sm:$0xff]
        %v278 = vld [vmem:[%s205 + $0xa8] sm:$0xff]
        %v279 = vld [vmem:[%s205 + $0xb0] sm:$0xff]
        %v280 = vld [vmem:[%s205 + $0xb8] sm:$0xff]
        %v281 = vld [vmem:[%s205 + $0xc0] sm:$0xff]
        %v282 = vld [vmem:[%s205 + $0xc8] sm:$0xff]
        %v283 = vld [vmem:[%s205 + $0xd0] sm:$0xff]
        %v284 = vld [vmem:[%s205 + $0xd8] sm:$0xff]
        %v285 = vld [vmem:[%s205 + $0xe0] sm:$0xff]
        %v286 = vld [vmem:[%s205 + $0xe8] sm:$0xff]
        %v287 = vld [vmem:[%s205 + $0xf0] sm:$0xff]
        %v288 = vld [vmem:[%s205 + $0xf8] sm:$0xff]
        %v289 = vld [vmem:[%s205 + $0x100] sm:$0xff]
        %v290 = vld [vmem:[%s205 + $0x108] sm:$0xff]
        %v291 = vld [vmem:[%s205 + $0x110] sm:$0xff]
        %v292 = vld [vmem:[%s205 + $0x118] sm:$0xff]
        %v293 = vld [vmem:[%s205 + $0x120] sm:$0xff]
        %v294 = vld [vmem:[%s205 + $0x128] sm:$0xff]
        %v295 = vld [vmem:[%s205 + $0x130] sm:$0xff]
        %v296 = vld [vmem:[%s205 + $0x138] sm:$0xff]
        %v297 = vld [vmem:[%s205 + $0x140] sm:$0xff]
        %v298 = vld [vmem:[%s205 + $0x148] sm:$0xff]
        %v299 = vld [vmem:[%s205 + $0x150] sm:$0xff]
        %v300 = vld [vmem:[%s205 + $0x158] sm:$0xff]
        %v301 = vld [vmem:[%s205 + $0x160] sm:$0xff]
        %v302 = vld [vmem:[%s205 + $0x168] sm:$0xff]
        %v303 = vld [vmem:[%s205 + $0x170] sm:$0xff]
        %v304 = vld [vmem:[%s205 + $0x178] sm:$0xff]
        %v305 = vld [vmem:[%s205 + $0x180] sm:$0xff]
        %v306 = vld [vmem:[%s205 + $0x188] sm:$0xff]
        %v307 = vld [vmem:[%s205 + $0x190] sm:$0xff]
        %v308 = vld [vmem:[%s205 + $0x198] sm:$0xff]
        %v309 = vld [vmem:[%s205 + $0x1a0] sm:$0xff]
        %v310 = vld [vmem:[%s205 + $0x1a8] sm:$0xff]
        %v311 = vld [vmem:[%s205 + $0x1b0] sm:$0xff]
        %v312 = vld [vmem:[%s205 + $0x1b8] sm:$0xff]
        %v313 = vld [vmem:[%s205 + $0x1c0] sm:$0xff]
        %v314 = vld [vmem:[%s205 + $0x1c8] sm:$0xff]
        %v315 = vld [vmem:[%s205 + $0x1d0] sm:$0xff]
        %v316 = vld [vmem:[%s205 + $0x1d8] sm:$0xff]
        %v317 = vld [vmem:[%s205 + $0x1e0] sm:$0xff]
        %v318 = vld [vmem:[%s205 + $0x1e8] sm:$0xff]
        %v319 = vld [vmem:[%s205 + $0x1f0] sm:$0xff]
        %v320 = vld [vmem:[%s205 + $0x1f8] sm:$0xff]
        %v321 = vld [vmem:[%s205 + $0x200] sm:$0xff]
        %v322 = vld [vmem:[%s205 + $0x208] sm:$0xff]
        %v323 = vld [vmem:[%s205 + $0x210] sm:$0xff]
        %v324 = vld [vmem:[%s205 + $0x218] sm:$0xff]
        %v325 = vld [vmem:[%s205 + $0x220] sm:$0xff]
        %v326 = vld [vmem:[%s205 + $0x228] sm:$0xff]
        %v327 = vld [vmem:[%s205 + $0x230] sm:$0xff]
        %v328 = vld [vmem:[%s205 + $0x238] sm:$0xff]
        %v329 = vld [vmem:[%s205 + $0x240] sm:$0xff]
        %v330 = vld [vmem:[%s205 + $0x248] sm:$0xff]
        %v331 = vld [vmem:[%s205 + $0x250] sm:$0xff]
        %v332 = vld [vmem:[%s205 + $0x258] sm:$0xff]
        %v333 = vld [vmem:[%s205 + $0x260] sm:$0xff]
        %v334 = vld [vmem:[%s205 + $0x268] sm:$0xff]
        %v335 = vld [vmem:[%s205 + $0x270] sm:$0xff]
        %v336 = vld [vmem:[%s205 + $0x278] sm:$0xff]
        %v337 = vld [vmem:[%s205 + $0x280] sm:$0xff]
        %v338 = vld [vmem:[%s205 + $0x288] sm:$0xff]
        %v339 = vld [vmem:[%s205 + $0x290] sm:$0xff]
        %v340 = vld [vmem:[%s205 + $0x298] sm:$0xff]
        %v341 = vld [vmem:[%s205 + $0x2a0] sm:$0xff]
        %v342 = vld [vmem:[%s205 + $0x2a8] sm:$0xff]
        %v343 = vld [vmem:[%s205 + $0x2b0] sm:$0xff]
        %v344 = vld [vmem:[%s205 + $0x2b8] sm:$0xff]
        %v345 = vld [vmem:[%s205 + $0x2c0] sm:$0xff]
        %v346 = vld [vmem:[%s205 + $0x2c8] sm:$0xff]
        %v347 = vld [vmem:[%s205 + $0x2d0] sm:$0xff]
        %v348 = vld [vmem:[%s205 + $0x2d8] sm:$0xff]
        %v349 = vld [vmem:[%s205 + $0x2e0] sm:$0xff]
        %v350 = vld [vmem:[%s205 + $0x2e8] sm:$0xff]
        %v351 = vld [vmem:[%s205 + $0x2f0] sm:$0xff]
        %v352 = vld [vmem:[%s205 + $0x2f8] sm:$0xff]
        %v353 = vld [vmem:[%s205 + $0x300] sm:$0xff]
        %v354 = vld [vmem:[%s205 + $0x308] sm:$0xff]
        %v355 = vld [vmem:[%s205 + $0x310] sm:$0xff]
        %v356 = vld [vmem:[%s205 + $0x318] sm:$0xff]
        %v357 = vld [vmem:[%s205 + $0x320] sm:$0xff]
        %v358 = vld [vmem:[%s205 + $0x328] sm:$0xff]
        %v359 = vld [vmem:[%s205 + $0x330] sm:$0xff]
        %v360 = vld [vmem:[%s205 + $0x338] sm:$0xff]
        %v361 = vld [vmem:[%s205 + $0x340] sm:$0xff]
        %v362 = vld [vmem:[%s205 + $0x348] sm:$0xff]
        %v363 = vld [vmem:[%s205 + $0x350] sm:$0xff]
        %v364 = vld [vmem:[%s205 + $0x358] sm:$0xff]
        %v365 = vld [vmem:[%s205 + $0x360] sm:$0xff]
        %v366 = vld [vmem:[%s205 + $0x368] sm:$0xff]
        %v367 = vld [vmem:[%s205 + $0x370] sm:$0xff]
        %v368 = vld [vmem:[%s205 + $0x378] sm:$0xff]
        %v369 = vld [vmem:[%s205 + $0x380] sm:$0xff]
        %v370 = vld [vmem:[%s205 + $0x388] sm:$0xff]
        %v371 = vld [vmem:[%s205 + $0x390] sm:$0xff]
        %v372 = vld [vmem:[%s205 + $0x398] sm:$0xff]
        %v373 = vld [vmem:[%s205 + $0x3a0] sm:$0xff]
        %v374 = vld [vmem:[%s205 + $0x3a8] sm:$0xff]
        %v375 = vld [vmem:[%s205 + $0x3b0] sm:$0xff]
        %v376 = vld [vmem:[%s205 + $0x3b8] sm:$0xff]
        %v377 = vld [vmem:[%s205 + $0x3c0] sm:$0xff]
        %v378 = vld [vmem:[%s205 + $0x3c8] sm:$0xff]
        %v379 = vld [vmem:[%s205 + $0x3d0] sm:$0xff]
        %v380 = vld [vmem:[%s205 + $0x3d8] sm:$0xff]
        %v381 = vld [vmem:[%s205 + $0x3e0] sm:$0xff]
        %v382 = vld [vmem:[%s205 + $0x3e8] sm:$0xff]
        %v383 = vld [vmem:[%s205 + $0x3f0] sm:$0xff]
        %v384 = vld [vmem:[%s205 + $0x3f8] sm:$0xff]
        %v385 = vld [vmem:[%s205 + $0x400] sm:$0xff]
        %v386 = vld [vmem:[%s205 + $0x408] sm:$0xff]
        %v387 = vld [vmem:[%s205 + $0x410] sm:$0xff]
        %v388 = vld [vmem:[%s205 + $0x418] sm:$0xff]
        %v389 = vld [vmem:[%s205 + $0x420] sm:$0xff]
        %v390 = vld [vmem:[%s205 + $0x428] sm:$0xff]
        %v391 = vld [vmem:[%s205 + $0x430] sm:$0xff]
        %v392 = vld [vmem:[%s205 + $0x438] sm:$0xff]
        %v393 = vld [vmem:[%s205 + $0x440] sm:$0xff]
        %v394 = vld [vmem:[%s205 + $0x448] sm:$0xff]
        %v395 = vld [vmem:[%s205 + $0x450] sm:$0xff]
        %v396 = vld [vmem:[%s205 + $0x458] sm:$0xff]
        %v397 = vld [vmem:[%s205 + $0x460] sm:$0xff]
        %v398 = vld [vmem:[%s205 + $0x468] sm:$0xff]
        %v399 = vld [vmem:[%s205 + $0x470] sm:$0xff]
        %v400 = vld [vmem:[%s205 + $0x478] sm:$0xff]
        %v401 = vld [vmem:[%s205 + $0x480] sm:$0xff]
        %v402 = vld [vmem:[%s205 + $0x488] sm:$0xff]
        %v403 = vld [vmem:[%s205 + $0x490] sm:$0xff]
        %v404 = vld [vmem:[%s205 + $0x498] sm:$0xff]
        %v405 = vld [vmem:[%s205 + $0x4a0] sm:$0xff]
        %v406 = vld [vmem:[%s205 + $0x4a8] sm:$0xff]
        %v407 = vld [vmem:[%s205 + $0x4b0] sm:$0xff]
        %v408 = vld [vmem:[%s205 + $0x4b8] sm:$0xff]
        %v409 = vld [vmem:[%s205 + $0x4c0] sm:$0xff]
        %v410 = vld [vmem:[%s205 + $0x4c8] sm:$0xff]
        %v411 = vld [vmem:[%s205 + $0x4d0] sm:$0xff]
        %v412 = vld [vmem:[%s205 + $0x4d8] sm:$0xff]
        %v413 = vld [vmem:[%s205 + $0x4e0] sm:$0xff]
        %v414 = vld [vmem:[%s205 + $0x4e8] sm:$0xff]
        %v415 = vld [vmem:[%s205 + $0x4f0] sm:$0xff]
        %v416 = vld [vmem:[%s205 + $0x4f8] sm:$0xff]
        %v417 = vld [vmem:[%s205 + $0x500] sm:$0xff]
        %v418 = vld [vmem:[%s205 + $0x508] sm:$0xff]
        %v419 = vld [vmem:[%s205 + $0x510] sm:$0xff]
        %v420 = vld [vmem:[%s205 + $0x518] sm:$0xff]
        %v421 = vld [vmem:[%s205 + $0x520] sm:$0xff]
        %v422 = vld [vmem:[%s205 + $0x528] sm:$0xff]
        %v423 = vld [vmem:[%s205 + $0x530] sm:$0xff]
        %v424 = vld [vmem:[%s205 + $0x538] sm:$0xff]
        %v425 = vld [vmem:[%s205 + $0x540] sm:$0xff]
        %v426 = vld [vmem:[%s205 + $0x548] sm:$0xff]
        %v427 = vld [vmem:[%s205 + $0x550] sm:$0xff]
        %v428 = vld [vmem:[%s205 + $0x558] sm:$0xff]
        %v429 = vld [vmem:[%s205 + $0x560] sm:$0xff]
        %v430 = vld [vmem:[%s205 + $0x568] sm:$0xff]
        %v431 = vld [vmem:[%s205 + $0x570] sm:$0xff]
        %v432 = vld [vmem:[%s205 + $0x578] sm:$0xff]
        %v433 = vld [vmem:[%s205 + $0x580] sm:$0xff]
        %v434 = vld [vmem:[%s205 + $0x588] sm:$0xff]
        %v435 = vld [vmem:[%s205 + $0x590] sm:$0xff]
        %v436 = vld [vmem:[%s205 + $0x598] sm:$0xff]
        %v437 = vld [vmem:[%s205 + $0x5a0] sm:$0xff]
        %v438 = vld [vmem:[%s205 + $0x5a8] sm:$0xff]
        %v439 = vld [vmem:[%s205 + $0x5b0] sm:$0xff]
        %v440 = vld [vmem:[%s205 + $0x5b8] sm:$0xff]
        %v441 = vld [vmem:[%s205 + $0x5c0] sm:$0xff]
        %v442 = vld [vmem:[%s205 + $0x5c8] sm:$0xff]
        %v443 = vld [vmem:[%s205 + $0x5d0] sm:$0xff]
        %v444 = vld [vmem:[%s205 + $0x5d8] sm:$0xff]
        %v445 = vld [vmem:[%s205 + $0x5e0] sm:$0xff]
        %v446 = vld [vmem:[%s205 + $0x5e8] sm:$0xff]
        %v447 = vld [vmem:[%s205 + $0x5f0] sm:$0xff]
        %v448 = vld [vmem:[%s205 + $0x5f8] sm:$0xff]
        %v449 = vld [vmem:[%s205 + $0x600] sm:$0xff]
        %v450 = vld [vmem:[%s205 + $0x608] sm:$0xff]
        %v451 = vld [vmem:[%s205 + $0x610] sm:$0xff]
        %v452 = vld [vmem:[%s205 + $0x618] sm:$0xff]
        %v453 = vld [vmem:[%s205 + $0x620] sm:$0xff]
        %v454 = vld [vmem:[%s205 + $0x628] sm:$0xff]
        %v455 = vld [vmem:[%s205 + $0x630] sm:$0xff]
        %v456 = vld [vmem:[%s205 + $0x638] sm:$0xff]
        %v457 = vld [vmem:[%s205 + $0x640] sm:$0xff]
        %v458 = vld [vmem:[%s205 + $0x648] sm:$0xff]
        %v459 = vld [vmem:[%s205 + $0x650] sm:$0xff]
        %v460 = vld [vmem:[%s205 + $0x658] sm:$0xff]
        %v461 = vld [vmem:[%s205 + $0x660] sm:$0xff]
        %v462 = vld [vmem:[%s205 + $0x668] sm:$0xff]
        %v463 = vld [vmem:[%s205 + $0x670] sm:$0xff]
        %v464 = vld [vmem:[%s205 + $0x678] sm:$0xff]
        %v465 = vld [vmem:[%s205 + $0x680] sm:$0xff]
        %v466 = vld [vmem:[%s205 + $0x688] sm:$0xff]
        %v467 = vld [vmem:[%s205 + $0x690] sm:$0xff]
        %v468 = vld [vmem:[%s205 + $0x698] sm:$0xff]
        %v469 = vld [vmem:[%s205 + $0x6a0] sm:$0xff]
        %v470 = vld [vmem:[%s205 + $0x6a8] sm:$0xff]
        %v471 = vld [vmem:[%s205 + $0x6b0] sm:$0xff]
        %v472 = vld [vmem:[%s205 + $0x6b8] sm:$0xff]
        %v473 = vld [vmem:[%s205 + $0x6c0] sm:$0xff]
        %v474 = vld [vmem:[%s205 + $0x6c8] sm:$0xff]
        %v475 = vld [vmem:[%s205 + $0x6d0] sm:$0xff]
        %v476 = vld [vmem:[%s205 + $0x6d8] sm:$0xff]
        %v477 = vld [vmem:[%s205 + $0x6e0] sm:$0xff]
        %v478 = vld [vmem:[%s205 + $0x6e8] sm:$0xff]
        %v479 = vld [vmem:[%s205 + $0x6f0] sm:$0xff]
        %v480 = vld [vmem:[%s205 + $0x6f8] sm:$0xff]
        %v481 = vld [vmem:[%s205 + $0x700] sm:$0xff]
        %v482 = vld [vmem:[%s205 + $0x708] sm:$0xff]
        %v483 = vld [vmem:[%s205 + $0x710] sm:$0xff]
        %v484 = vld [vmem:[%s205 + $0x718] sm:$0xff]
        %v485 = vld [vmem:[%s205 + $0x720] sm:$0xff]
        %v486 = vld [vmem:[%s205 + $0x728] sm:$0xff]
        %v487 = vld [vmem:[%s205 + $0x730] sm:$0xff]
        %v488 = vld [vmem:[%s205 + $0x738] sm:$0xff]
        %v489 = vld [vmem:[%s205 + $0x740] sm:$0xff]
        %v490 = vld [vmem:[%s205 + $0x748] sm:$0xff]
        %v491 = vld [vmem:[%s205 + $0x750] sm:$0xff]
        %v492 = vld [vmem:[%s205 + $0x758] sm:$0xff]
        %v493 = vld [vmem:[%s205 + $0x760] sm:$0xff]
        %v494 = vld [vmem:[%s205 + $0x768] sm:$0xff]
        %v495 = vld [vmem:[%s205 + $0x770] sm:$0xff]
        %v496 = vld [vmem:[%s205 + $0x778] sm:$0xff]
        %v497 = vld [vmem:[%s205 + $0x780] sm:$0xff]
        %v498 = vld [vmem:[%s205 + $0x788] sm:$0xff]
        %v499 = vld [vmem:[%s205 + $0x790] sm:$0xff]
        %v500 = vld [vmem:[%s205 + $0x798] sm:$0xff]
        %v501 = vld [vmem:[%s205 + $0x7a0] sm:$0xff]
        %v502 = vld [vmem:[%s205 + $0x7a8] sm:$0xff]
        %v503 = vld [vmem:[%s205 + $0x7b0] sm:$0xff]
        %v504 = vld [vmem:[%s205 + $0x7b8] sm:$0xff]
        %v505 = vld [vmem:[%s205 + $0x7c0] sm:$0xff]
        %v506 = vld [vmem:[%s205 + $0x7c8] sm:$0xff]
        %v507 = vld [vmem:[%s205 + $0x7d0] sm:$0xff]
        %v508 = vld [vmem:[%s205 + $0x7d8] sm:$0xff]
        %v509 = vld [vmem:[%s205 + $0x7e0] sm:$0xff]
        %v510 = vld [vmem:[%s205 + $0x7e8] sm:$0xff]
        %v511 = vld [vmem:[%s205 + $0x7f0] sm:$0xff]
        %v512 = vld [vmem:[%s205 + $0x7f8] sm:$0xff]
        %v513 = vld [vmem:[%s205 + $0x800] sm:$0xff]
        %v514 = vld [vmem:[%s205 + $0x808] sm:$0xff]
        %v515 = vld [vmem:[%s205 + $0x810] sm:$0xff]
        %v516 = vld [vmem:[%s205 + $0x818] sm:$0xff]
        %v517 = vld [vmem:[%s205 + $0x820] sm:$0xff]
        %v518 = vld [vmem:[%s205 + $0x828] sm:$0xff]
        %v519 = vld [vmem:[%s205 + $0x830] sm:$0xff]
        %v520 = vld [vmem:[%s205 + $0x838] sm:$0xff]
        %v521 = vld [vmem:[%s205 + $0x840] sm:$0xff]
        %v522 = vld [vmem:[%s205 + $0x848] sm:$0xff]
        %v523 = vld [vmem:[%s205 + $0x850] sm:$0xff]
        %v524 = vld [vmem:[%s205 + $0x858] sm:$0xff]
        %v525 = vld [vmem:[%s205 + $0x860] sm:$0xff]
        %v526 = vld [vmem:[%s205 + $0x868] sm:$0xff]
        %v527 = vld [vmem:[%s205 + $0x870] sm:$0xff]
        %v528 = vld [vmem:[%s205 + $0x878] sm:$0xff]
        %v529 = vld [vmem:[%s205 + $0x880] sm:$0xff]
        %v530 = vld [vmem:[%s205 + $0x888] sm:$0xff]
        %v531 = vld [vmem:[%s205 + $0x890] sm:$0xff]
        %v532 = vld [vmem:[%s205 + $0x898] sm:$0xff]
        %v533 = vld [vmem:[%s205 + $0x8a0] sm:$0xff]
        %v534 = vld [vmem:[%s205 + $0x8a8] sm:$0xff]
        %v535 = vld [vmem:[%s205 + $0x8b0] sm:$0xff]
        %v536 = vld [vmem:[%s205 + $0x8b8] sm:$0xff]
        %v537 = vld [vmem:[%s205 + $0x8c0] sm:$0xff]
        %v538 = vld [vmem:[%s205 + $0x8c8] sm:$0xff]
        %v539 = vld [vmem:[%s205 + $0x8d0] sm:$0xff]
        %v540 = vld [vmem:[%s205 + $0x8d8] sm:$0xff]
        %v541 = vld [vmem:[%s205 + $0x8e0] sm:$0xff]
        %v542 = vld [vmem:[%s205 + $0x8e8] sm:$0xff]
        %v543 = vld [vmem:[%s205 + $0x8f0] sm:$0xff]
        %v544 = vld [vmem:[%s205 + $0x8f8] sm:$0xff]
        %v545 = vld [vmem:[%s205 + $0x900] sm:$0xff]
        %v546 = vld [vmem:[%s205 + $0x908] sm:$0xff]
        %v547 = vld [vmem:[%s205 + $0x910] sm:$0xff]
        %v548 = vld [vmem:[%s205 + $0x918] sm:$0xff]
        %v549 = vld [vmem:[%s205 + $0x920] sm:$0xff]
        %v550 = vld [vmem:[%s205 + $0x928] sm:$0xff]
        %v551 = vld [vmem:[%s205 + $0x930] sm:$0xff]
        %v552 = vld [vmem:[%s205 + $0x938] sm:$0xff]
        %v553 = vld [vmem:[%s205 + $0x940] sm:$0xff]
        %v554 = vld [vmem:[%s205 + $0x948] sm:$0xff]
        %v555 = vld [vmem:[%s205 + $0x950] sm:$0xff]
        %v556 = vld [vmem:[%s205 + $0x958] sm:$0xff]
        %v557 = vld [vmem:[%s205 + $0x960] sm:$0xff]
        %v558 = vld [vmem:[%s205 + $0x968] sm:$0xff]
        %v559 = vld [vmem:[%s205 + $0x970] sm:$0xff]
        %v560 = vld [vmem:[%s205 + $0x978] sm:$0xff]
        %v561 = vld [vmem:[%s205 + $0x980] sm:$0xff]
        %v562 = vld [vmem:[%s205 + $0x988] sm:$0xff]
        %v563 = vld [vmem:[%s205 + $0x990] sm:$0xff]
        %v564 = vld [vmem:[%s205 + $0x998] sm:$0xff]
        %v565 = vld [vmem:[%s205 + $0x9a0] sm:$0xff]
        %v566 = vld [vmem:[%s205 + $0x9a8] sm:$0xff]
        %v567 = vld [vmem:[%s205 + $0x9b0] sm:$0xff]
        %v568 = vld [vmem:[%s205 + $0x9b8] sm:$0xff]
        %v569 = vld [vmem:[%s205 + $0x9c0] sm:$0xff]
        %v570 = vld [vmem:[%s205 + $0x9c8] sm:$0xff]
        %v571 = vld [vmem:[%s205 + $0x9d0] sm:$0xff]
        %v572 = vld [vmem:[%s205 + $0x9d8] sm:$0xff]
        %v573 = vld [vmem:[%s205 + $0x9e0] sm:$0xff]
        %v574 = vld [vmem:[%s205 + $0x9e8] sm:$0xff]
        %v575 = vld [vmem:[%s205 + $0x9f0] sm:$0xff]
        %v576 = vld [vmem:[%s205 + $0x9f8] sm:$0xff]
        %v577 = vld [vmem:[%s205 + $0xa00] sm:$0xff]
        %v578 = vld [vmem:[%s205 + $0xa08] sm:$0xff]
        %v579 = vld [vmem:[%s205 + $0xa10] sm:$0xff]
        %v580 = vld [vmem:[%s205 + $0xa18] sm:$0xff]
        %v581 = vld [vmem:[%s205 + $0xa20] sm:$0xff]
        %v582 = vld [vmem:[%s205 + $0xa28] sm:$0xff]
        %v583 = vld [vmem:[%s205 + $0xa30] sm:$0xff]
        %v584 = vld [vmem:[%s205 + $0xa38] sm:$0xff]
        %v585 = vld [vmem:[%s205 + $0xa40] sm:$0xff]
        %v586 = vld [vmem:[%s205 + $0xa48] sm:$0xff]
        %v587 = vld [vmem:[%s205 + $0xa50] sm:$0xff]
        %v588 = vld [vmem:[%s205 + $0xa58] sm:$0xff]
        %v589 = vld [vmem:[%s205 + $0xa60] sm:$0xff]
        %v590 = vld [vmem:[%s205 + $0xa68] sm:$0xff]
        %v591 = vld [vmem:[%s205 + $0xa70] sm:$0xff]
        %v592 = vld [vmem:[%s205 + $0xa78] sm:$0xff]
        %v593 = vld [vmem:[%s205 + $0xa80] sm:$0xff]
        %v594 = vld [vmem:[%s205 + $0xa88] sm:$0xff]
        %v595 = vld [vmem:[%s205 + $0xa90] sm:$0xff]
        %v596 = vld [vmem:[%s205 + $0xa98] sm:$0xff]
        %v597 = vld [vmem:[%s205 + $0xaa0] sm:$0xff]
        %v598 = vld [vmem:[%s205 + $0xaa8] sm:$0xff]
        %v599 = vld [vmem:[%s205 + $0xab0] sm:$0xff]
        %v600 = vld [vmem:[%s205 + $0xab8] sm:$0xff]
        %v601 = vld [vmem:[%s205 + $0xac0] sm:$0xff]
        %v602 = vld [vmem:[%s205 + $0xac8] sm:$0xff]
        %v603 = vld [vmem:[%s205 + $0xad0] sm:$0xff]
        %v604 = vld [vmem:[%s205 + $0xad8] sm:$0xff]
        %v605 = vld [vmem:[%s205 + $0xae0] sm:$0xff]
        %v606 = vld [vmem:[%s205 + $0xae8] sm:$0xff]
        %v607 = vld [vmem:[%s205 + $0xaf0] sm:$0xff]
        %v608 = vld [vmem:[%s205 + $0xaf8] sm:$0xff]
        %v609 = vld [vmem:[%s205 + $0xb00] sm:$0xff]
        %v610 = vld [vmem:[%s205 + $0xb08] sm:$0xff]
        %v611 = vld [vmem:[%s205 + $0xb10] sm:$0xff]
        %v612 = vld [vmem:[%s205 + $0xb18] sm:$0xff]
        %v613 = vld [vmem:[%s205 + $0xb20] sm:$0xff]
        %v614 = vld [vmem:[%s205 + $0xb28] sm:$0xff]
        %v615 = vld [vmem:[%s205 + $0xb30] sm:$0xff]
        %v616 = vld [vmem:[%s205 + $0xb38] sm:$0xff]
        %v617 = vld [vmem:[%s205 + $0xb40] sm:$0xff]
        %v618 = vld [vmem:[%s205 + $0xb48] sm:$0xff]
        %v619 = vld [vmem:[%s205 + $0xb50] sm:$0xff]
        %v620 = vld [vmem:[%s205 + $0xb58] sm:$0xff]
        %v621 = vld [vmem:[%s205 + $0xb60] sm:$0xff]
        %v622 = vld [vmem:[%s205 + $0xb68] sm:$0xff]
        %v623 = vld [vmem:[%s205 + $0xb70] sm:$0xff]
        %v624 = vld [vmem:[%s205 + $0xb78] sm:$0xff]
        %v625 = vld [vmem:[%s205 + $0xb80] sm:$0xff]
        %v626 = vld [vmem:[%s205 + $0xb88] sm:$0xff]
        %v627 = vld [vmem:[%s205 + $0xb90] sm:$0xff]
        %v628 = vld [vmem:[%s205 + $0xb98] sm:$0xff]
        %v629 = vld [vmem:[%s205 + $0xba0] sm:$0xff]
        %v630 = vld [vmem:[%s205 + $0xba8] sm:$0xff]
        %v631 = vld [vmem:[%s205 + $0xbb0] sm:$0xff]
        %v632 = vld [vmem:[%s205 + $0xbb8] sm:$0xff]
        %v633 = vld [vmem:[%s205 + $0xbc0] sm:$0xff]
        %v634 = vld [vmem:[%s205 + $0xbc8] sm:$0xff]
        %v635 = vld [vmem:[%s205 + $0xbd0] sm:$0xff]
        %v636 = vld [vmem:[%s205 + $0xbd8] sm:$0xff]
        %v637 = vld [vmem:[%s205 + $0xbe0] sm:$0xff]
        %v638 = vld [vmem:[%s205 + $0xbe8] sm:$0xff]
        %v639 = vld [vmem:[%s205 + $0xbf0] sm:$0xff]
        %v640 = vld [vmem:[%s205 + $0xbf8] sm:$0xff]
        %v641 = vld [vmem:[%s205 + $0xc00] sm:$0xff]
        %v642 = vld [vmem:[%s205 + $0xc08] sm:$0xff]
        %v643 = vld [vmem:[%s205 + $0xc10] sm:$0xff]
        %v644 = vld [vmem:[%s205 + $0xc18] sm:$0xff]
        %v645 = vld [vmem:[%s205 + $0xc20] sm:$0xff]
        %v646 = vld [vmem:[%s205 + $0xc28] sm:$0xff]
        %v647 = vld [vmem:[%s205 + $0xc30] sm:$0xff]
        %v648 = vld [vmem:[%s205 + $0xc38] sm:$0xff]
        %v649 = vld [vmem:[%s205 + $0xc40] sm:$0xff]
        %v650 = vld [vmem:[%s205 + $0xc48] sm:$0xff]
        %v651 = vld [vmem:[%s205 + $0xc50] sm:$0xff]
        %v652 = vld [vmem:[%s205 + $0xc58] sm:$0xff]
        %v653 = vld [vmem:[%s205 + $0xc60] sm:$0xff]
        %v654 = vld [vmem:[%s205 + $0xc68] sm:$0xff]
        %v655 = vld [vmem:[%s205 + $0xc70] sm:$0xff]
        %v656 = vld [vmem:[%s205 + $0xc78] sm:$0xff]
        %v657 = vld [vmem:[%s205 + $0xc80] sm:$0xff]
        %v658 = vld [vmem:[%s205 + $0xc88] sm:$0xff]
        %v659 = vld [vmem:[%s205 + $0xc90] sm:$0xff]
        %v660 = vld [vmem:[%s205 + $0xc98] sm:$0xff]
        %v661 = vld [vmem:[%s205 + $0xca0] sm:$0xff]
        %v662 = vld [vmem:[%s205 + $0xca8] sm:$0xff]
        %v663 = vld [vmem:[%s205 + $0xcb0] sm:$0xff]
        %v664 = vld [vmem:[%s205 + $0xcb8] sm:$0xff]
        %v665 = vld [vmem:[%s205 + $0xcc0] sm:$0xff]
        %v666 = vld [vmem:[%s205 + $0xcc8] sm:$0xff]
        %v667 = vld [vmem:[%s205 + $0xcd0] sm:$0xff]
        %v668 = vld [vmem:[%s205 + $0xcd8] sm:$0xff]
        %v669 = vld [vmem:[%s205 + $0xce0] sm:$0xff]
        %v670 = vld [vmem:[%s205 + $0xce8] sm:$0xff]
        %v671 = vld [vmem:[%s205 + $0xcf0] sm:$0xff]
        %v672 = vld [vmem:[%s205 + $0xcf8] sm:$0xff]
        %v673 = vld [vmem:[%s205 + $0xd00] sm:$0xff]
        %v674 = vld [vmem:[%s205 + $0xd08] sm:$0xff]
        %v675 = vld [vmem:[%s205 + $0xd10] sm:$0xff]
        %v676 = vld [vmem:[%s205 + $0xd18] sm:$0xff]
        %v677 = vld [vmem:[%s205 + $0xd20] sm:$0xff]
        %v678 = vld [vmem:[%s205 + $0xd28] sm:$0xff]
        %v679 = vld [vmem:[%s205 + $0xd30] sm:$0xff]
        %v680 = vld [vmem:[%s205 + $0xd38] sm:$0xff]
        %v681 = vld [vmem:[%s205 + $0xd40] sm:$0xff]
        %v682 = vld [vmem:[%s205 + $0xd48] sm:$0xff]
        %v683 = vld [vmem:[%s205 + $0xd50] sm:$0xff]
        %v684 = vld [vmem:[%s205 + $0xd58] sm:$0xff]
        %v685 = vld [vmem:[%s205 + $0xd60] sm:$0xff]
        %v686 = vld [vmem:[%s205 + $0xd68] sm:$0xff]
        %v687 = vld [vmem:[%s205 + $0xd70] sm:$0xff]
        %v688 = vld [vmem:[%s205 + $0xd78] sm:$0xff]
        %v689 = vld [vmem:[%s205 + $0xd80] sm:$0xff]
        %v690 = vld [vmem:[%s205 + $0xd88] sm:$0xff]
        %v691 = vld [vmem:[%s205 + $0xd90] sm:$0xff]
        %v692 = vld [vmem:[%s205 + $0xd98] sm:$0xff]
        %v693 = vld [vmem:[%s205 + $0xda0] sm:$0xff]
        %v694 = vld [vmem:[%s205 + $0xda8] sm:$0xff]
        %v695 = vld [vmem:[%s205 + $0xdb0] sm:$0xff]
        %v696 = vld [vmem:[%s205 + $0xdb8] sm:$0xff]
        %v697 = vld [vmem:[%s205 + $0xdc0] sm:$0xff]
        %v698 = vld [vmem:[%s205 + $0xdc8] sm:$0xff]
        %v699 = vld [vmem:[%s205 + $0xdd0] sm:$0xff]
        %v700 = vld [vmem:[%s205 + $0xdd8] sm:$0xff]
        %v701 = vld [vmem:[%s205 + $0xde0] sm:$0xff]
        %v702 = vld [vmem:[%s205 + $0xde8] sm:$0xff]
        %v703 = vld [vmem:[%s205 + $0xdf0] sm:$0xff]
        %v704 = vld [vmem:[%s205 + $0xdf8] sm:$0xff]
        %v705 = vld [vmem:[%s205 + $0xe00] sm:$0xff]
        %v706 = vld [vmem:[%s205 + $0xe08] sm:$0xff]
        %v707 = vld [vmem:[%s205 + $0xe10] sm:$0xff]
        %v708 = vld [vmem:[%s205 + $0xe18] sm:$0xff]
        %v709 = vld [vmem:[%s205 + $0xe20] sm:$0xff]
        %v710 = vld [vmem:[%s205 + $0xe28] sm:$0xff]
        %v711 = vld [vmem:[%s205 + $0xe30] sm:$0xff]
        %v712 = vld [vmem:[%s205 + $0xe38] sm:$0xff]
        %v713 = vld [vmem:[%s205 + $0xe40] sm:$0xff]
        %v714 = vld [vmem:[%s205 + $0xe48] sm:$0xff]
        %v715 = vld [vmem:[%s205 + $0xe50] sm:$0xff]
        %v716 = vld [vmem:[%s205 + $0xe58] sm:$0xff]
        %v717 = vld [vmem:[%s205 + $0xe60] sm:$0xff]
        %v718 = vld [vmem:[%s205 + $0xe68] sm:$0xff]
        %v719 = vld [vmem:[%s205 + $0xe70] sm:$0xff]
        %v720 = vld [vmem:[%s205 + $0xe78] sm:$0xff]
        %v721 = vld [vmem:[%s205 + $0xe80] sm:$0xff]
        %v722 = vld [vmem:[%s205 + $0xe88] sm:$0xff]
        %v723 = vld [vmem:[%s205 + $0xe90] sm:$0xff]
        %v724 = vld [vmem:[%s205 + $0xe98] sm:$0xff]
        %v725 = vld [vmem:[%s205 + $0xea0] sm:$0xff]
        %v726 = vld [vmem:[%s205 + $0xea8] sm:$0xff]
        %v727 = vld [vmem:[%s205 + $0xeb0] sm:$0xff]
        %v728 = vld [vmem:[%s205 + $0xeb8] sm:$0xff]
        %v729 = vld [vmem:[%s205 + $0xec0] sm:$0xff]
        %v730 = vld [vmem:[%s205 + $0xec8] sm:$0xff]
        %v731 = vld [vmem:[%s205 + $0xed0] sm:$0xff]
        %v732 = vld [vmem:[%s205 + $0xed8] sm:$0xff]
        %v733 = vld [vmem:[%s205 + $0xee0] sm:$0xff]
        %v734 = vld [vmem:[%s205 + $0xee8] sm:$0xff]
        %v735 = vld [vmem:[%s205 + $0xef0] sm:$0xff]
        %v736 = vld [vmem:[%s205 + $0xef8] sm:$0xff]
        %v737 = vld [vmem:[%s205 + $0xf00] sm:$0xff]
        %v738 = vld [vmem:[%s205 + $0xf08] sm:$0xff]
        %v739 = vld [vmem:[%s205 + $0xf10] sm:$0xff]
        %v740 = vld [vmem:[%s205 + $0xf18] sm:$0xff]
        %v741 = vld [vmem:[%s205 + $0xf20] sm:$0xff]
        %v742 = vld [vmem:[%s205 + $0xf28] sm:$0xff]
        %v743 = vld [vmem:[%s205 + $0xf30] sm:$0xff]
        %v744 = vld [vmem:[%s205 + $0xf38] sm:$0xff]
        %v745 = vld [vmem:[%s205 + $0xf40] sm:$0xff]
        %v746 = vld [vmem:[%s205 + $0xf48] sm:$0xff]
        %v747 = vld [vmem:[%s205 + $0xf50] sm:$0xff]
        %v748 = vld [vmem:[%s205 + $0xf58] sm:$0xff]
        %v749 = vld [vmem:[%s205 + $0xf60] sm:$0xff]
        %v750 = vld [vmem:[%s205 + $0xf68] sm:$0xff]
        %v751 = vld [vmem:[%s205 + $0xf70] sm:$0xff]
        %v752 = vld [vmem:[%s205 + $0xf78] sm:$0xff]
        %v753 = vld [vmem:[%s205 + $0xf80] sm:$0xff]
        %v754 = vld [vmem:[%s205 + $0xf88] sm:$0xff]
        %v755 = vld [vmem:[%s205 + $0xf90] sm:$0xff]
        %v756 = vld [vmem:[%s205 + $0xf98] sm:$0xff]
        %v757 = vld [vmem:[%s205 + $0xfa0] sm:$0xff]
        %v758 = vld [vmem:[%s205 + $0xfa8] sm:$0xff]
        %v759 = vld [vmem:[%s205 + $0xfb0] sm:$0xff]
        %v760 = vld [vmem:[%s205 + $0xfb8] sm:$0xff]
        %v761 = vld [vmem:[%s205 + $0xfc0] sm:$0xff]
        %v762 = vld [vmem:[%s205 + $0xfc8] sm:$0xff]
        %v763 = vld [vmem:[%s205 + $0xfd0] sm:$0xff]
        %v764 = vld [vmem:[%s205 + $0xfd8] sm:$0xff]
        %v765 = vld [vmem:[%s205 + $0xfe0] sm:$0xff]
        %v766 = vld [vmem:[%s205 + $0xfe8] sm:$0xff]
        %v767 = vld [vmem:[%s205 + $0xff0] sm:$0xff]
        %v768 = vld [vmem:[%s205 + $0xff8] sm:$0xff]
        %v769 = vld [vmem:[%s214] sm:$0xff]
        %v770 = vld [vmem:[%s214 + $0x8] sm:$0xff]
        %v771 = vld [vmem:[%s214 + $0x10] sm:$0xff]
        %v772 = vld [vmem:[%s214 + $0x18] sm:$0xff]
        %v773 = vld [vmem:[%s214 + $0x20] sm:$0xff]
        %v774 = vld [vmem:[%s214 + $0x28] sm:$0xff]
        %v775 = vld [vmem:[%s214 + $0x30] sm:$0xff]
        %v776 = vld [vmem:[%s214 + $0x38] sm:$0xff]
        %v777 = vld [vmem:[%s214 + $0x40] sm:$0xff]
        %v778 = vld [vmem:[%s214 + $0x48] sm:$0xff]
        %v779 = vld [vmem:[%s214 + $0x50] sm:$0xff]
        %v780 = vld [vmem:[%s214 + $0x58] sm:$0xff]
        %v781 = vld [vmem:[%s214 + $0x60] sm:$0xff]
        %v782 = vld [vmem:[%s214 + $0x68] sm:$0xff]
        %v783 = vld [vmem:[%s214 + $0x70] sm:$0xff]
        %v784 = vld [vmem:[%s214 + $0x78] sm:$0xff]
        %v785 = vld [vmem:[%s214 + $0x80] sm:$0xff]
        %v786 = vld [vmem:[%s214 + $0x88] sm:$0xff]
        %v787 = vld [vmem:[%s214 + $0x90] sm:$0xff]
        %v788 = vld [vmem:[%s214 + $0x98] sm:$0xff]
        %v789 = vld [vmem:[%s214 + $0xa0] sm:$0xff]
        %v790 = vld [vmem:[%s214 + $0xa8] sm:$0xff]
        %v791 = vld [vmem:[%s214 + $0xb0] sm:$0xff]
        %v792 = vld [vmem:[%s214 + $0xb8] sm:$0xff]
        %v793 = vld [vmem:[%s214 + $0xc0] sm:$0xff]
        %v794 = vld [vmem:[%s214 + $0xc8] sm:$0xff]
        %v795 = vld [vmem:[%s214 + $0xd0] sm:$0xff]
        %v796 = vld [vmem:[%s214 + $0xd8] sm:$0xff]
        %v797 = vld [vmem:[%s214 + $0xe0] sm:$0xff]
        %v798 = vld [vmem:[%s214 + $0xe8] sm:$0xff]
        %v799 = vld [vmem:[%s214 + $0xf0] sm:$0xff]
        %v800 = vld [vmem:[%s214 + $0xf8] sm:$0xff]
        %v801 = vld [vmem:[%s214 + $0x100] sm:$0xff]
        %v802 = vld [vmem:[%s214 + $0x108] sm:$0xff]
        %v803 = vld [vmem:[%s214 + $0x110] sm:$0xff]
        %v804 = vld [vmem:[%s214 + $0x118] sm:$0xff]
        %v805 = vld [vmem:[%s214 + $0x120] sm:$0xff]
        %v806 = vld [vmem:[%s214 + $0x128] sm:$0xff]
        %v807 = vld [vmem:[%s214 + $0x130] sm:$0xff]
        %v808 = vld [vmem:[%s214 + $0x138] sm:$0xff]
        %v809 = vld [vmem:[%s214 + $0x140] sm:$0xff]
        %v810 = vld [vmem:[%s214 + $0x148] sm:$0xff]
        %v811 = vld [vmem:[%s214 + $0x150] sm:$0xff]
        %v812 = vld [vmem:[%s214 + $0x158] sm:$0xff]
        %v813 = vld [vmem:[%s214 + $0x160] sm:$0xff]
        %v814 = vld [vmem:[%s214 + $0x168] sm:$0xff]
        %v815 = vld [vmem:[%s214 + $0x170] sm:$0xff]
        %v816 = vld [vmem:[%s214 + $0x178] sm:$0xff]
        %v817 = vld [vmem:[%s214 + $0x180] sm:$0xff]
        %v818 = vld [vmem:[%s214 + $0x188] sm:$0xff]
        %v819 = vld [vmem:[%s214 + $0x190] sm:$0xff]
        %v820 = vld [vmem:[%s214 + $0x198] sm:$0xff]
        %v821 = vld [vmem:[%s214 + $0x1a0] sm:$0xff]
        %v822 = vld [vmem:[%s214 + $0x1a8] sm:$0xff]
        %v823 = vld [vmem:[%s214 + $0x1b0] sm:$0xff]
        %v824 = vld [vmem:[%s214 + $0x1b8] sm:$0xff]
        %v825 = vld [vmem:[%s214 + $0x1c0] sm:$0xff]
        %v826 = vld [vmem:[%s214 + $0x1c8] sm:$0xff]
        %v827 = vld [vmem:[%s214 + $0x1d0] sm:$0xff]
        %v828 = vld [vmem:[%s214 + $0x1d8] sm:$0xff]
        %v829 = vld [vmem:[%s214 + $0x1e0] sm:$0xff]
        %v830 = vld [vmem:[%s214 + $0x1e8] sm:$0xff]
        %v831 = vld [vmem:[%s214 + $0x1f0] sm:$0xff]
        %v832 = vld [vmem:[%s214 + $0x1f8] sm:$0xff]
        %v833 = vld [vmem:[%s214 + $0x200] sm:$0xff]
        %v834 = vld [vmem:[%s214 + $0x208] sm:$0xff]
        %v835 = vld [vmem:[%s214 + $0x210] sm:$0xff]
        %v836 = vld [vmem:[%s214 + $0x218] sm:$0xff]
        %v837 = vld [vmem:[%s214 + $0x220] sm:$0xff]
        %v838 = vld [vmem:[%s214 + $0x228] sm:$0xff]
        %v839 = vld [vmem:[%s214 + $0x230] sm:$0xff]
        %v840 = vld [vmem:[%s214 + $0x238] sm:$0xff]
        %v841 = vld [vmem:[%s214 + $0x240] sm:$0xff]
        %v842 = vld [vmem:[%s214 + $0x248] sm:$0xff]
        %v843 = vld [vmem:[%s214 + $0x250] sm:$0xff]
        %v844 = vld [vmem:[%s214 + $0x258] sm:$0xff]
        %v845 = vld [vmem:[%s214 + $0x260] sm:$0xff]
        %v846 = vld [vmem:[%s214 + $0x268] sm:$0xff]
        %v847 = vld [vmem:[%s214 + $0x270] sm:$0xff]
        %v848 = vld [vmem:[%s214 + $0x278] sm:$0xff]
        %v849 = vld [vmem:[%s214 + $0x280] sm:$0xff]
        %v850 = vld [vmem:[%s214 + $0x288] sm:$0xff]
        %v851 = vld [vmem:[%s214 + $0x290] sm:$0xff]
        %v852 = vld [vmem:[%s214 + $0x298] sm:$0xff]
        %v853 = vld [vmem:[%s214 + $0x2a0] sm:$0xff]
        %v854 = vld [vmem:[%s214 + $0x2a8] sm:$0xff]
        %v855 = vld [vmem:[%s214 + $0x2b0] sm:$0xff]
        %v856 = vld [vmem:[%s214 + $0x2b8] sm:$0xff]
        %v857 = vld [vmem:[%s214 + $0x2c0] sm:$0xff]
        %v858 = vld [vmem:[%s214 + $0x2c8] sm:$0xff]
        %v859 = vld [vmem:[%s214 + $0x2d0] sm:$0xff]
        %v860 = vld [vmem:[%s214 + $0x2d8] sm:$0xff]
        %v861 = vld [vmem:[%s214 + $0x2e0] sm:$0xff]
        %v862 = vld [vmem:[%s214 + $0x2e8] sm:$0xff]
        %v863 = vld [vmem:[%s214 + $0x2f0] sm:$0xff]
        %v864 = vld [vmem:[%s214 + $0x2f8] sm:$0xff]
        %v865 = vld [vmem:[%s214 + $0x300] sm:$0xff]
        %v866 = vld [vmem:[%s214 + $0x308] sm:$0xff]
        %v867 = vld [vmem:[%s214 + $0x310] sm:$0xff]
        %v868 = vld [vmem:[%s214 + $0x318] sm:$0xff]
        %v869 = vld [vmem:[%s214 + $0x320] sm:$0xff]
        %v870 = vld [vmem:[%s214 + $0x328] sm:$0xff]
        %v871 = vld [vmem:[%s214 + $0x330] sm:$0xff]
        %v872 = vld [vmem:[%s214 + $0x338] sm:$0xff]
        %v873 = vld [vmem:[%s214 + $0x340] sm:$0xff]
        %v874 = vld [vmem:[%s214 + $0x348] sm:$0xff]
        %v875 = vld [vmem:[%s214 + $0x350] sm:$0xff]
        %v876 = vld [vmem:[%s214 + $0x358] sm:$0xff]
        %v877 = vld [vmem:[%s214 + $0x360] sm:$0xff]
        %v878 = vld [vmem:[%s214 + $0x368] sm:$0xff]
        %v879 = vld [vmem:[%s214 + $0x370] sm:$0xff]
        %v880 = vld [vmem:[%s214 + $0x378] sm:$0xff]
        %v881 = vld [vmem:[%s214 + $0x380] sm:$0xff]
        %v882 = vld [vmem:[%s214 + $0x388] sm:$0xff]
        %v883 = vld [vmem:[%s214 + $0x390] sm:$0xff]
        %v884 = vld [vmem:[%s214 + $0x398] sm:$0xff]
        %v885 = vld [vmem:[%s214 + $0x3a0] sm:$0xff]
        %v886 = vld [vmem:[%s214 + $0x3a8] sm:$0xff]
        %v887 = vld [vmem:[%s214 + $0x3b0] sm:$0xff]
        %v888 = vld [vmem:[%s214 + $0x3b8] sm:$0xff]
        %v889 = vld [vmem:[%s214 + $0x3c0] sm:$0xff]
        %v890 = vld [vmem:[%s214 + $0x3c8] sm:$0xff]
        %v891 = vld [vmem:[%s214 + $0x3d0] sm:$0xff]
        %v892 = vld [vmem:[%s214 + $0x3d8] sm:$0xff]
        %v893 = vld [vmem:[%s214 + $0x3e0] sm:$0xff]
        %v894 = vld [vmem:[%s214 + $0x3e8] sm:$0xff]
        %v895 = vld [vmem:[%s214 + $0x3f0] sm:$0xff]
        %v896 = vld [vmem:[%s214 + $0x3f8] sm:$0xff]
        %v897 = vld [vmem:[%s214 + $0x400] sm:$0xff]
        %v898 = vld [vmem:[%s214 + $0x408] sm:$0xff]
        %v899 = vld [vmem:[%s214 + $0x410] sm:$0xff]
        %v900 = vld [vmem:[%s214 + $0x418] sm:$0xff]
        %v901 = vld [vmem:[%s214 + $0x420] sm:$0xff]
        %v902 = vld [vmem:[%s214 + $0x428] sm:$0xff]
        %v903 = vld [vmem:[%s214 + $0x430] sm:$0xff]
        %v904 = vld [vmem:[%s214 + $0x438] sm:$0xff]
        %v905 = vld [vmem:[%s214 + $0x440] sm:$0xff]
        %v906 = vld [vmem:[%s214 + $0x448] sm:$0xff]
        %v907 = vld [vmem:[%s214 + $0x450] sm:$0xff]
        %v908 = vld [vmem:[%s214 + $0x458] sm:$0xff]
        %v909 = vld [vmem:[%s214 + $0x460] sm:$0xff]
        %v910 = vld [vmem:[%s214 + $0x468] sm:$0xff]
        %v911 = vld [vmem:[%s214 + $0x470] sm:$0xff]
        %v912 = vld [vmem:[%s214 + $0x478] sm:$0xff]
        %v913 = vld [vmem:[%s214 + $0x480] sm:$0xff]
        %v914 = vld [vmem:[%s214 + $0x488] sm:$0xff]
        %v915 = vld [vmem:[%s214 + $0x490] sm:$0xff]
        %v916 = vld [vmem:[%s214 + $0x498] sm:$0xff]
        %v917 = vld [vmem:[%s214 + $0x4a0] sm:$0xff]
        %v918 = vld [vmem:[%s214 + $0x4a8] sm:$0xff]
        %v919 = vld [vmem:[%s214 + $0x4b0] sm:$0xff]
        %v920 = vld [vmem:[%s214 + $0x4b8] sm:$0xff]
        %v921 = vld [vmem:[%s214 + $0x4c0] sm:$0xff]
        %v922 = vld [vmem:[%s214 + $0x4c8] sm:$0xff]
        %v923 = vld [vmem:[%s214 + $0x4d0] sm:$0xff]
        %v924 = vld [vmem:[%s214 + $0x4d8] sm:$0xff]
        %v925 = vld [vmem:[%s214 + $0x4e0] sm:$0xff]
        %v926 = vld [vmem:[%s214 + $0x4e8] sm:$0xff]
        %v927 = vld [vmem:[%s214 + $0x4f0] sm:$0xff]
        %v928 = vld [vmem:[%s214 + $0x4f8] sm:$0xff]
        %v929 = vld [vmem:[%s214 + $0x500] sm:$0xff]
        %v930 = vld [vmem:[%s214 + $0x508] sm:$0xff]
        %v931 = vld [vmem:[%s214 + $0x510] sm:$0xff]
        %v932 = vld [vmem:[%s214 + $0x518] sm:$0xff]
        %v933 = vld [vmem:[%s214 + $0x520] sm:$0xff]
        %v934 = vld [vmem:[%s214 + $0x528] sm:$0xff]
        %v935 = vld [vmem:[%s214 + $0x530] sm:$0xff]
        %v936 = vld [vmem:[%s214 + $0x538] sm:$0xff]
        %v937 = vld [vmem:[%s214 + $0x540] sm:$0xff]
        %v938 = vld [vmem:[%s214 + $0x548] sm:$0xff]
        %v939 = vld [vmem:[%s214 + $0x550] sm:$0xff]
        %v940 = vld [vmem:[%s214 + $0x558] sm:$0xff]
        %v941 = vld [vmem:[%s214 + $0x560] sm:$0xff]
        %v942 = vld [vmem:[%s214 + $0x568] sm:$0xff]
        %v943 = vld [vmem:[%s214 + $0x570] sm:$0xff]
        %v944 = vld [vmem:[%s214 + $0x578] sm:$0xff]
        %v945 = vld [vmem:[%s214 + $0x580] sm:$0xff]
        %v946 = vld [vmem:[%s214 + $0x588] sm:$0xff]
        %v947 = vld [vmem:[%s214 + $0x590] sm:$0xff]
        %v948 = vld [vmem:[%s214 + $0x598] sm:$0xff]
        %v949 = vld [vmem:[%s214 + $0x5a0] sm:$0xff]
        %v950 = vld [vmem:[%s214 + $0x5a8] sm:$0xff]
        %v951 = vld [vmem:[%s214 + $0x5b0] sm:$0xff]
        %v952 = vld [vmem:[%s214 + $0x5b8] sm:$0xff]
        %v953 = vld [vmem:[%s214 + $0x5c0] sm:$0xff]
        %v954 = vld [vmem:[%s214 + $0x5c8] sm:$0xff]
        %v955 = vld [vmem:[%s214 + $0x5d0] sm:$0xff]
        %v956 = vld [vmem:[%s214 + $0x5d8] sm:$0xff]
        %v957 = vld [vmem:[%s214 + $0x5e0] sm:$0xff]
        %v958 = vld [vmem:[%s214 + $0x5e8] sm:$0xff]
        %v959 = vld [vmem:[%s214 + $0x5f0] sm:$0xff]
        %v960 = vld [vmem:[%s214 + $0x5f8] sm:$0xff]
        %v961 = vld [vmem:[%s214 + $0x600] sm:$0xff]
        %v962 = vld [vmem:[%s214 + $0x608] sm:$0xff]
        %v963 = vld [vmem:[%s214 + $0x610] sm:$0xff]
        %v964 = vld [vmem:[%s214 + $0x618] sm:$0xff]
        %v965 = vld [vmem:[%s214 + $0x620] sm:$0xff]
        %v966 = vld [vmem:[%s214 + $0x628] sm:$0xff]
        %v967 = vld [vmem:[%s214 + $0x630] sm:$0xff]
        %v968 = vld [vmem:[%s214 + $0x638] sm:$0xff]
        %v969 = vld [vmem:[%s214 + $0x640] sm:$0xff]
        %v970 = vld [vmem:[%s214 + $0x648] sm:$0xff]
        %v971 = vld [vmem:[%s214 + $0x650] sm:$0xff]
        %v972 = vld [vmem:[%s214 + $0x658] sm:$0xff]
        %v973 = vld [vmem:[%s214 + $0x660] sm:$0xff]
        %v974 = vld [vmem:[%s214 + $0x668] sm:$0xff]
        %v975 = vld [vmem:[%s214 + $0x670] sm:$0xff]
        %v976 = vld [vmem:[%s214 + $0x678] sm:$0xff]
        %v977 = vld [vmem:[%s214 + $0x680] sm:$0xff]
        %v978 = vld [vmem:[%s214 + $0x688] sm:$0xff]
        %v979 = vld [vmem:[%s214 + $0x690] sm:$0xff]
        %v980 = vld [vmem:[%s214 + $0x698] sm:$0xff]
        %v981 = vld [vmem:[%s214 + $0x6a0] sm:$0xff]
        %v982 = vld [vmem:[%s214 + $0x6a8] sm:$0xff]
        %v983 = vld [vmem:[%s214 + $0x6b0] sm:$0xff]
        %v984 = vld [vmem:[%s214 + $0x6b8] sm:$0xff]
        %v985 = vld [vmem:[%s214 + $0x6c0] sm:$0xff]
        %v986 = vld [vmem:[%s214 + $0x6c8] sm:$0xff]
        %v987 = vld [vmem:[%s214 + $0x6d0] sm:$0xff]
        %v988 = vld [vmem:[%s214 + $0x6d8] sm:$0xff]
        %v989 = vld [vmem:[%s214 + $0x6e0] sm:$0xff]
        %v990 = vld [vmem:[%s214 + $0x6e8] sm:$0xff]
        %v991 = vld [vmem:[%s214 + $0x6f0] sm:$0xff]
        %v992 = vld [vmem:[%s214 + $0x6f8] sm:$0xff]
        %v993 = vld [vmem:[%s214 + $0x700] sm:$0xff]
        %v994 = vld [vmem:[%s214 + $0x708] sm:$0xff]
        %v995 = vld [vmem:[%s214 + $0x710] sm:$0xff]
        %v996 = vld [vmem:[%s214 + $0x718] sm:$0xff]
        %v997 = vld [vmem:[%s214 + $0x720] sm:$0xff]
        %v998 = vld [vmem:[%s214 + $0x728] sm:$0xff]
        %v999 = vld [vmem:[%s214 + $0x730] sm:$0xff]
        %v1000 = vld [vmem:[%s214 + $0x738] sm:$0xff]
        %v1001 = vld [vmem:[%s214 + $0x740] sm:$0xff]
        %v1002 = vld [vmem:[%s214 + $0x748] sm:$0xff]
        %v1003 = vld [vmem:[%s214 + $0x750] sm:$0xff]
        %v1004 = vld [vmem:[%s214 + $0x758] sm:$0xff]
        %v1005 = vld [vmem:[%s214 + $0x760] sm:$0xff]
        %v1006 = vld [vmem:[%s214 + $0x768] sm:$0xff]
        %v1007 = vld [vmem:[%s214 + $0x770] sm:$0xff]
        %v1008 = vld [vmem:[%s214 + $0x778] sm:$0xff]
        %v1009 = vld [vmem:[%s214 + $0x780] sm:$0xff]
        %v1010 = vld [vmem:[%s214 + $0x788] sm:$0xff]
        %v1011 = vld [vmem:[%s214 + $0x790] sm:$0xff]
        %v1012 = vld [vmem:[%s214 + $0x798] sm:$0xff]
        %v1013 = vld [vmem:[%s214 + $0x7a0] sm:$0xff]
        %v1014 = vld [vmem:[%s214 + $0x7a8] sm:$0xff]
        %v1015 = vld [vmem:[%s214 + $0x7b0] sm:$0xff]
        %v1016 = vld [vmem:[%s214 + $0x7b8] sm:$0xff]
        %v1017 = vld [vmem:[%s214 + $0x7c0] sm:$0xff]
        %v1018 = vld [vmem:[%s214 + $0x7c8] sm:$0xff]
        %v1019 = vld [vmem:[%s214 + $0x7d0] sm:$0xff]
        %v1020 = vld [vmem:[%s214 + $0x7d8] sm:$0xff]
        %v1021 = vld [vmem:[%s214 + $0x7e0] sm:$0xff]
        %v1022 = vld [vmem:[%s214 + $0x7e8] sm:$0xff]
        %v1023 = vld [vmem:[%s214 + $0x7f0] sm:$0xff]
        %v1024 = vld [vmem:[%s214 + $0x7f8] sm:$0xff]
        %v1025 = vld [vmem:[%s214 + $0x800] sm:$0xff]
        %v1026 = vld [vmem:[%s214 + $0x808] sm:$0xff]
        %v1027 = vld [vmem:[%s214 + $0x810] sm:$0xff]
        %v1028 = vld [vmem:[%s214 + $0x818] sm:$0xff]
        %v1029 = vld [vmem:[%s214 + $0x820] sm:$0xff]
        %v1030 = vld [vmem:[%s214 + $0x828] sm:$0xff]
        %v1031 = vld [vmem:[%s214 + $0x830] sm:$0xff]
        %v1032 = vld [vmem:[%s214 + $0x838] sm:$0xff]
        %v1033 = vld [vmem:[%s214 + $0x840] sm:$0xff]
        %v1034 = vld [vmem:[%s214 + $0x848] sm:$0xff]
        %v1035 = vld [vmem:[%s214 + $0x850] sm:$0xff]
        %v1036 = vld [vmem:[%s214 + $0x858] sm:$0xff]
        %v1037 = vld [vmem:[%s214 + $0x860] sm:$0xff]
        %v1038 = vld [vmem:[%s214 + $0x868] sm:$0xff]
        %v1039 = vld [vmem:[%s214 + $0x870] sm:$0xff]
        %v1040 = vld [vmem:[%s214 + $0x878] sm:$0xff]
        %v1041 = vld [vmem:[%s214 + $0x880] sm:$0xff]
        %v1042 = vld [vmem:[%s214 + $0x888] sm:$0xff]
        %v1043 = vld [vmem:[%s214 + $0x890] sm:$0xff]
        %v1044 = vld [vmem:[%s214 + $0x898] sm:$0xff]
        %v1045 = vld [vmem:[%s214 + $0x8a0] sm:$0xff]
        %v1046 = vld [vmem:[%s214 + $0x8a8] sm:$0xff]
        %v1047 = vld [vmem:[%s214 + $0x8b0] sm:$0xff]
        %v1048 = vld [vmem:[%s214 + $0x8b8] sm:$0xff]
        %v1049 = vld [vmem:[%s214 + $0x8c0] sm:$0xff]
        %v1050 = vld [vmem:[%s214 + $0x8c8] sm:$0xff]
        %v1051 = vld [vmem:[%s214 + $0x8d0] sm:$0xff]
        %v1052 = vld [vmem:[%s214 + $0x8d8] sm:$0xff]
        %v1053 = vld [vmem:[%s214 + $0x8e0] sm:$0xff]
        %v1054 = vld [vmem:[%s214 + $0x8e8] sm:$0xff]
        %v1055 = vld [vmem:[%s214 + $0x8f0] sm:$0xff]
        %v1056 = vld [vmem:[%s214 + $0x8f8] sm:$0xff]
        %v1057 = vld [vmem:[%s214 + $0x900] sm:$0xff]
        %v1058 = vld [vmem:[%s214 + $0x908] sm:$0xff]
        %v1059 = vld [vmem:[%s214 + $0x910] sm:$0xff]
        %v1060 = vld [vmem:[%s214 + $0x918] sm:$0xff]
        %v1061 = vld [vmem:[%s214 + $0x920] sm:$0xff]
        %v1062 = vld [vmem:[%s214 + $0x928] sm:$0xff]
        %v1063 = vld [vmem:[%s214 + $0x930] sm:$0xff]
        %v1064 = vld [vmem:[%s214 + $0x938] sm:$0xff]
        %v1065 = vld [vmem:[%s214 + $0x940] sm:$0xff]
        %v1066 = vld [vmem:[%s214 + $0x948] sm:$0xff]
        %v1067 = vld [vmem:[%s214 + $0x950] sm:$0xff]
        %v1068 = vld [vmem:[%s214 + $0x958] sm:$0xff]
        %v1069 = vld [vmem:[%s214 + $0x960] sm:$0xff]
        %v1070 = vld [vmem:[%s214 + $0x968] sm:$0xff]
        %v1071 = vld [vmem:[%s214 + $0x970] sm:$0xff]
        %v1072 = vld [vmem:[%s214 + $0x978] sm:$0xff]
        %v1073 = vld [vmem:[%s214 + $0x980] sm:$0xff]
        %v1074 = vld [vmem:[%s214 + $0x988] sm:$0xff]
        %v1075 = vld [vmem:[%s214 + $0x990] sm:$0xff]
        %v1076 = vld [vmem:[%s214 + $0x998] sm:$0xff]
        %v1077 = vld [vmem:[%s214 + $0x9a0] sm:$0xff]
        %v1078 = vld [vmem:[%s214 + $0x9a8] sm:$0xff]
        %v1079 = vld [vmem:[%s214 + $0x9b0] sm:$0xff]
        %v1080 = vld [vmem:[%s214 + $0x9b8] sm:$0xff]
        %v1081 = vld [vmem:[%s214 + $0x9c0] sm:$0xff]
        %v1082 = vld [vmem:[%s214 + $0x9c8] sm:$0xff]
        %v1083 = vld [vmem:[%s214 + $0x9d0] sm:$0xff]
        %v1084 = vld [vmem:[%s214 + $0x9d8] sm:$0xff]
        %v1085 = vld [vmem:[%s214 + $0x9e0] sm:$0xff]
        %v1086 = vld [vmem:[%s214 + $0x9e8] sm:$0xff]
        %v1087 = vld [vmem:[%s214 + $0x9f0] sm:$0xff]
        %v1088 = vld [vmem:[%s214 + $0x9f8] sm:$0xff]
        %v1089 = vld [vmem:[%s214 + $0xa00] sm:$0xff]
        %v1090 = vld [vmem:[%s214 + $0xa08] sm:$0xff]
        %v1091 = vld [vmem:[%s214 + $0xa10] sm:$0xff]
        %v1092 = vld [vmem:[%s214 + $0xa18] sm:$0xff]
        %v1093 = vld [vmem:[%s214 + $0xa20] sm:$0xff]
        %v1094 = vld [vmem:[%s214 + $0xa28] sm:$0xff]
        %v1095 = vld [vmem:[%s214 + $0xa30] sm:$0xff]
        %v1096 = vld [vmem:[%s214 + $0xa38] sm:$0xff]
        %v1097 = vld [vmem:[%s214 + $0xa40] sm:$0xff]
        %v1098 = vld [vmem:[%s214 + $0xa48] sm:$0xff]
        %v1099 = vld [vmem:[%s214 + $0xa50] sm:$0xff]
        %v1100 = vld [vmem:[%s214 + $0xa58] sm:$0xff]
        %v1101 = vld [vmem:[%s214 + $0xa60] sm:$0xff]
        %v1102 = vld [vmem:[%s214 + $0xa68] sm:$0xff]
        %v1103 = vld [vmem:[%s214 + $0xa70] sm:$0xff]
        %v1104 = vld [vmem:[%s214 + $0xa78] sm:$0xff]
        %v1105 = vld [vmem:[%s214 + $0xa80] sm:$0xff]
        %v1106 = vld [vmem:[%s214 + $0xa88] sm:$0xff]
        %v1107 = vld [vmem:[%s214 + $0xa90] sm:$0xff]
        %v1108 = vld [vmem:[%s214 + $0xa98] sm:$0xff]
        %v1109 = vld [vmem:[%s214 + $0xaa0] sm:$0xff]
        %v1110 = vld [vmem:[%s214 + $0xaa8] sm:$0xff]
        %v1111 = vld [vmem:[%s214 + $0xab0] sm:$0xff]
        %v1112 = vld [vmem:[%s214 + $0xab8] sm:$0xff]
        %v1113 = vld [vmem:[%s214 + $0xac0] sm:$0xff]
        %v1114 = vld [vmem:[%s214 + $0xac8] sm:$0xff]
        %v1115 = vld [vmem:[%s214 + $0xad0] sm:$0xff]
        %v1116 = vld [vmem:[%s214 + $0xad8] sm:$0xff]
        %v1117 = vld [vmem:[%s214 + $0xae0] sm:$0xff]
        %v1118 = vld [vmem:[%s214 + $0xae8] sm:$0xff]
        %v1119 = vld [vmem:[%s214 + $0xaf0] sm:$0xff]
        %v1120 = vld [vmem:[%s214 + $0xaf8] sm:$0xff]
        %v1121 = vld [vmem:[%s214 + $0xb00] sm:$0xff]
        %v1122 = vld [vmem:[%s214 + $0xb08] sm:$0xff]
        %v1123 = vld [vmem:[%s214 + $0xb10] sm:$0xff]
        %v1124 = vld [vmem:[%s214 + $0xb18] sm:$0xff]
        %v1125 = vld [vmem:[%s214 + $0xb20] sm:$0xff]
        %v1126 = vld [vmem:[%s214 + $0xb28] sm:$0xff]
        %v1127 = vld [vmem:[%s214 + $0xb30] sm:$0xff]
        %v1128 = vld [vmem:[%s214 + $0xb38] sm:$0xff]
        %v1129 = vld [vmem:[%s214 + $0xb40] sm:$0xff]
        %v1130 = vld [vmem:[%s214 + $0xb48] sm:$0xff]
        %v1131 = vld [vmem:[%s214 + $0xb50] sm:$0xff]
        %v1132 = vld [vmem:[%s214 + $0xb58] sm:$0xff]
        %v1133 = vld [vmem:[%s214 + $0xb60] sm:$0xff]
        %v1134 = vld [vmem:[%s214 + $0xb68] sm:$0xff]
        %v1135 = vld [vmem:[%s214 + $0xb70] sm:$0xff]
        %v1136 = vld [vmem:[%s214 + $0xb78] sm:$0xff]
        %v1137 = vld [vmem:[%s214 + $0xb80] sm:$0xff]
        %v1138 = vld [vmem:[%s214 + $0xb88] sm:$0xff]
        %v1139 = vld [vmem:[%s214 + $0xb90] sm:$0xff]
        %v1140 = vld [vmem:[%s214 + $0xb98] sm:$0xff]
        %v1141 = vld [vmem:[%s214 + $0xba0] sm:$0xff]
        %v1142 = vld [vmem:[%s214 + $0xba8] sm:$0xff]
        %v1143 = vld [vmem:[%s214 + $0xbb0] sm:$0xff]
        %v1144 = vld [vmem:[%s214 + $0xbb8] sm:$0xff]
        %v1145 = vld [vmem:[%s214 + $0xbc0] sm:$0xff]
        %v1146 = vld [vmem:[%s214 + $0xbc8] sm:$0xff]
        %v1147 = vld [vmem:[%s214 + $0xbd0] sm:$0xff]
        %v1148 = vld [vmem:[%s214 + $0xbd8] sm:$0xff]
        %v1149 = vld [vmem:[%s214 + $0xbe0] sm:$0xff]
        %v1150 = vld [vmem:[%s214 + $0xbe8] sm:$0xff]
        %v1151 = vld [vmem:[%s214 + $0xbf0] sm:$0xff]
        %v1152 = vld [vmem:[%s214 + $0xbf8] sm:$0xff]
        %v1153 = vld [vmem:[%s214 + $0xc00] sm:$0xff]
        %v1154 = vld [vmem:[%s214 + $0xc08] sm:$0xff]
        %v1155 = vld [vmem:[%s214 + $0xc10] sm:$0xff]
        %v1156 = vld [vmem:[%s214 + $0xc18] sm:$0xff]
        %v1157 = vld [vmem:[%s214 + $0xc20] sm:$0xff]
        %v1158 = vld [vmem:[%s214 + $0xc28] sm:$0xff]
        %v1159 = vld [vmem:[%s214 + $0xc30] sm:$0xff]
        %v1160 = vld [vmem:[%s214 + $0xc38] sm:$0xff]
        %v1161 = vld [vmem:[%s214 + $0xc40] sm:$0xff]
        %v1162 = vld [vmem:[%s214 + $0xc48] sm:$0xff]
        %v1163 = vld [vmem:[%s214 + $0xc50] sm:$0xff]
        %v1164 = vld [vmem:[%s214 + $0xc58] sm:$0xff]
        %v1165 = vld [vmem:[%s214 + $0xc60] sm:$0xff]
        %v1166 = vld [vmem:[%s214 + $0xc68] sm:$0xff]
        %v1167 = vld [vmem:[%s214 + $0xc70] sm:$0xff]
        %v1168 = vld [vmem:[%s214 + $0xc78] sm:$0xff]
        %v1169 = vld [vmem:[%s214 + $0xc80] sm:$0xff]
        %v1170 = vld [vmem:[%s214 + $0xc88] sm:$0xff]
        %v1171 = vld [vmem:[%s214 + $0xc90] sm:$0xff]
        %v1172 = vld [vmem:[%s214 + $0xc98] sm:$0xff]
        %v1173 = vld [vmem:[%s214 + $0xca0] sm:$0xff]
        %v1174 = vld [vmem:[%s214 + $0xca8] sm:$0xff]
        %v1175 = vld [vmem:[%s214 + $0xcb0] sm:$0xff]
        %v1176 = vld [vmem:[%s214 + $0xcb8] sm:$0xff]
        %v1177 = vld [vmem:[%s214 + $0xcc0] sm:$0xff]
        %v1178 = vld [vmem:[%s214 + $0xcc8] sm:$0xff]
        %v1179 = vld [vmem:[%s214 + $0xcd0] sm:$0xff]
        %v1180 = vld [vmem:[%s214 + $0xcd8] sm:$0xff]
        %v1181 = vld [vmem:[%s214 + $0xce0] sm:$0xff]
        %v1182 = vld [vmem:[%s214 + $0xce8] sm:$0xff]
        %v1183 = vld [vmem:[%s214 + $0xcf0] sm:$0xff]
        %v1184 = vld [vmem:[%s214 + $0xcf8] sm:$0xff]
        %v1185 = vld [vmem:[%s214 + $0xd00] sm:$0xff]
        %v1186 = vld [vmem:[%s214 + $0xd08] sm:$0xff]
        %v1187 = vld [vmem:[%s214 + $0xd10] sm:$0xff]
        %v1188 = vld [vmem:[%s214 + $0xd18] sm:$0xff]
        %v1189 = vld [vmem:[%s214 + $0xd20] sm:$0xff]
        %v1190 = vld [vmem:[%s214 + $0xd28] sm:$0xff]
        %v1191 = vld [vmem:[%s214 + $0xd30] sm:$0xff]
        %v1192 = vld [vmem:[%s214 + $0xd38] sm:$0xff]
        %v1193 = vld [vmem:[%s214 + $0xd40] sm:$0xff]
        %v1194 = vld [vmem:[%s214 + $0xd48] sm:$0xff]
        %v1195 = vld [vmem:[%s214 + $0xd50] sm:$0xff]
        %v1196 = vld [vmem:[%s214 + $0xd58] sm:$0xff]
        %v1197 = vld [vmem:[%s214 + $0xd60] sm:$0xff]
        %v1198 = vld [vmem:[%s214 + $0xd68] sm:$0xff]
        %v1199 = vld [vmem:[%s214 + $0xd70] sm:$0xff]
        %v1200 = vld [vmem:[%s214 + $0xd78] sm:$0xff]
        %v1201 = vld [vmem:[%s214 + $0xd80] sm:$0xff]
        %v1202 = vld [vmem:[%s214 + $0xd88] sm:$0xff]
        %v1203 = vld [vmem:[%s214 + $0xd90] sm:$0xff]
        %v1204 = vld [vmem:[%s214 + $0xd98] sm:$0xff]
        %v1205 = vld [vmem:[%s214 + $0xda0] sm:$0xff]
        %v1206 = vld [vmem:[%s214 + $0xda8] sm:$0xff]
        %v1207 = vld [vmem:[%s214 + $0xdb0] sm:$0xff]
        %v1208 = vld [vmem:[%s214 + $0xdb8] sm:$0xff]
        %v1209 = vld [vmem:[%s214 + $0xdc0] sm:$0xff]
        %v1210 = vld [vmem:[%s214 + $0xdc8] sm:$0xff]
        %v1211 = vld [vmem:[%s214 + $0xdd0] sm:$0xff]
        %v1212 = vld [vmem:[%s214 + $0xdd8] sm:$0xff]
        %v1213 = vld [vmem:[%s214 + $0xde0] sm:$0xff]
        %v1214 = vld [vmem:[%s214 + $0xde8] sm:$0xff]
        %v1215 = vld [vmem:[%s214 + $0xdf0] sm:$0xff]
        %v1216 = vld [vmem:[%s214 + $0xdf8] sm:$0xff]
        %v1217 = vld [vmem:[%s214 + $0xe00] sm:$0xff]
        %v1218 = vld [vmem:[%s214 + $0xe08] sm:$0xff]
        %v1219 = vld [vmem:[%s214 + $0xe10] sm:$0xff]
        %v1220 = vld [vmem:[%s214 + $0xe18] sm:$0xff]
        %v1221 = vld [vmem:[%s214 + $0xe20] sm:$0xff]
        %v1222 = vld [vmem:[%s214 + $0xe28] sm:$0xff]
        %v1223 = vld [vmem:[%s214 + $0xe30] sm:$0xff]
        %v1224 = vld [vmem:[%s214 + $0xe38] sm:$0xff]
        %v1225 = vld [vmem:[%s214 + $0xe40] sm:$0xff]
        %v1226 = vld [vmem:[%s214 + $0xe48] sm:$0xff]
        %v1227 = vld [vmem:[%s214 + $0xe50] sm:$0xff]
        %v1228 = vld [vmem:[%s214 + $0xe58] sm:$0xff]
        %v1229 = vld [vmem:[%s214 + $0xe60] sm:$0xff]
        %v1230 = vld [vmem:[%s214 + $0xe68] sm:$0xff]
        %v1231 = vld [vmem:[%s214 + $0xe70] sm:$0xff]
        %v1232 = vld [vmem:[%s214 + $0xe78] sm:$0xff]
        %v1233 = vld [vmem:[%s214 + $0xe80] sm:$0xff]
        %v1234 = vld [vmem:[%s214 + $0xe88] sm:$0xff]
        %v1235 = vld [vmem:[%s214 + $0xe90] sm:$0xff]
        %v1236 = vld [vmem:[%s214 + $0xe98] sm:$0xff]
        %v1237 = vld [vmem:[%s214 + $0xea0] sm:$0xff]
        %v1238 = vld [vmem:[%s214 + $0xea8] sm:$0xff]
        %v1239 = vld [vmem:[%s214 + $0xeb0] sm:$0xff]
        %v1240 = vld [vmem:[%s214 + $0xeb8] sm:$0xff]
        %v1241 = vld [vmem:[%s214 + $0xec0] sm:$0xff]
        %v1242 = vld [vmem:[%s214 + $0xec8] sm:$0xff]
        %v1243 = vld [vmem:[%s214 + $0xed0] sm:$0xff]
        %v1244 = vld [vmem:[%s214 + $0xed8] sm:$0xff]
        %v1245 = vld [vmem:[%s214 + $0xee0] sm:$0xff]
        %v1246 = vld [vmem:[%s214 + $0xee8] sm:$0xff]
        %v1247 = vld [vmem:[%s214 + $0xef0] sm:$0xff]
        %v1248 = vld [vmem:[%s214 + $0xef8] sm:$0xff]
        %v1249 = vld [vmem:[%s214 + $0xf00] sm:$0xff]
        %v1250 = vld [vmem:[%s214 + $0xf08] sm:$0xff]
        %v1251 = vld [vmem:[%s214 + $0xf10] sm:$0xff]
        %v1252 = vld [vmem:[%s214 + $0xf18] sm:$0xff]
        %v1253 = vld [vmem:[%s214 + $0xf20] sm:$0xff]
        %v1254 = vld [vmem:[%s214 + $0xf28] sm:$0xff]
        %v1255 = vld [vmem:[%s214 + $0xf30] sm:$0xff]
        %v1256 = vld [vmem:[%s214 + $0xf38] sm:$0xff]
        %v1257 = vld [vmem:[%s214 + $0xf40] sm:$0xff]
        %v1258 = vld [vmem:[%s214 + $0xf48] sm:$0xff]
        %v1259 = vld [vmem:[%s214 + $0xf50] sm:$0xff]
        %v1260 = vld [vmem:[%s214 + $0xf58] sm:$0xff]
        %v1261 = vld [vmem:[%s214 + $0xf60] sm:$0xff]
        %v1262 = vld [vmem:[%s214 + $0xf68] sm:$0xff]
        %v1263 = vld [vmem:[%s214 + $0xf70] sm:$0xff]
        %v1264 = vld [vmem:[%s214 + $0xf78] sm:$0xff]
        %v1265 = vld [vmem:[%s214 + $0xf80] sm:$0xff]
        %v1266 = vld [vmem:[%s214 + $0xf88] sm:$0xff]
        %v1267 = vld [vmem:[%s214 + $0xf90] sm:$0xff]
        %v1268 = vld [vmem:[%s214 + $0xf98] sm:$0xff]
        %v1269 = vld [vmem:[%s214 + $0xfa0] sm:$0xff]
        %v1270 = vld [vmem:[%s214 + $0xfa8] sm:$0xff]
        %v1271 = vld [vmem:[%s214 + $0xfb0] sm:$0xff]
        %v1272 = vld [vmem:[%s214 + $0xfb8] sm:$0xff]
        %v1273 = vld [vmem:[%s214 + $0xfc0] sm:$0xff]
        %v1274 = vld [vmem:[%s214 + $0xfc8] sm:$0xff]
        %v1275 = vld [vmem:[%s214 + $0xfd0] sm:$0xff]
        %v1276 = vld [vmem:[%s214 + $0xfd8] sm:$0xff]
        %v1277 = vld [vmem:[%s214 + $0xfe0] sm:$0xff]
        %v1278 = vld [vmem:[%s214 + $0xfe8] sm:$0xff]
        %v1279 = vld [vmem:[%s214 + $0xff0] sm:$0xff]
        %v1280 = vld [vmem:[%s214 + $0xff8] sm:$0xff]
        %v1281 = vsub.f32 %v257, %v769
        %v1282 = vsub.f32 %v258, %v770
        %v1283 = vsub.f32 %v259, %v771
        %v1284 = vsub.f32 %v260, %v772
        %v1285 = vsub.f32 %v261, %v773
        %v1286 = vsub.f32 %v262, %v774
        %v1287 = vsub.f32 %v263, %v775
        %v1288 = vsub.f32 %v264, %v776
        %v1289 = vsub.f32 %v265, %v777
        %v1290 = vsub.f32 %v266, %v778
        %v1291 = vsub.f32 %v267, %v779
        %v1292 = vsub.f32 %v268, %v780
        %v1293 = vsub.f32 %v269, %v781
        %v1294 = vsub.f32 %v270, %v782
        %v1295 = vsub.f32 %v271, %v783
        %v1296 = vsub.f32 %v272, %v784
        %v1297 = vsub.f32 %v273, %v785
        %v1298 = vsub.f32 %v274, %v786
        %v1299 = vsub.f32 %v275, %v787
        %v1300 = vsub.f32 %v276, %v788
        %v1301 = vsub.f32 %v277, %v789
        %v1302 = vsub.f32 %v278, %v790
        %v1303 = vsub.f32 %v279, %v791
        %v1304 = vsub.f32 %v280, %v792
        %v1305 = vsub.f32 %v281, %v793
        %v1306 = vsub.f32 %v282, %v794
        %v1307 = vsub.f32 %v283, %v795
        %v1308 = vsub.f32 %v284, %v796
        %v1309 = vsub.f32 %v285, %v797
        %v1310 = vsub.f32 %v286, %v798
        %v1311 = vsub.f32 %v287, %v799
        %v1312 = vsub.f32 %v288, %v800
        %v1313 = vsub.f32 %v289, %v801
        %v1314 = vsub.f32 %v290, %v802
        %v1315 = vsub.f32 %v291, %v803
        %v1316 = vsub.f32 %v292, %v804
        %v1317 = vsub.f32 %v293, %v805
        %v1318 = vsub.f32 %v294, %v806
        %v1319 = vsub.f32 %v295, %v807
        %v1320 = vsub.f32 %v296, %v808
        %v1321 = vsub.f32 %v297, %v809
        %v1322 = vsub.f32 %v298, %v810
        %v1323 = vsub.f32 %v299, %v811
        %v1324 = vsub.f32 %v300, %v812
        %v1325 = vsub.f32 %v301, %v813
        %v1326 = vsub.f32 %v302, %v814
        %v1327 = vsub.f32 %v303, %v815
        %v1328 = vsub.f32 %v304, %v816
        %v1329 = vsub.f32 %v305, %v817
        %v1330 = vsub.f32 %v306, %v818
        %v1331 = vsub.f32 %v307, %v819
        %v1332 = vsub.f32 %v308, %v820
        %v1333 = vsub.f32 %v309, %v821
        %v1334 = vsub.f32 %v310, %v822
        %v1335 = vsub.f32 %v311, %v823
        %v1336 = vsub.f32 %v312, %v824
        %v1337 = vsub.f32 %v313, %v825
        %v1338 = vsub.f32 %v314, %v826
        %v1339 = vsub.f32 %v315, %v827
        %v1340 = vsub.f32 %v316, %v828
        %v1341 = vsub.f32 %v317, %v829
        %v1342 = vsub.f32 %v318, %v830
        %v1343 = vsub.f32 %v319, %v831
        %v1344 = vsub.f32 %v320, %v832
        %v1345 = vsub.f32 %v321, %v833
        %v1346 = vsub.f32 %v322, %v834
        %v1347 = vsub.f32 %v323, %v835
        %v1348 = vsub.f32 %v324, %v836
        %v1349 = vsub.f32 %v325, %v837
        %v1350 = vsub.f32 %v326, %v838
        %v1351 = vsub.f32 %v327, %v839
        %v1352 = vsub.f32 %v328, %v840
        %v1353 = vsub.f32 %v329, %v841
        %v1354 = vsub.f32 %v330, %v842
        %v1355 = vsub.f32 %v331, %v843
        %v1356 = vsub.f32 %v332, %v844
        %v1357 = vsub.f32 %v333, %v845
        %v1358 = vsub.f32 %v334, %v846
        %v1359 = vsub.f32 %v335, %v847
        %v1360 = vsub.f32 %v336, %v848
        %v1361 = vsub.f32 %v337, %v849
        %v1362 = vsub.f32 %v338, %v850
        %v1363 = vsub.f32 %v339, %v851
        %v1364 = vsub.f32 %v340, %v852
        %v1365 = vsub.f32 %v341, %v853
        %v1366 = vsub.f32 %v342, %v854
        %v1367 = vsub.f32 %v343, %v855
        %v1368 = vsub.f32 %v344, %v856
        %v1369 = vsub.f32 %v345, %v857
        %v1370 = vsub.f32 %v346, %v858
        %v1371 = vsub.f32 %v347, %v859
        %v1372 = vsub.f32 %v348, %v860
        %v1373 = vsub.f32 %v349, %v861
        %v1374 = vsub.f32 %v350, %v862
        %v1375 = vsub.f32 %v351, %v863
        %v1376 = vsub.f32 %v352, %v864
        %v1377 = vsub.f32 %v353, %v865
        %v1378 = vsub.f32 %v354, %v866
        %v1379 = vsub.f32 %v355, %v867
        %v1380 = vsub.f32 %v356, %v868
        %v1381 = vsub.f32 %v357, %v869
        %v1382 = vsub.f32 %v358, %v870
        %v1383 = vsub.f32 %v359, %v871
        %v1384 = vsub.f32 %v360, %v872
        %v1385 = vsub.f32 %v361, %v873
        %v1386 = vsub.f32 %v362, %v874
        %v1387 = vsub.f32 %v363, %v875
        %v1388 = vsub.f32 %v364, %v876
        %v1389 = vsub.f32 %v365, %v877
        %v1390 = vsub.f32 %v366, %v878
        %v1391 = vsub.f32 %v367, %v879
        %v1392 = vsub.f32 %v368, %v880
        %v1393 = vsub.f32 %v369, %v881
        %v1394 = vsub.f32 %v370, %v882
        %v1395 = vsub.f32 %v371, %v883
        %v1396 = vsub.f32 %v372, %v884
        %v1397 = vsub.f32 %v373, %v885
        %v1398 = vsub.f32 %v374, %v886
        %v1399 = vsub.f32 %v375, %v887
        %v1400 = vsub.f32 %v376, %v888
        %v1401 = vsub.f32 %v377, %v889
        %v1402 = vsub.f32 %v378, %v890
        %v1403 = vsub.f32 %v379, %v891
        %v1404 = vsub.f32 %v380, %v892
        %v1405 = vsub.f32 %v381, %v893
        %v1406 = vsub.f32 %v382, %v894
        %v1407 = vsub.f32 %v383, %v895
        %v1408 = vsub.f32 %v384, %v896
        %v1409 = vsub.f32 %v385, %v897
        %v1410 = vsub.f32 %v386, %v898
        %v1411 = vsub.f32 %v387, %v899
        %v1412 = vsub.f32 %v388, %v900
        %v1413 = vsub.f32 %v389, %v901
        %v1414 = vsub.f32 %v390, %v902
        %v1415 = vsub.f32 %v391, %v903
        %v1416 = vsub.f32 %v392, %v904
        %v1417 = vsub.f32 %v393, %v905
        %v1418 = vsub.f32 %v394, %v906
        %v1419 = vsub.f32 %v395, %v907
        %v1420 = vsub.f32 %v396, %v908
        %v1421 = vsub.f32 %v397, %v909
        %v1422 = vsub.f32 %v398, %v910
        %v1423 = vsub.f32 %v399, %v911
        %v1424 = vsub.f32 %v400, %v912
        %v1425 = vsub.f32 %v401, %v913
        %v1426 = vsub.f32 %v402, %v914
        %v1427 = vsub.f32 %v403, %v915
        %v1428 = vsub.f32 %v404, %v916
        %v1429 = vsub.f32 %v405, %v917
        %v1430 = vsub.f32 %v406, %v918
        %v1431 = vsub.f32 %v407, %v919
        %v1432 = vsub.f32 %v408, %v920
        %v1433 = vsub.f32 %v409, %v921
        %v1434 = vsub.f32 %v410, %v922
        %v1435 = vsub.f32 %v411, %v923
        %v1436 = vsub.f32 %v412, %v924
        %v1437 = vsub.f32 %v413, %v925
        %v1438 = vsub.f32 %v414, %v926
        %v1439 = vsub.f32 %v415, %v927
        %v1440 = vsub.f32 %v416, %v928
        %v1441 = vsub.f32 %v417, %v929
        %v1442 = vsub.f32 %v418, %v930
        %v1443 = vsub.f32 %v419, %v931
        %v1444 = vsub.f32 %v420, %v932
        %v1445 = vsub.f32 %v421, %v933
        %v1446 = vsub.f32 %v422, %v934
        %v1447 = vsub.f32 %v423, %v935
        %v1448 = vsub.f32 %v424, %v936
        %v1449 = vsub.f32 %v425, %v937
        %v1450 = vsub.f32 %v426, %v938
        %v1451 = vsub.f32 %v427, %v939
        %v1452 = vsub.f32 %v428, %v940
        %v1453 = vsub.f32 %v429, %v941
        %v1454 = vsub.f32 %v430, %v942
        %v1455 = vsub.f32 %v431, %v943
        %v1456 = vsub.f32 %v432, %v944
        %v1457 = vsub.f32 %v433, %v945
        %v1458 = vsub.f32 %v434, %v946
        %v1459 = vsub.f32 %v435, %v947
        %v1460 = vsub.f32 %v436, %v948
        %v1461 = vsub.f32 %v437, %v949
        %v1462 = vsub.f32 %v438, %v950
        %v1463 = vsub.f32 %v439, %v951
        %v1464 = vsub.f32 %v440, %v952
        %v1465 = vsub.f32 %v441, %v953
        %v1466 = vsub.f32 %v442, %v954
        %v1467 = vsub.f32 %v443, %v955
        %v1468 = vsub.f32 %v444, %v956
        %v1469 = vsub.f32 %v445, %v957
        %v1470 = vsub.f32 %v446, %v958
        %v1471 = vsub.f32 %v447, %v959
        %v1472 = vsub.f32 %v448, %v960
        %v1473 = vsub.f32 %v449, %v961
        %v1474 = vsub.f32 %v450, %v962
        %v1475 = vsub.f32 %v451, %v963
        %v1476 = vsub.f32 %v452, %v964
        %v1477 = vsub.f32 %v453, %v965
        %v1478 = vsub.f32 %v454, %v966
        %v1479 = vsub.f32 %v455, %v967
        %v1480 = vsub.f32 %v456, %v968
        %v1481 = vsub.f32 %v457, %v969
        %v1482 = vsub.f32 %v458, %v970
        %v1483 = vsub.f32 %v459, %v971
        %v1484 = vsub.f32 %v460, %v972
        %v1485 = vsub.f32 %v461, %v973
        %v1486 = vsub.f32 %v462, %v974
        %v1487 = vsub.f32 %v463, %v975
        %v1488 = vsub.f32 %v464, %v976
        %v1489 = vsub.f32 %v465, %v977
        %v1490 = vsub.f32 %v466, %v978
        %v1491 = vsub.f32 %v467, %v979
        %v1492 = vsub.f32 %v468, %v980
        %v1493 = vsub.f32 %v469, %v981
        %v1494 = vsub.f32 %v470, %v982
        %v1495 = vsub.f32 %v471, %v983
        %v1496 = vsub.f32 %v472, %v984
        %v1497 = vsub.f32 %v473, %v985
        %v1498 = vsub.f32 %v474, %v986
        %v1499 = vsub.f32 %v475, %v987
        %v1500 = vsub.f32 %v476, %v988
        %v1501 = vsub.f32 %v477, %v989
        %v1502 = vsub.f32 %v478, %v990
        %v1503 = vsub.f32 %v479, %v991
        %v1504 = vsub.f32 %v480, %v992
        %v1505 = vsub.f32 %v481, %v993
        %v1506 = vsub.f32 %v482, %v994
        %v1507 = vsub.f32 %v483, %v995
        %v1508 = vsub.f32 %v484, %v996
        %v1509 = vsub.f32 %v485, %v997
        %v1510 = vsub.f32 %v486, %v998
        %v1511 = vsub.f32 %v487, %v999
        %v1512 = vsub.f32 %v488, %v1000
        %v1513 = vsub.f32 %v489, %v1001
        %v1514 = vsub.f32 %v490, %v1002
        %v1515 = vsub.f32 %v491, %v1003
        %v1516 = vsub.f32 %v492, %v1004
        %v1517 = vsub.f32 %v493, %v1005
        %v1518 = vsub.f32 %v494, %v1006
        %v1519 = vsub.f32 %v495, %v1007
        %v1520 = vsub.f32 %v496, %v1008
        %v1521 = vsub.f32 %v497, %v1009
        %v1522 = vsub.f32 %v498, %v1010
        %v1523 = vsub.f32 %v499, %v1011
        %v1524 = vsub.f32 %v500, %v1012
        %v1525 = vsub.f32 %v501, %v1013
        %v1526 = vsub.f32 %v502, %v1014
        %v1527 = vsub.f32 %v503, %v1015
        %v1528 = vsub.f32 %v504, %v1016
        %v1529 = vsub.f32 %v505, %v1017
        %v1530 = vsub.f32 %v506, %v1018
        %v1531 = vsub.f32 %v507, %v1019
        %v1532 = vsub.f32 %v508, %v1020
        %v1533 = vsub.f32 %v509, %v1021
        %v1534 = vsub.f32 %v510, %v1022
        %v1535 = vsub.f32 %v511, %v1023
        %v1536 = vsub.f32 %v512, %v1024
        %v1537 = vsub.f32 %v513, %v1025
        %v1538 = vsub.f32 %v514, %v1026
        %v1539 = vsub.f32 %v515, %v1027
        %v1540 = vsub.f32 %v516, %v1028
        %v1541 = vsub.f32 %v517, %v1029
        %v1542 = vsub.f32 %v518, %v1030
        %v1543 = vsub.f32 %v519, %v1031
        %v1544 = vsub.f32 %v520, %v1032
        %v1545 = vsub.f32 %v521, %v1033
        %v1546 = vsub.f32 %v522, %v1034
        %v1547 = vsub.f32 %v523, %v1035
        %v1548 = vsub.f32 %v524, %v1036
        %v1549 = vsub.f32 %v525, %v1037
        %v1550 = vsub.f32 %v526, %v1038
        %v1551 = vsub.f32 %v527, %v1039
        %v1552 = vsub.f32 %v528, %v1040
        %v1553 = vsub.f32 %v529, %v1041
        %v1554 = vsub.f32 %v530, %v1042
        %v1555 = vsub.f32 %v531, %v1043
        %v1556 = vsub.f32 %v532, %v1044
        %v1557 = vsub.f32 %v533, %v1045
        %v1558 = vsub.f32 %v534, %v1046
        %v1559 = vsub.f32 %v535, %v1047
        %v1560 = vsub.f32 %v536, %v1048
        %v1561 = vsub.f32 %v537, %v1049
        %v1562 = vsub.f32 %v538, %v1050
        %v1563 = vsub.f32 %v539, %v1051
        %v1564 = vsub.f32 %v540, %v1052
        %v1565 = vsub.f32 %v541, %v1053
        %v1566 = vsub.f32 %v542, %v1054
        %v1567 = vsub.f32 %v543, %v1055
        %v1568 = vsub.f32 %v544, %v1056
        %v1569 = vsub.f32 %v545, %v1057
        %v1570 = vsub.f32 %v546, %v1058
        %v1571 = vsub.f32 %v547, %v1059
        %v1572 = vsub.f32 %v548, %v1060
        %v1573 = vsub.f32 %v549, %v1061
        %v1574 = vsub.f32 %v550, %v1062
        %v1575 = vsub.f32 %v551, %v1063
        %v1576 = vsub.f32 %v552, %v1064
        %v1577 = vsub.f32 %v553, %v1065
        %v1578 = vsub.f32 %v554, %v1066
        %v1579 = vsub.f32 %v555, %v1067
        %v1580 = vsub.f32 %v556, %v1068
        %v1581 = vsub.f32 %v557, %v1069
        %v1582 = vsub.f32 %v558, %v1070
        %v1583 = vsub.f32 %v559, %v1071
        %v1584 = vsub.f32 %v560, %v1072
        %v1585 = vsub.f32 %v561, %v1073
        %v1586 = vsub.f32 %v562, %v1074
        %v1587 = vsub.f32 %v563, %v1075
        %v1588 = vsub.f32 %v564, %v1076
        %v1589 = vsub.f32 %v565, %v1077
        %v1590 = vsub.f32 %v566, %v1078
        %v1591 = vsub.f32 %v567, %v1079
        %v1592 = vsub.f32 %v568, %v1080
        %v1593 = vsub.f32 %v569, %v1081
        %v1594 = vsub.f32 %v570, %v1082
        %v1595 = vsub.f32 %v571, %v1083
        %v1596 = vsub.f32 %v572, %v1084
        %v1597 = vsub.f32 %v573, %v1085
        %v1598 = vsub.f32 %v574, %v1086
        %v1599 = vsub.f32 %v575, %v1087
        %v1600 = vsub.f32 %v576, %v1088
        %v1601 = vsub.f32 %v577, %v1089
        %v1602 = vsub.f32 %v578, %v1090
        %v1603 = vsub.f32 %v579, %v1091
        %v1604 = vsub.f32 %v580, %v1092
        %v1605 = vsub.f32 %v581, %v1093
        %v1606 = vsub.f32 %v582, %v1094
        %v1607 = vsub.f32 %v583, %v1095
        %v1608 = vsub.f32 %v584, %v1096
        %v1609 = vsub.f32 %v585, %v1097
        %v1610 = vsub.f32 %v586, %v1098
        %v1611 = vsub.f32 %v587, %v1099
        %v1612 = vsub.f32 %v588, %v1100
        %v1613 = vsub.f32 %v589, %v1101
        %v1614 = vsub.f32 %v590, %v1102
        %v1615 = vsub.f32 %v591, %v1103
        %v1616 = vsub.f32 %v592, %v1104
        %v1617 = vsub.f32 %v593, %v1105
        %v1618 = vsub.f32 %v594, %v1106
        %v1619 = vsub.f32 %v595, %v1107
        %v1620 = vsub.f32 %v596, %v1108
        %v1621 = vsub.f32 %v597, %v1109
        %v1622 = vsub.f32 %v598, %v1110
        %v1623 = vsub.f32 %v599, %v1111
        %v1624 = vsub.f32 %v600, %v1112
        %v1625 = vsub.f32 %v601, %v1113
        %v1626 = vsub.f32 %v602, %v1114
        %v1627 = vsub.f32 %v603, %v1115
        %v1628 = vsub.f32 %v604, %v1116
        %v1629 = vsub.f32 %v605, %v1117
        %v1630 = vsub.f32 %v606, %v1118
        %v1631 = vsub.f32 %v607, %v1119
        %v1632 = vsub.f32 %v608, %v1120
        %v1633 = vsub.f32 %v609, %v1121
        %v1634 = vsub.f32 %v610, %v1122
        %v1635 = vsub.f32 %v611, %v1123
        %v1636 = vsub.f32 %v612, %v1124
        %v1637 = vsub.f32 %v613, %v1125
        %v1638 = vsub.f32 %v614, %v1126
        %v1639 = vsub.f32 %v615, %v1127
        %v1640 = vsub.f32 %v616, %v1128
        %v1641 = vsub.f32 %v617, %v1129
        %v1642 = vsub.f32 %v618, %v1130
        %v1643 = vsub.f32 %v619, %v1131
        %v1644 = vsub.f32 %v620, %v1132
        %v1645 = vsub.f32 %v621, %v1133
        %v1646 = vsub.f32 %v622, %v1134
        %v1647 = vsub.f32 %v623, %v1135
        %v1648 = vsub.f32 %v624, %v1136
        %v1649 = vsub.f32 %v625, %v1137
        %v1650 = vsub.f32 %v626, %v1138
        %v1651 = vsub.f32 %v627, %v1139
        %v1652 = vsub.f32 %v628, %v1140
        %v1653 = vsub.f32 %v629, %v1141
        %v1654 = vsub.f32 %v630, %v1142
        %v1655 = vsub.f32 %v631, %v1143
        %v1656 = vsub.f32 %v632, %v1144
        %v1657 = vsub.f32 %v633, %v1145
        %v1658 = vsub.f32 %v634, %v1146
        %v1659 = vsub.f32 %v635, %v1147
        %v1660 = vsub.f32 %v636, %v1148
        %v1661 = vsub.f32 %v637, %v1149
        %v1662 = vsub.f32 %v638, %v1150
        %v1663 = vsub.f32 %v639, %v1151
        %v1664 = vsub.f32 %v640, %v1152
        %v1665 = vsub.f32 %v641, %v1153
        %v1666 = vsub.f32 %v642, %v1154
        %v1667 = vsub.f32 %v643, %v1155
        %v1668 = vsub.f32 %v644, %v1156
        %v1669 = vsub.f32 %v645, %v1157
        %v1670 = vsub.f32 %v646, %v1158
        %v1671 = vsub.f32 %v647, %v1159
        %v1672 = vsub.f32 %v648, %v1160
        %v1673 = vsub.f32 %v649, %v1161
        %v1674 = vsub.f32 %v650, %v1162
        %v1675 = vsub.f32 %v651, %v1163
        %v1676 = vsub.f32 %v652, %v1164
        %v1677 = vsub.f32 %v653, %v1165
        %v1678 = vsub.f32 %v654, %v1166
        %v1679 = vsub.f32 %v655, %v1167
        %v1680 = vsub.f32 %v656, %v1168
        %v1681 = vsub.f32 %v657, %v1169
        %v1682 = vsub.f32 %v658, %v1170
        %v1683 = vsub.f32 %v659, %v1171
        %v1684 = vsub.f32 %v660, %v1172
        %v1685 = vsub.f32 %v661, %v1173
        %v1686 = vsub.f32 %v662, %v1174
        %v1687 = vsub.f32 %v663, %v1175
        %v1688 = vsub.f32 %v664, %v1176
        %v1689 = vsub.f32 %v665, %v1177
        %v1690 = vsub.f32 %v666, %v1178
        %v1691 = vsub.f32 %v667, %v1179
        %v1692 = vsub.f32 %v668, %v1180
        %v1693 = vsub.f32 %v669, %v1181
        %v1694 = vsub.f32 %v670, %v1182
        %v1695 = vsub.f32 %v671, %v1183
        %v1696 = vsub.f32 %v672, %v1184
        %v1697 = vsub.f32 %v673, %v1185
        %v1698 = vsub.f32 %v674, %v1186
        %v1699 = vsub.f32 %v675, %v1187
        %v1700 = vsub.f32 %v676, %v1188
        %v1701 = vsub.f32 %v677, %v1189
        %v1702 = vsub.f32 %v678, %v1190
        %v1703 = vsub.f32 %v679, %v1191
        %v1704 = vsub.f32 %v680, %v1192
        %v1705 = vsub.f32 %v681, %v1193
        %v1706 = vsub.f32 %v682, %v1194
        %v1707 = vsub.f32 %v683, %v1195
        %v1708 = vsub.f32 %v684, %v1196
        %v1709 = vsub.f32 %v685, %v1197
        %v1710 = vsub.f32 %v686, %v1198
        %v1711 = vsub.f32 %v687, %v1199
        %v1712 = vsub.f32 %v688, %v1200
        %v1713 = vsub.f32 %v689, %v1201
        %v1714 = vsub.f32 %v690, %v1202
        %v1715 = vsub.f32 %v691, %v1203
        %v1716 = vsub.f32 %v692, %v1204
        %v1717 = vsub.f32 %v693, %v1205
        %v1718 = vsub.f32 %v694, %v1206
        %v1719 = vsub.f32 %v695, %v1207
        %v1720 = vsub.f32 %v696, %v1208
        %v1721 = vsub.f32 %v697, %v1209
        %v1722 = vsub.f32 %v698, %v1210
        %v1723 = vsub.f32 %v699, %v1211
        %v1724 = vsub.f32 %v700, %v1212
        %v1725 = vsub.f32 %v701, %v1213
        %v1726 = vsub.f32 %v702, %v1214
        %v1727 = vsub.f32 %v703, %v1215
        %v1728 = vsub.f32 %v704, %v1216
        %v1729 = vsub.f32 %v705, %v1217
        %v1730 = vsub.f32 %v706, %v1218
        %v1731 = vsub.f32 %v707, %v1219
        %v1732 = vsub.f32 %v708, %v1220
        %v1733 = vsub.f32 %v709, %v1221
        %v1734 = vsub.f32 %v710, %v1222
        %v1735 = vsub.f32 %v711, %v1223
        %v1736 = vsub.f32 %v712, %v1224
        %v1737 = vsub.f32 %v713, %v1225
        %v1738 = vsub.f32 %v714, %v1226
        %v1739 = vsub.f32 %v715, %v1227
        %v1740 = vsub.f32 %v716, %v1228
        %v1741 = vsub.f32 %v717, %v1229
        %v1742 = vsub.f32 %v718, %v1230
        %v1743 = vsub.f32 %v719, %v1231
        %v1744 = vsub.f32 %v720, %v1232
        %v1745 = vsub.f32 %v721, %v1233
        %v1746 = vsub.f32 %v722, %v1234
        %v1747 = vsub.f32 %v723, %v1235
        %v1748 = vsub.f32 %v724, %v1236
        %v1749 = vsub.f32 %v725, %v1237
        %v1750 = vsub.f32 %v726, %v1238
        %v1751 = vsub.f32 %v727, %v1239
        %v1752 = vsub.f32 %v728, %v1240
        %v1753 = vsub.f32 %v729, %v1241
        %v1754 = vsub.f32 %v730, %v1242
        %v1755 = vsub.f32 %v731, %v1243
        %v1756 = vsub.f32 %v732, %v1244
        %v1757 = vsub.f32 %v733, %v1245
        %v1758 = vsub.f32 %v734, %v1246
        %v1759 = vsub.f32 %v735, %v1247
        %v1760 = vsub.f32 %v736, %v1248
        %v1761 = vsub.f32 %v737, %v1249
        %v1762 = vsub.f32 %v738, %v1250
        %v1763 = vsub.f32 %v739, %v1251
        %v1764 = vsub.f32 %v740, %v1252
        %v1765 = vsub.f32 %v741, %v1253
        %v1766 = vsub.f32 %v742, %v1254
        %v1767 = vsub.f32 %v743, %v1255
        %v1768 = vsub.f32 %v744, %v1256
        %v1769 = vsub.f32 %v745, %v1257
        %v1770 = vsub.f32 %v746, %v1258
        %v1771 = vsub.f32 %v747, %v1259
        %v1772 = vsub.f32 %v748, %v1260
        %v1773 = vsub.f32 %v749, %v1261
        %v1774 = vsub.f32 %v750, %v1262
        %v1775 = vsub.f32 %v751, %v1263
        %v1776 = vsub.f32 %v752, %v1264
        %v1777 = vsub.f32 %v753, %v1265
        %v1778 = vsub.f32 %v754, %v1266
        %v1779 = vsub.f32 %v755, %v1267
        %v1780 = vsub.f32 %v756, %v1268
        %v1781 = vsub.f32 %v757, %v1269
        %v1782 = vsub.f32 %v758, %v1270
        %v1783 = vsub.f32 %v759, %v1271
        %v1784 = vsub.f32 %v760, %v1272
        %v1785 = vsub.f32 %v761, %v1273
        %v1786 = vsub.f32 %v762, %v1274
        %v1787 = vsub.f32 %v763, %v1275
        %v1788 = vsub.f32 %v764, %v1276
        %v1789 = vsub.f32 %v765, %v1277
        %v1790 = vsub.f32 %v766, %v1278
        %v1791 = vsub.f32 %v767, %v1279
        %v1792 = vsub.f32 %v768, %v1280
        %v1793 = vand.u32 2147483647, %v1281
        %v1794 = vand.u32 2147483647, %v1282
        %v1795 = vand.u32 2147483647, %v1283
        %v1796 = vand.u32 2147483647, %v1284
        %v1797 = vand.u32 2147483647, %v1285
        %v1798 = vand.u32 2147483647, %v1286
        %v1799 = vand.u32 2147483647, %v1287
        %v1800 = vand.u32 2147483647, %v1288
        %v1801 = vand.u32 2147483647, %v1289
        %v1802 = vand.u32 2147483647, %v1290
        %v1803 = vand.u32 2147483647, %v1291
        %v1804 = vand.u32 2147483647, %v1292
        %v1805 = vand.u32 2147483647, %v1293
        %v1806 = vand.u32 2147483647, %v1294
        %v1807 = vand.u32 2147483647, %v1295
        %v1808 = vand.u32 2147483647, %v1296
        %v1809 = vand.u32 2147483647, %v1297
        %v1810 = vand.u32 2147483647, %v1298
        %v1811 = vand.u32 2147483647, %v1299
        %v1812 = vand.u32 2147483647, %v1300
        %v1813 = vand.u32 2147483647, %v1301
        %v1814 = vand.u32 2147483647, %v1302
        %v1815 = vand.u32 2147483647, %v1303
        %v1816 = vand.u32 2147483647, %v1304
        %v1817 = vand.u32 2147483647, %v1305
        %v1818 = vand.u32 2147483647, %v1306
        %v1819 = vand.u32 2147483647, %v1307
        %v1820 = vand.u32 2147483647, %v1308
        %v1821 = vand.u32 2147483647, %v1309
        %v1822 = vand.u32 2147483647, %v1310
        %v1823 = vand.u32 2147483647, %v1311
        %v1824 = vand.u32 2147483647, %v1312
        %v1825 = vand.u32 2147483647, %v1313
        %v1826 = vand.u32 2147483647, %v1314
        %v1827 = vand.u32 2147483647, %v1315
        %v1828 = vand.u32 2147483647, %v1316
        %v1829 = vand.u32 2147483647, %v1317
        %v1830 = vand.u32 2147483647, %v1318
        %v1831 = vand.u32 2147483647, %v1319
        %v1832 = vand.u32 2147483647, %v1320
        %v1833 = vand.u32 2147483647, %v1321
        %v1834 = vand.u32 2147483647, %v1322
        %v1835 = vand.u32 2147483647, %v1323
        %v1836 = vand.u32 2147483647, %v1324
        %v1837 = vand.u32 2147483647, %v1325
        %v1838 = vand.u32 2147483647, %v1326
        %v1839 = vand.u32 2147483647, %v1327
        %v1840 = vand.u32 2147483647, %v1328
        %v1841 = vand.u32 2147483647, %v1329
        %v1842 = vand.u32 2147483647, %v1330
        %v1843 = vand.u32 2147483647, %v1331
        %v1844 = vand.u32 2147483647, %v1332
        %v1845 = vand.u32 2147483647, %v1333
        %v1846 = vand.u32 2147483647, %v1334
        %v1847 = vand.u32 2147483647, %v1335
        %v1848 = vand.u32 2147483647, %v1336
        %v1849 = vand.u32 2147483647, %v1337
        %v1850 = vand.u32 2147483647, %v1338
        %v1851 = vand.u32 2147483647, %v1339
        %v1852 = vand.u32 2147483647, %v1340
        %v1853 = vand.u32 2147483647, %v1341
        %v1854 = vand.u32 2147483647, %v1342
        %v1855 = vand.u32 2147483647, %v1343
        %v1856 = vand.u32 2147483647, %v1344
        %v1857 = vand.u32 2147483647, %v1345
        %v1858 = vand.u32 2147483647, %v1346
        %v1859 = vand.u32 2147483647, %v1347
        %v1860 = vand.u32 2147483647, %v1348
        %v1861 = vand.u32 2147483647, %v1349
        %v1862 = vand.u32 2147483647, %v1350
        %v1863 = vand.u32 2147483647, %v1351
        %v1864 = vand.u32 2147483647, %v1352
        %v1865 = vand.u32 2147483647, %v1353
        %v1866 = vand.u32 2147483647, %v1354
        %v1867 = vand.u32 2147483647, %v1355
        %v1868 = vand.u32 2147483647, %v1356
        %v1869 = vand.u32 2147483647, %v1357
        %v1870 = vand.u32 2147483647, %v1358
        %v1871 = vand.u32 2147483647, %v1359
        %v1872 = vand.u32 2147483647, %v1360
        %v1873 = vand.u32 2147483647, %v1361
        %v1874 = vand.u32 2147483647, %v1362
        %v1875 = vand.u32 2147483647, %v1363
        %v1876 = vand.u32 2147483647, %v1364
        %v1877 = vand.u32 2147483647, %v1365
        %v1878 = vand.u32 2147483647, %v1366
        %v1879 = vand.u32 2147483647, %v1367
        %v1880 = vand.u32 2147483647, %v1368
        %v1881 = vand.u32 2147483647, %v1369
        %v1882 = vand.u32 2147483647, %v1370
        %v1883 = vand.u32 2147483647, %v1371
        %v1884 = vand.u32 2147483647, %v1372
        %v1885 = vand.u32 2147483647, %v1373
        %v1886 = vand.u32 2147483647, %v1374
        %v1887 = vand.u32 2147483647, %v1375
        %v1888 = vand.u32 2147483647, %v1376
        %v1889 = vand.u32 2147483647, %v1377
        %v1890 = vand.u32 2147483647, %v1378
        %v1891 = vand.u32 2147483647, %v1379
        %v1892 = vand.u32 2147483647, %v1380
        %v1893 = vand.u32 2147483647, %v1381
        %v1894 = vand.u32 2147483647, %v1382
        %v1895 = vand.u32 2147483647, %v1383
        %v1896 = vand.u32 2147483647, %v1384
        %v1897 = vand.u32 2147483647, %v1385
        %v1898 = vand.u32 2147483647, %v1386
        %v1899 = vand.u32 2147483647, %v1387
        %v1900 = vand.u32 2147483647, %v1388
        %v1901 = vand.u32 2147483647, %v1389
        %v1902 = vand.u32 2147483647, %v1390
        %v1903 = vand.u32 2147483647, %v1391
        %v1904 = vand.u32 2147483647, %v1392
        %v1905 = vand.u32 2147483647, %v1393
        %v1906 = vand.u32 2147483647, %v1394
        %v1907 = vand.u32 2147483647, %v1395
        %v1908 = vand.u32 2147483647, %v1396
        %v1909 = vand.u32 2147483647, %v1397
        %v1910 = vand.u32 2147483647, %v1398
        %v1911 = vand.u32 2147483647, %v1399
        %v1912 = vand.u32 2147483647, %v1400
        %v1913 = vand.u32 2147483647, %v1401
        %v1914 = vand.u32 2147483647, %v1402
        %v1915 = vand.u32 2147483647, %v1403
        %v1916 = vand.u32 2147483647, %v1404
        %v1917 = vand.u32 2147483647, %v1405
        %v1918 = vand.u32 2147483647, %v1406
        %v1919 = vand.u32 2147483647, %v1407
        %v1920 = vand.u32 2147483647, %v1408
        %v1921 = vand.u32 2147483647, %v1409
        %v1922 = vand.u32 2147483647, %v1410
        %v1923 = vand.u32 2147483647, %v1411
        %v1924 = vand.u32 2147483647, %v1412
        %v1925 = vand.u32 2147483647, %v1413
        %v1926 = vand.u32 2147483647, %v1414
        %v1927 = vand.u32 2147483647, %v1415
        %v1928 = vand.u32 2147483647, %v1416
        %v1929 = vand.u32 2147483647, %v1417
        %v1930 = vand.u32 2147483647, %v1418
        %v1931 = vand.u32 2147483647, %v1419
        %v1932 = vand.u32 2147483647, %v1420
        %v1933 = vand.u32 2147483647, %v1421
        %v1934 = vand.u32 2147483647, %v1422
        %v1935 = vand.u32 2147483647, %v1423
        %v1936 = vand.u32 2147483647, %v1424
        %v1937 = vand.u32 2147483647, %v1425
        %v1938 = vand.u32 2147483647, %v1426
        %v1939 = vand.u32 2147483647, %v1427
        %v1940 = vand.u32 2147483647, %v1428
        %v1941 = vand.u32 2147483647, %v1429
        %v1942 = vand.u32 2147483647, %v1430
        %v1943 = vand.u32 2147483647, %v1431
        %v1944 = vand.u32 2147483647, %v1432
        %v1945 = vand.u32 2147483647, %v1433
        %v1946 = vand.u32 2147483647, %v1434
        %v1947 = vand.u32 2147483647, %v1435
        %v1948 = vand.u32 2147483647, %v1436
        %v1949 = vand.u32 2147483647, %v1437
        %v1950 = vand.u32 2147483647, %v1438
        %v1951 = vand.u32 2147483647, %v1439
        %v1952 = vand.u32 2147483647, %v1440
        %v1953 = vand.u32 2147483647, %v1441
        %v1954 = vand.u32 2147483647, %v1442
        %v1955 = vand.u32 2147483647, %v1443
        %v1956 = vand.u32 2147483647, %v1444
        %v1957 = vand.u32 2147483647, %v1445
        %v1958 = vand.u32 2147483647, %v1446
        %v1959 = vand.u32 2147483647, %v1447
        %v1960 = vand.u32 2147483647, %v1448
        %v1961 = vand.u32 2147483647, %v1449
        %v1962 = vand.u32 2147483647, %v1450
        %v1963 = vand.u32 2147483647, %v1451
        %v1964 = vand.u32 2147483647, %v1452
        %v1965 = vand.u32 2147483647, %v1453
        %v1966 = vand.u32 2147483647, %v1454
        %v1967 = vand.u32 2147483647, %v1455
        %v1968 = vand.u32 2147483647, %v1456
        %v1969 = vand.u32 2147483647, %v1457
        %v1970 = vand.u32 2147483647, %v1458
        %v1971 = vand.u32 2147483647, %v1459
        %v1972 = vand.u32 2147483647, %v1460
        %v1973 = vand.u32 2147483647, %v1461
        %v1974 = vand.u32 2147483647, %v1462
        %v1975 = vand.u32 2147483647, %v1463
        %v1976 = vand.u32 2147483647, %v1464
        %v1977 = vand.u32 2147483647, %v1465
        %v1978 = vand.u32 2147483647, %v1466
        %v1979 = vand.u32 2147483647, %v1467
        %v1980 = vand.u32 2147483647, %v1468
        %v1981 = vand.u32 2147483647, %v1469
        %v1982 = vand.u32 2147483647, %v1470
        %v1983 = vand.u32 2147483647, %v1471
        %v1984 = vand.u32 2147483647, %v1472
        %v1985 = vand.u32 2147483647, %v1473
        %v1986 = vand.u32 2147483647, %v1474
        %v1987 = vand.u32 2147483647, %v1475
        %v1988 = vand.u32 2147483647, %v1476
        %v1989 = vand.u32 2147483647, %v1477
        %v1990 = vand.u32 2147483647, %v1478
        %v1991 = vand.u32 2147483647, %v1479
        %v1992 = vand.u32 2147483647, %v1480
        %v1993 = vand.u32 2147483647, %v1481
        %v1994 = vand.u32 2147483647, %v1482
        %v1995 = vand.u32 2147483647, %v1483
        %v1996 = vand.u32 2147483647, %v1484
        %v1997 = vand.u32 2147483647, %v1485
        %v1998 = vand.u32 2147483647, %v1486
        %v1999 = vand.u32 2147483647, %v1487
        %v2000 = vand.u32 2147483647, %v1488
        %v2001 = vand.u32 2147483647, %v1489
        %v2002 = vand.u32 2147483647, %v1490
        %v2003 = vand.u32 2147483647, %v1491
        %v2004 = vand.u32 2147483647, %v1492
        %v2005 = vand.u32 2147483647, %v1493
        %v2006 = vand.u32 2147483647, %v1494
        %v2007 = vand.u32 2147483647, %v1495
        %v2008 = vand.u32 2147483647, %v1496
        %v2009 = vand.u32 2147483647, %v1497
        %v2010 = vand.u32 2147483647, %v1498
        %v2011 = vand.u32 2147483647, %v1499
        %v2012 = vand.u32 2147483647, %v1500
        %v2013 = vand.u32 2147483647, %v1501
        %v2014 = vand.u32 2147483647, %v1502
        %v2015 = vand.u32 2147483647, %v1503
        %v2016 = vand.u32 2147483647, %v1504
        %v2017 = vand.u32 2147483647, %v1505
        %v2018 = vand.u32 2147483647, %v1506
        %v2019 = vand.u32 2147483647, %v1507
        %v2020 = vand.u32 2147483647, %v1508
        %v2021 = vand.u32 2147483647, %v1509
        %v2022 = vand.u32 2147483647, %v1510
        %v2023 = vand.u32 2147483647, %v1511
        %v2024 = vand.u32 2147483647, %v1512
        %v2025 = vand.u32 2147483647, %v1513
        %v2026 = vand.u32 2147483647, %v1514
        %v2027 = vand.u32 2147483647, %v1515
        %v2028 = vand.u32 2147483647, %v1516
        %v2029 = vand.u32 2147483647, %v1517
        %v2030 = vand.u32 2147483647, %v1518
        %v2031 = vand.u32 2147483647, %v1519
        %v2032 = vand.u32 2147483647, %v1520
        %v2033 = vand.u32 2147483647, %v1521
        %v2034 = vand.u32 2147483647, %v1522
        %v2035 = vand.u32 2147483647, %v1523
        %v2036 = vand.u32 2147483647, %v1524
        %v2037 = vand.u32 2147483647, %v1525
        %v2038 = vand.u32 2147483647, %v1526
        %v2039 = vand.u32 2147483647, %v1527
        %v2040 = vand.u32 2147483647, %v1528
        %v2041 = vand.u32 2147483647, %v1529
        %v2042 = vand.u32 2147483647, %v1530
        %v2043 = vand.u32 2147483647, %v1531
        %v2044 = vand.u32 2147483647, %v1532
        %v2045 = vand.u32 2147483647, %v1533
        %v2046 = vand.u32 2147483647, %v1534
        %v2047 = vand.u32 2147483647, %v1535
        %v2048 = vand.u32 2147483647, %v1536
        %v2049 = vand.u32 2147483647, %v1537
        %v2050 = vand.u32 2147483647, %v1538
        %v2051 = vand.u32 2147483647, %v1539
        %v2052 = vand.u32 2147483647, %v1540
        %v2053 = vand.u32 2147483647, %v1541
        %v2054 = vand.u32 2147483647, %v1542
        %v2055 = vand.u32 2147483647, %v1543
        %v2056 = vand.u32 2147483647, %v1544
        %v2057 = vand.u32 2147483647, %v1545
        %v2058 = vand.u32 2147483647, %v1546
        %v2059 = vand.u32 2147483647, %v1547
        %v2060 = vand.u32 2147483647, %v1548
        %v2061 = vand.u32 2147483647, %v1549
        %v2062 = vand.u32 2147483647, %v1550
        %v2063 = vand.u32 2147483647, %v1551
        %v2064 = vand.u32 2147483647, %v1552
        %v2065 = vand.u32 2147483647, %v1553
        %v2066 = vand.u32 2147483647, %v1554
        %v2067 = vand.u32 2147483647, %v1555
        %v2068 = vand.u32 2147483647, %v1556
        %v2069 = vand.u32 2147483647, %v1557
        %v2070 = vand.u32 2147483647, %v1558
        %v2071 = vand.u32 2147483647, %v1559
        %v2072 = vand.u32 2147483647, %v1560
        %v2073 = vand.u32 2147483647, %v1561
        %v2074 = vand.u32 2147483647, %v1562
        %v2075 = vand.u32 2147483647, %v1563
        %v2076 = vand.u32 2147483647, %v1564
        %v2077 = vand.u32 2147483647, %v1565
        %v2078 = vand.u32 2147483647, %v1566
        %v2079 = vand.u32 2147483647, %v1567
        %v2080 = vand.u32 2147483647, %v1568
        %v2081 = vand.u32 2147483647, %v1569
        %v2082 = vand.u32 2147483647, %v1570
        %v2083 = vand.u32 2147483647, %v1571
        %v2084 = vand.u32 2147483647, %v1572
        %v2085 = vand.u32 2147483647, %v1573
        %v2086 = vand.u32 2147483647, %v1574
        %v2087 = vand.u32 2147483647, %v1575
        %v2088 = vand.u32 2147483647, %v1576
        %v2089 = vand.u32 2147483647, %v1577
        %v2090 = vand.u32 2147483647, %v1578
        %v2091 = vand.u32 2147483647, %v1579
        %v2092 = vand.u32 2147483647, %v1580
        %v2093 = vand.u32 2147483647, %v1581
        %v2094 = vand.u32 2147483647, %v1582
        %v2095 = vand.u32 2147483647, %v1583
        %v2096 = vand.u32 2147483647, %v1584
        %v2097 = vand.u32 2147483647, %v1585
        %v2098 = vand.u32 2147483647, %v1586
        %v2099 = vand.u32 2147483647, %v1587
        %v2100 = vand.u32 2147483647, %v1588
        %v2101 = vand.u32 2147483647, %v1589
        %v2102 = vand.u32 2147483647, %v1590
        %v2103 = vand.u32 2147483647, %v1591
        %v2104 = vand.u32 2147483647, %v1592
        %v2105 = vand.u32 2147483647, %v1593
        %v2106 = vand.u32 2147483647, %v1594
        %v2107 = vand.u32 2147483647, %v1595
        %v2108 = vand.u32 2147483647, %v1596
        %v2109 = vand.u32 2147483647, %v1597
        %v2110 = vand.u32 2147483647, %v1598
        %v2111 = vand.u32 2147483647, %v1599
        %v2112 = vand.u32 2147483647, %v1600
        %v2113 = vand.u32 2147483647, %v1601
        %v2114 = vand.u32 2147483647, %v1602
        %v2115 = vand.u32 2147483647, %v1603
        %v2116 = vand.u32 2147483647, %v1604
        %v2117 = vand.u32 2147483647, %v1605
        %v2118 = vand.u32 2147483647, %v1606
        %v2119 = vand.u32 2147483647, %v1607
        %v2120 = vand.u32 2147483647, %v1608
        %v2121 = vand.u32 2147483647, %v1609
        %v2122 = vand.u32 2147483647, %v1610
        %v2123 = vand.u32 2147483647, %v1611
        %v2124 = vand.u32 2147483647, %v1612
        %v2125 = vand.u32 2147483647, %v1613
        %v2126 = vand.u32 2147483647, %v1614
        %v2127 = vand.u32 2147483647, %v1615
        %v2128 = vand.u32 2147483647, %v1616
        %v2129 = vand.u32 2147483647, %v1617
        %v2130 = vand.u32 2147483647, %v1618
        %v2131 = vand.u32 2147483647, %v1619
        %v2132 = vand.u32 2147483647, %v1620
        %v2133 = vand.u32 2147483647, %v1621
        %v2134 = vand.u32 2147483647, %v1622
        %v2135 = vand.u32 2147483647, %v1623
        %v2136 = vand.u32 2147483647, %v1624
        %v2137 = vand.u32 2147483647, %v1625
        %v2138 = vand.u32 2147483647, %v1626
        %v2139 = vand.u32 2147483647, %v1627
        %v2140 = vand.u32 2147483647, %v1628
        %v2141 = vand.u32 2147483647, %v1629
        %v2142 = vand.u32 2147483647, %v1630
        %v2143 = vand.u32 2147483647, %v1631
        %v2144 = vand.u32 2147483647, %v1632
        %v2145 = vand.u32 2147483647, %v1633
        %v2146 = vand.u32 2147483647, %v1634
        %v2147 = vand.u32 2147483647, %v1635
        %v2148 = vand.u32 2147483647, %v1636
        %v2149 = vand.u32 2147483647, %v1637
        %v2150 = vand.u32 2147483647, %v1638
        %v2151 = vand.u32 2147483647, %v1639
        %v2152 = vand.u32 2147483647, %v1640
        %v2153 = vand.u32 2147483647, %v1641
        %v2154 = vand.u32 2147483647, %v1642
        %v2155 = vand.u32 2147483647, %v1643
        %v2156 = vand.u32 2147483647, %v1644
        %v2157 = vand.u32 2147483647, %v1645
        %v2158 = vand.u32 2147483647, %v1646
        %v2159 = vand.u32 2147483647, %v1647
        %v2160 = vand.u32 2147483647, %v1648
        %v2161 = vand.u32 2147483647, %v1649
        %v2162 = vand.u32 2147483647, %v1650
        %v2163 = vand.u32 2147483647, %v1651
        %v2164 = vand.u32 2147483647, %v1652
        %v2165 = vand.u32 2147483647, %v1653
        %v2166 = vand.u32 2147483647, %v1654
        %v2167 = vand.u32 2147483647, %v1655
        %v2168 = vand.u32 2147483647, %v1656
        %v2169 = vand.u32 2147483647, %v1657
        %v2170 = vand.u32 2147483647, %v1658
        %v2171 = vand.u32 2147483647, %v1659
        %v2172 = vand.u32 2147483647, %v1660
        %v2173 = vand.u32 2147483647, %v1661
        %v2174 = vand.u32 2147483647, %v1662
        %v2175 = vand.u32 2147483647, %v1663
        %v2176 = vand.u32 2147483647, %v1664
        %v2177 = vand.u32 2147483647, %v1665
        %v2178 = vand.u32 2147483647, %v1666
        %v2179 = vand.u32 2147483647, %v1667
        %v2180 = vand.u32 2147483647, %v1668
        %v2181 = vand.u32 2147483647, %v1669
        %v2182 = vand.u32 2147483647, %v1670
        %v2183 = vand.u32 2147483647, %v1671
        %v2184 = vand.u32 2147483647, %v1672
        %v2185 = vand.u32 2147483647, %v1673
        %v2186 = vand.u32 2147483647, %v1674
        %v2187 = vand.u32 2147483647, %v1675
        %v2188 = vand.u32 2147483647, %v1676
        %v2189 = vand.u32 2147483647, %v1677
        %v2190 = vand.u32 2147483647, %v1678
        %v2191 = vand.u32 2147483647, %v1679
        %v2192 = vand.u32 2147483647, %v1680
        %v2193 = vand.u32 2147483647, %v1681
        %v2194 = vand.u32 2147483647, %v1682
        %v2195 = vand.u32 2147483647, %v1683
        %v2196 = vand.u32 2147483647, %v1684
        %v2197 = vand.u32 2147483647, %v1685
        %v2198 = vand.u32 2147483647, %v1686
        %v2199 = vand.u32 2147483647, %v1687
        %v2200 = vand.u32 2147483647, %v1688
        %v2201 = vand.u32 2147483647, %v1689
        %v2202 = vand.u32 2147483647, %v1690
        %v2203 = vand.u32 2147483647, %v1691
        %v2204 = vand.u32 2147483647, %v1692
        %v2205 = vand.u32 2147483647, %v1693
        %v2206 = vand.u32 2147483647, %v1694
        %v2207 = vand.u32 2147483647, %v1695
        %v2208 = vand.u32 2147483647, %v1696
        %v2209 = vand.u32 2147483647, %v1697
        %v2210 = vand.u32 2147483647, %v1698
        %v2211 = vand.u32 2147483647, %v1699
        %v2212 = vand.u32 2147483647, %v1700
        %v2213 = vand.u32 2147483647, %v1701
        %v2214 = vand.u32 2147483647, %v1702
        %v2215 = vand.u32 2147483647, %v1703
        %v2216 = vand.u32 2147483647, %v1704
        %v2217 = vand.u32 2147483647, %v1705
        %v2218 = vand.u32 2147483647, %v1706
        %v2219 = vand.u32 2147483647, %v1707
        %v2220 = vand.u32 2147483647, %v1708
        %v2221 = vand.u32 2147483647, %v1709
        %v2222 = vand.u32 2147483647, %v1710
        %v2223 = vand.u32 2147483647, %v1711
        %v2224 = vand.u32 2147483647, %v1712
        %v2225 = vand.u32 2147483647, %v1713
        %v2226 = vand.u32 2147483647, %v1714
        %v2227 = vand.u32 2147483647, %v1715
        %v2228 = vand.u32 2147483647, %v1716
        %v2229 = vand.u32 2147483647, %v1717
        %v2230 = vand.u32 2147483647, %v1718
        %v2231 = vand.u32 2147483647, %v1719
        %v2232 = vand.u32 2147483647, %v1720
        %v2233 = vand.u32 2147483647, %v1721
        %v2234 = vand.u32 2147483647, %v1722
        %v2235 = vand.u32 2147483647, %v1723
        %v2236 = vand.u32 2147483647, %v1724
        %v2237 = vand.u32 2147483647, %v1725
        %v2238 = vand.u32 2147483647, %v1726
        %v2239 = vand.u32 2147483647, %v1727
        %v2240 = vand.u32 2147483647, %v1728
        %v2241 = vand.u32 2147483647, %v1729
        %v2242 = vand.u32 2147483647, %v1730
        %v2243 = vand.u32 2147483647, %v1731
        %v2244 = vand.u32 2147483647, %v1732
        %v2245 = vand.u32 2147483647, %v1733
        %v2246 = vand.u32 2147483647, %v1734
        %v2247 = vand.u32 2147483647, %v1735
        %v2248 = vand.u32 2147483647, %v1736
        %v2249 = vand.u32 2147483647, %v1737
        %v2250 = vand.u32 2147483647, %v1738
        %v2251 = vand.u32 2147483647, %v1739
        %v2252 = vand.u32 2147483647, %v1740
        %v2253 = vand.u32 2147483647, %v1741
        %v2254 = vand.u32 2147483647, %v1742
        %v2255 = vand.u32 2147483647, %v1743
        %v2256 = vand.u32 2147483647, %v1744
        %v2257 = vand.u32 2147483647, %v1745
        %v2258 = vand.u32 2147483647, %v1746
        %v2259 = vand.u32 2147483647, %v1747
        %v2260 = vand.u32 2147483647, %v1748
        %v2261 = vand.u32 2147483647, %v1749
        %v2262 = vand.u32 2147483647, %v1750
        %v2263 = vand.u32 2147483647, %v1751
        %v2264 = vand.u32 2147483647, %v1752
        %v2265 = vand.u32 2147483647, %v1753
        %v2266 = vand.u32 2147483647, %v1754
        %v2267 = vand.u32 2147483647, %v1755
        %v2268 = vand.u32 2147483647, %v1756
        %v2269 = vand.u32 2147483647, %v1757
        %v2270 = vand.u32 2147483647, %v1758
        %v2271 = vand.u32 2147483647, %v1759
        %v2272 = vand.u32 2147483647, %v1760
        %v2273 = vand.u32 2147483647, %v1761
        %v2274 = vand.u32 2147483647, %v1762
        %v2275 = vand.u32 2147483647, %v1763
        %v2276 = vand.u32 2147483647, %v1764
        %v2277 = vand.u32 2147483647, %v1765
        %v2278 = vand.u32 2147483647, %v1766
        %v2279 = vand.u32 2147483647, %v1767
        %v2280 = vand.u32 2147483647, %v1768
        %v2281 = vand.u32 2147483647, %v1769
        %v2282 = vand.u32 2147483647, %v1770
        %v2283 = vand.u32 2147483647, %v1771
        %v2284 = vand.u32 2147483647, %v1772
        %v2285 = vand.u32 2147483647, %v1773
        %v2286 = vand.u32 2147483647, %v1774
        %v2287 = vand.u32 2147483647, %v1775
        %v2288 = vand.u32 2147483647, %v1776
        %v2289 = vand.u32 2147483647, %v1777
        %v2290 = vand.u32 2147483647, %v1778
        %v2291 = vand.u32 2147483647, %v1779
        %v2292 = vand.u32 2147483647, %v1780
        %v2293 = vand.u32 2147483647, %v1781
        %v2294 = vand.u32 2147483647, %v1782
        %v2295 = vand.u32 2147483647, %v1783
        %v2296 = vand.u32 2147483647, %v1784
        %v2297 = vand.u32 2147483647, %v1785
        %v2298 = vand.u32 2147483647, %v1786
        %v2299 = vand.u32 2147483647, %v1787
        %v2300 = vand.u32 2147483647, %v1788
        %v2301 = vand.u32 2147483647, %v1789
        %v2302 = vand.u32 2147483647, %v1790
        %v2303 = vand.u32 2147483647, %v1791
        %v2304 = vand.u32 2147483647, %v1792
        %s2305 = sadd.s32 %s26, %s27
        %s2306 = smul.u32 %s2305, 4096
        %v2307 = vlaneseq
        %v2308 = vshrl.u32 %v2307, 7
        %v2309 = vadd.s32 %v2308, 8
        %v2310 = vadd.s32 %v2308, 16
        %v2311 = vadd.s32 %v2308, 24
        %v2312 = vadd.s32 %v2308, 32
        %v2313 = vadd.s32 %v2308, 40
        %v2314 = vadd.s32 %v2308, 48
        %v2315 = vadd.s32 %v2308, 56
        %v2316 = vadd.s32 %v2308, 64
        %v2317 = vadd.s32 %v2308, 72
        %v2318 = vadd.s32 %v2308, 80
        %v2319 = vadd.s32 %v2308, 88
        %v2320 = vadd.s32 %v2308, 96
        %v2321 = vadd.s32 %v2308, 104
        %v2322 = vadd.s32 %v2308, 112
        %v2323 = vadd.s32 %v2308, 120
        %v2324 = vadd.s32 %v2308, 128
        %v2325 = vadd.s32 %v2308, 136
        %v2326 = vadd.s32 %v2308, 144
        %v2327 = vadd.s32 %v2308, 152
        %v2328 = vadd.s32 %v2308, 160
        %v2329 = vadd.s32 %v2308, 168
        %v2330 = vadd.s32 %v2308, 176
        %v2331 = vadd.s32 %v2308, 184
        %v2332 = vadd.s32 %v2308, 192
        %v2333 = vadd.s32 %v2308, 200
        %v2334 = vadd.s32 %v2308, 208
        %v2335 = vadd.s32 %v2308, 216
        %v2336 = vadd.s32 %v2308, 224
        %v2337 = vadd.s32 %v2308, 232
        %v2338 = vadd.s32 %v2308, 240
        %v2339 = vadd.s32 %v2308, 248
        %v2340 = vadd.s32 %v2308, 256
        %v2341 = vadd.s32 %v2308, 264
        %v2342 = vadd.s32 %v2308, 272
        %v2343 = vadd.s32 %v2308, 280
        %v2344 = vadd.s32 %v2308, 288
        %v2345 = vadd.s32 %v2308, 296
        %v2346 = vadd.s32 %v2308, 304
        %v2347 = vadd.s32 %v2308, 312
        %v2348 = vadd.s32 %v2308, 320
        %v2349 = vadd.s32 %v2308, 328
        %v2350 = vadd.s32 %v2308, 336
        %v2351 = vadd.s32 %v2308, 344
        %v2352 = vadd.s32 %v2308, 352
        %v2353 = vadd.s32 %v2308, 360
        %v2354 = vadd.s32 %v2308, 368
        %v2355 = vadd.s32 %v2308, 376
        %v2356 = vadd.s32 %v2308, 384
        %v2357 = vadd.s32 %v2308, 392
        %v2358 = vadd.s32 %v2308, 400
        %v2359 = vadd.s32 %v2308, 408
        %v2360 = vadd.s32 %v2308, 416
        %v2361 = vadd.s32 %v2308, 424
        %v2362 = vadd.s32 %v2308, 432
        %v2363 = vadd.s32 %v2308, 440
        %v2364 = vadd.s32 %v2308, 448
        %v2365 = vadd.s32 %v2308, 456
        %v2366 = vadd.s32 %v2308, 464
        %v2367 = vadd.s32 %v2308, 472
        %v2368 = vadd.s32 %v2308, 480
        %v2369 = vadd.s32 %v2308, 488
        %v2370 = vadd.s32 %v2308, 496
        %v2371 = vadd.s32 %v2308, 504
        %v2372 = vadd.s32 %v2308, 512
        %v2373 = vadd.s32 %v2308, 520
        %v2374 = vadd.s32 %v2308, 528
        %v2375 = vadd.s32 %v2308, 536
        %v2376 = vadd.s32 %v2308, 544
        %v2377 = vadd.s32 %v2308, 552
        %v2378 = vadd.s32 %v2308, 560
        %v2379 = vadd.s32 %v2308, 568
        %v2380 = vadd.s32 %v2308, 576
        %v2381 = vadd.s32 %v2308, 584
        %v2382 = vadd.s32 %v2308, 592
        %v2383 = vadd.s32 %v2308, 600
        %v2384 = vadd.s32 %v2308, 608
        %v2385 = vadd.s32 %v2308, 616
        %v2386 = vadd.s32 %v2308, 624
        %v2387 = vadd.s32 %v2308, 632
        %v2388 = vadd.s32 %v2308, 640
        %v2389 = vadd.s32 %v2308, 648
        %v2390 = vadd.s32 %v2308, 656
        %v2391 = vadd.s32 %v2308, 664
        %v2392 = vadd.s32 %v2308, 672
        %v2393 = vadd.s32 %v2308, 680
        %v2394 = vadd.s32 %v2308, 688
        %v2395 = vadd.s32 %v2308, 696
        %v2396 = vadd.s32 %v2308, 704
        %v2397 = vadd.s32 %v2308, 712
        %v2398 = vadd.s32 %v2308, 720
        %v2399 = vadd.s32 %v2308, 728
        %v2400 = vadd.s32 %v2308, 736
        %v2401 = vadd.s32 %v2308, 744
        %v2402 = vadd.s32 %v2308, 752
        %v2403 = vadd.s32 %v2308, 760
        %v2404 = vadd.s32 %v2308, 768
        %v2405 = vadd.s32 %v2308, 776
        %v2406 = vadd.s32 %v2308, 784
        %v2407 = vadd.s32 %v2308, 792
        %v2408 = vadd.s32 %v2308, 800
        %v2409 = vadd.s32 %v2308, 808
        %v2410 = vadd.s32 %v2308, 816
        %v2411 = vadd.s32 %v2308, 824
        %v2412 = vadd.s32 %v2308, 832
        %v2413 = vadd.s32 %v2308, 840
        %v2414 = vadd.s32 %v2308, 848
        %v2415 = vadd.s32 %v2308, 856
        %v2416 = vadd.s32 %v2308, 864
        %v2417 = vadd.s32 %v2308, 872
        %v2418 = vadd.s32 %v2308, 880
        %v2419 = vadd.s32 %v2308, 888
        %v2420 = vadd.s32 %v2308, 896
        %v2421 = vadd.s32 %v2308, 904
        %v2422 = vadd.s32 %v2308, 912
        %v2423 = vadd.s32 %v2308, 920
        %v2424 = vadd.s32 %v2308, 928
        %v2425 = vadd.s32 %v2308, 936
        %v2426 = vadd.s32 %v2308, 944
        %v2427 = vadd.s32 %v2308, 952
        %v2428 = vadd.s32 %v2308, 960
        %v2429 = vadd.s32 %v2308, 968
        %v2430 = vadd.s32 %v2308, 976
        %v2431 = vadd.s32 %v2308, 984
        %v2432 = vadd.s32 %v2308, 992
        %v2433 = vadd.s32 %v2308, 1000
        %v2434 = vadd.s32 %v2308, 1008
        %v2435 = vadd.s32 %v2308, 1016
        %v2436 = vadd.s32 %v2308, 1024
        %v2437 = vadd.s32 %v2308, 1032
        %v2438 = vadd.s32 %v2308, 1040
        %v2439 = vadd.s32 %v2308, 1048
        %v2440 = vadd.s32 %v2308, 1056
        %v2441 = vadd.s32 %v2308, 1064
        %v2442 = vadd.s32 %v2308, 1072
        %v2443 = vadd.s32 %v2308, 1080
        %v2444 = vadd.s32 %v2308, 1088
        %v2445 = vadd.s32 %v2308, 1096
        %v2446 = vadd.s32 %v2308, 1104
        %v2447 = vadd.s32 %v2308, 1112
        %v2448 = vadd.s32 %v2308, 1120
        %v2449 = vadd.s32 %v2308, 1128
        %v2450 = vadd.s32 %v2308, 1136
        %v2451 = vadd.s32 %v2308, 1144
        %v2452 = vadd.s32 %v2308, 1152
        %v2453 = vadd.s32 %v2308, 1160
        %v2454 = vadd.s32 %v2308, 1168
        %v2455 = vadd.s32 %v2308, 1176
        %v2456 = vadd.s32 %v2308, 1184
        %v2457 = vadd.s32 %v2308, 1192
        %v2458 = vadd.s32 %v2308, 1200
        %v2459 = vadd.s32 %v2308, 1208
        %v2460 = vadd.s32 %v2308, 1216
        %v2461 = vadd.s32 %v2308, 1224
        %v2462 = vadd.s32 %v2308, 1232
        %v2463 = vadd.s32 %v2308, 1240
        %v2464 = vadd.s32 %v2308, 1248
        %v2465 = vadd.s32 %v2308, 1256
        %v2466 = vadd.s32 %v2308, 1264
        %v2467 = vadd.s32 %v2308, 1272
        %v2468 = vadd.s32 %v2308, 1280
        %v2469 = vadd.s32 %v2308, 1288
        %v2470 = vadd.s32 %v2308, 1296
        %v2471 = vadd.s32 %v2308, 1304
        %v2472 = vadd.s32 %v2308, 1312
        %v2473 = vadd.s32 %v2308, 1320
        %v2474 = vadd.s32 %v2308, 1328
        %v2475 = vadd.s32 %v2308, 1336
        %v2476 = vadd.s32 %v2308, 1344
        %v2477 = vadd.s32 %v2308, 1352
        %v2478 = vadd.s32 %v2308, 1360
        %v2479 = vadd.s32 %v2308, 1368
        %v2480 = vadd.s32 %v2308, 1376
        %v2481 = vadd.s32 %v2308, 1384
        %v2482 = vadd.s32 %v2308, 1392
        %v2483 = vadd.s32 %v2308, 1400
        %v2484 = vadd.s32 %v2308, 1408
        %v2485 = vadd.s32 %v2308, 1416
        %v2486 = vadd.s32 %v2308, 1424
        %v2487 = vadd.s32 %v2308, 1432
        %v2488 = vadd.s32 %v2308, 1440
        %v2489 = vadd.s32 %v2308, 1448
        %v2490 = vadd.s32 %v2308, 1456
        %v2491 = vadd.s32 %v2308, 1464
        %v2492 = vadd.s32 %v2308, 1472
        %v2493 = vadd.s32 %v2308, 1480
        %v2494 = vadd.s32 %v2308, 1488
        %v2495 = vadd.s32 %v2308, 1496
        %v2496 = vadd.s32 %v2308, 1504
        %v2497 = vadd.s32 %v2308, 1512
        %v2498 = vadd.s32 %v2308, 1520
        %v2499 = vadd.s32 %v2308, 1528
        %v2500 = vadd.s32 %v2308, 1536
        %v2501 = vadd.s32 %v2308, 1544
        %v2502 = vadd.s32 %v2308, 1552
        %v2503 = vadd.s32 %v2308, 1560
        %v2504 = vadd.s32 %v2308, 1568
        %v2505 = vadd.s32 %v2308, 1576
        %v2506 = vadd.s32 %v2308, 1584
        %v2507 = vadd.s32 %v2308, 1592
        %v2508 = vadd.s32 %v2308, 1600
        %v2509 = vadd.s32 %v2308, 1608
        %v2510 = vadd.s32 %v2308, 1616
        %v2511 = vadd.s32 %v2308, 1624
        %v2512 = vadd.s32 %v2308, 1632
        %v2513 = vadd.s32 %v2308, 1640
        %v2514 = vadd.s32 %v2308, 1648
        %v2515 = vadd.s32 %v2308, 1656
        %v2516 = vadd.s32 %v2308, 1664
        %v2517 = vadd.s32 %v2308, 1672
        %v2518 = vadd.s32 %v2308, 1680
        %v2519 = vadd.s32 %v2308, 1688
        %v2520 = vadd.s32 %v2308, 1696
        %v2521 = vadd.s32 %v2308, 1704
        %v2522 = vadd.s32 %v2308, 1712
        %v2523 = vadd.s32 %v2308, 1720
        %v2524 = vadd.s32 %v2308, 1728
        %v2525 = vadd.s32 %v2308, 1736
        %v2526 = vadd.s32 %v2308, 1744
        %v2527 = vadd.s32 %v2308, 1752
        %v2528 = vadd.s32 %v2308, 1760
        %v2529 = vadd.s32 %v2308, 1768
        %v2530 = vadd.s32 %v2308, 1776
        %v2531 = vadd.s32 %v2308, 1784
        %v2532 = vadd.s32 %v2308, 1792
        %v2533 = vadd.s32 %v2308, 1800
        %v2534 = vadd.s32 %v2308, 1808
        %v2535 = vadd.s32 %v2308, 1816
        %v2536 = vadd.s32 %v2308, 1824
        %v2537 = vadd.s32 %v2308, 1832
        %v2538 = vadd.s32 %v2308, 1840
        %v2539 = vadd.s32 %v2308, 1848
        %v2540 = vadd.s32 %v2308, 1856
        %v2541 = vadd.s32 %v2308, 1864
        %v2542 = vadd.s32 %v2308, 1872
        %v2543 = vadd.s32 %v2308, 1880
        %v2544 = vadd.s32 %v2308, 1888
        %v2545 = vadd.s32 %v2308, 1896
        %v2546 = vadd.s32 %v2308, 1904
        %v2547 = vadd.s32 %v2308, 1912
        %v2548 = vadd.s32 %v2308, 1920
        %v2549 = vadd.s32 %v2308, 1928
        %v2550 = vadd.s32 %v2308, 1936
        %v2551 = vadd.s32 %v2308, 1944
        %v2552 = vadd.s32 %v2308, 1952
        %v2553 = vadd.s32 %v2308, 1960
        %v2554 = vadd.s32 %v2308, 1968
        %v2555 = vadd.s32 %v2308, 1976
        %v2556 = vadd.s32 %v2308, 1984
        %v2557 = vadd.s32 %v2308, 1992
        %v2558 = vadd.s32 %v2308, 2000
        %v2559 = vadd.s32 %v2308, 2008
        %v2560 = vadd.s32 %v2308, 2016
        %v2561 = vadd.s32 %v2308, 2024
        %v2562 = vadd.s32 %v2308, 2032
        %v2563 = vadd.s32 %v2308, 2040
        %v2564 = vadd.s32 %v2308, 2048
        %v2565 = vadd.s32 %v2308, 2056
        %v2566 = vadd.s32 %v2308, 2064
        %v2567 = vadd.s32 %v2308, 2072
        %v2568 = vadd.s32 %v2308, 2080
        %v2569 = vadd.s32 %v2308, 2088
        %v2570 = vadd.s32 %v2308, 2096
        %v2571 = vadd.s32 %v2308, 2104
        %v2572 = vadd.s32 %v2308, 2112
        %v2573 = vadd.s32 %v2308, 2120
        %v2574 = vadd.s32 %v2308, 2128
        %v2575 = vadd.s32 %v2308, 2136
        %v2576 = vadd.s32 %v2308, 2144
        %v2577 = vadd.s32 %v2308, 2152
        %v2578 = vadd.s32 %v2308, 2160
        %v2579 = vadd.s32 %v2308, 2168
        %v2580 = vadd.s32 %v2308, 2176
        %v2581 = vadd.s32 %v2308, 2184
        %v2582 = vadd.s32 %v2308, 2192
        %v2583 = vadd.s32 %v2308, 2200
        %v2584 = vadd.s32 %v2308, 2208
        %v2585 = vadd.s32 %v2308, 2216
        %v2586 = vadd.s32 %v2308, 2224
        %v2587 = vadd.s32 %v2308, 2232
        %v2588 = vadd.s32 %v2308, 2240
        %v2589 = vadd.s32 %v2308, 2248
        %v2590 = vadd.s32 %v2308, 2256
        %v2591 = vadd.s32 %v2308, 2264
        %v2592 = vadd.s32 %v2308, 2272
        %v2593 = vadd.s32 %v2308, 2280
        %v2594 = vadd.s32 %v2308, 2288
        %v2595 = vadd.s32 %v2308, 2296
        %v2596 = vadd.s32 %v2308, 2304
        %v2597 = vadd.s32 %v2308, 2312
        %v2598 = vadd.s32 %v2308, 2320
        %v2599 = vadd.s32 %v2308, 2328
        %v2600 = vadd.s32 %v2308, 2336
        %v2601 = vadd.s32 %v2308, 2344
        %v2602 = vadd.s32 %v2308, 2352
        %v2603 = vadd.s32 %v2308, 2360
        %v2604 = vadd.s32 %v2308, 2368
        %v2605 = vadd.s32 %v2308, 2376
        %v2606 = vadd.s32 %v2308, 2384
        %v2607 = vadd.s32 %v2308, 2392
        %v2608 = vadd.s32 %v2308, 2400
        %v2609 = vadd.s32 %v2308, 2408
        %v2610 = vadd.s32 %v2308, 2416
        %v2611 = vadd.s32 %v2308, 2424
        %v2612 = vadd.s32 %v2308, 2432
        %v2613 = vadd.s32 %v2308, 2440
        %v2614 = vadd.s32 %v2308, 2448
        %v2615 = vadd.s32 %v2308, 2456
        %v2616 = vadd.s32 %v2308, 2464
        %v2617 = vadd.s32 %v2308, 2472
        %v2618 = vadd.s32 %v2308, 2480
        %v2619 = vadd.s32 %v2308, 2488
        %v2620 = vadd.s32 %v2308, 2496
        %v2621 = vadd.s32 %v2308, 2504
        %v2622 = vadd.s32 %v2308, 2512
        %v2623 = vadd.s32 %v2308, 2520
        %v2624 = vadd.s32 %v2308, 2528
        %v2625 = vadd.s32 %v2308, 2536
        %v2626 = vadd.s32 %v2308, 2544
        %v2627 = vadd.s32 %v2308, 2552
        %v2628 = vadd.s32 %v2308, 2560
        %v2629 = vadd.s32 %v2308, 2568
        %v2630 = vadd.s32 %v2308, 2576
        %v2631 = vadd.s32 %v2308, 2584
        %v2632 = vadd.s32 %v2308, 2592
        %v2633 = vadd.s32 %v2308, 2600
        %v2634 = vadd.s32 %v2308, 2608
        %v2635 = vadd.s32 %v2308, 2616
        %v2636 = vadd.s32 %v2308, 2624
        %v2637 = vadd.s32 %v2308, 2632
        %v2638 = vadd.s32 %v2308, 2640
        %v2639 = vadd.s32 %v2308, 2648
        %v2640 = vadd.s32 %v2308, 2656
        %v2641 = vadd.s32 %v2308, 2664
        %v2642 = vadd.s32 %v2308, 2672
        %v2643 = vadd.s32 %v2308, 2680
        %v2644 = vadd.s32 %v2308, 2688
        %v2645 = vadd.s32 %v2308, 2696
        %v2646 = vadd.s32 %v2308, 2704
        %v2647 = vadd.s32 %v2308, 2712
        %v2648 = vadd.s32 %v2308, 2720
        %v2649 = vadd.s32 %v2308, 2728
        %v2650 = vadd.s32 %v2308, 2736
        %v2651 = vadd.s32 %v2308, 2744
        %v2652 = vadd.s32 %v2308, 2752
        %v2653 = vadd.s32 %v2308, 2760
        %v2654 = vadd.s32 %v2308, 2768
        %v2655 = vadd.s32 %v2308, 2776
        %v2656 = vadd.s32 %v2308, 2784
        %v2657 = vadd.s32 %v2308, 2792
        %v2658 = vadd.s32 %v2308, 2800
        %v2659 = vadd.s32 %v2308, 2808
        %v2660 = vadd.s32 %v2308, 2816
        %v2661 = vadd.s32 %v2308, 2824
        %v2662 = vadd.s32 %v2308, 2832
        %v2663 = vadd.s32 %v2308, 2840
        %v2664 = vadd.s32 %v2308, 2848
        %v2665 = vadd.s32 %v2308, 2856
        %v2666 = vadd.s32 %v2308, 2864
        %v2667 = vadd.s32 %v2308, 2872
        %v2668 = vadd.s32 %v2308, 2880
        %v2669 = vadd.s32 %v2308, 2888
        %v2670 = vadd.s32 %v2308, 2896
        %v2671 = vadd.s32 %v2308, 2904
        %v2672 = vadd.s32 %v2308, 2912
        %v2673 = vadd.s32 %v2308, 2920
        %v2674 = vadd.s32 %v2308, 2928
        %v2675 = vadd.s32 %v2308, 2936
        %v2676 = vadd.s32 %v2308, 2944
        %v2677 = vadd.s32 %v2308, 2952
        %v2678 = vadd.s32 %v2308, 2960
        %v2679 = vadd.s32 %v2308, 2968
        %v2680 = vadd.s32 %v2308, 2976
        %v2681 = vadd.s32 %v2308, 2984
        %v2682 = vadd.s32 %v2308, 2992
        %v2683 = vadd.s32 %v2308, 3000
        %v2684 = vadd.s32 %v2308, 3008
        %v2685 = vadd.s32 %v2308, 3016
        %v2686 = vadd.s32 %v2308, 3024
        %v2687 = vadd.s32 %v2308, 3032
        %v2688 = vadd.s32 %v2308, 3040
        %v2689 = vadd.s32 %v2308, 3048
        %v2690 = vadd.s32 %v2308, 3056
        %v2691 = vadd.s32 %v2308, 3064
        %v2692 = vadd.s32 %v2308, 3072
        %v2693 = vadd.s32 %v2308, 3080
        %v2694 = vadd.s32 %v2308, 3088
        %v2695 = vadd.s32 %v2308, 3096
        %v2696 = vadd.s32 %v2308, 3104
        %v2697 = vadd.s32 %v2308, 3112
        %v2698 = vadd.s32 %v2308, 3120
        %v2699 = vadd.s32 %v2308, 3128
        %v2700 = vadd.s32 %v2308, 3136
        %v2701 = vadd.s32 %v2308, 3144
        %v2702 = vadd.s32 %v2308, 3152
        %v2703 = vadd.s32 %v2308, 3160
        %v2704 = vadd.s32 %v2308, 3168
        %v2705 = vadd.s32 %v2308, 3176
        %v2706 = vadd.s32 %v2308, 3184
        %v2707 = vadd.s32 %v2308, 3192
        %v2708 = vadd.s32 %v2308, 3200
        %v2709 = vadd.s32 %v2308, 3208
        %v2710 = vadd.s32 %v2308, 3216
        %v2711 = vadd.s32 %v2308, 3224
        %v2712 = vadd.s32 %v2308, 3232
        %v2713 = vadd.s32 %v2308, 3240
        %v2714 = vadd.s32 %v2308, 3248
        %v2715 = vadd.s32 %v2308, 3256
        %v2716 = vadd.s32 %v2308, 3264
        %v2717 = vadd.s32 %v2308, 3272
        %v2718 = vadd.s32 %v2308, 3280
        %v2719 = vadd.s32 %v2308, 3288
        %v2720 = vadd.s32 %v2308, 3296
        %v2721 = vadd.s32 %v2308, 3304
        %v2722 = vadd.s32 %v2308, 3312
        %v2723 = vadd.s32 %v2308, 3320
        %v2724 = vadd.s32 %v2308, 3328
        %v2725 = vadd.s32 %v2308, 3336
        %v2726 = vadd.s32 %v2308, 3344
        %v2727 = vadd.s32 %v2308, 3352
        %v2728 = vadd.s32 %v2308, 3360
        %v2729 = vadd.s32 %v2308, 3368
        %v2730 = vadd.s32 %v2308, 3376
        %v2731 = vadd.s32 %v2308, 3384
        %v2732 = vadd.s32 %v2308, 3392
        %v2733 = vadd.s32 %v2308, 3400
        %v2734 = vadd.s32 %v2308, 3408
        %v2735 = vadd.s32 %v2308, 3416
        %v2736 = vadd.s32 %v2308, 3424
        %v2737 = vadd.s32 %v2308, 3432
        %v2738 = vadd.s32 %v2308, 3440
        %v2739 = vadd.s32 %v2308, 3448
        %v2740 = vadd.s32 %v2308, 3456
        %v2741 = vadd.s32 %v2308, 3464
        %v2742 = vadd.s32 %v2308, 3472
        %v2743 = vadd.s32 %v2308, 3480
        %v2744 = vadd.s32 %v2308, 3488
        %v2745 = vadd.s32 %v2308, 3496
        %v2746 = vadd.s32 %v2308, 3504
        %v2747 = vadd.s32 %v2308, 3512
        %v2748 = vadd.s32 %v2308, 3520
        %v2749 = vadd.s32 %v2308, 3528
        %v2750 = vadd.s32 %v2308, 3536
        %v2751 = vadd.s32 %v2308, 3544
        %v2752 = vadd.s32 %v2308, 3552
        %v2753 = vadd.s32 %v2308, 3560
        %v2754 = vadd.s32 %v2308, 3568
        %v2755 = vadd.s32 %v2308, 3576
        %v2756 = vadd.s32 %v2308, 3584
        %v2757 = vadd.s32 %v2308, 3592
        %v2758 = vadd.s32 %v2308, 3600
        %v2759 = vadd.s32 %v2308, 3608
        %v2760 = vadd.s32 %v2308, 3616
        %v2761 = vadd.s32 %v2308, 3624
        %v2762 = vadd.s32 %v2308, 3632
        %v2763 = vadd.s32 %v2308, 3640
        %v2764 = vadd.s32 %v2308, 3648
        %v2765 = vadd.s32 %v2308, 3656
        %v2766 = vadd.s32 %v2308, 3664
        %v2767 = vadd.s32 %v2308, 3672
        %v2768 = vadd.s32 %v2308, 3680
        %v2769 = vadd.s32 %v2308, 3688
        %v2770 = vadd.s32 %v2308, 3696
        %v2771 = vadd.s32 %v2308, 3704
        %v2772 = vadd.s32 %v2308, 3712
        %v2773 = vadd.s32 %v2308, 3720
        %v2774 = vadd.s32 %v2308, 3728
        %v2775 = vadd.s32 %v2308, 3736
        %v2776 = vadd.s32 %v2308, 3744
        %v2777 = vadd.s32 %v2308, 3752
        %v2778 = vadd.s32 %v2308, 3760
        %v2779 = vadd.s32 %v2308, 3768
        %v2780 = vadd.s32 %v2308, 3776
        %v2781 = vadd.s32 %v2308, 3784
        %v2782 = vadd.s32 %v2308, 3792
        %v2783 = vadd.s32 %v2308, 3800
        %v2784 = vadd.s32 %v2308, 3808
        %v2785 = vadd.s32 %v2308, 3816
        %v2786 = vadd.s32 %v2308, 3824
        %v2787 = vadd.s32 %v2308, 3832
        %v2788 = vadd.s32 %v2308, 3840
        %v2789 = vadd.s32 %v2308, 3848
        %v2790 = vadd.s32 %v2308, 3856
        %v2791 = vadd.s32 %v2308, 3864
        %v2792 = vadd.s32 %v2308, 3872
        %v2793 = vadd.s32 %v2308, 3880
        %v2794 = vadd.s32 %v2308, 3888
        %v2795 = vadd.s32 %v2308, 3896
        %v2796 = vadd.s32 %v2308, 3904
        %v2797 = vadd.s32 %v2308, 3912
        %v2798 = vadd.s32 %v2308, 3920
        %v2799 = vadd.s32 %v2308, 3928
        %v2800 = vadd.s32 %v2308, 3936
        %v2801 = vadd.s32 %v2308, 3944
        %v2802 = vadd.s32 %v2308, 3952
        %v2803 = vadd.s32 %v2308, 3960
        %v2804 = vadd.s32 %v2308, 3968
        %v2805 = vadd.s32 %v2308, 3976
        %v2806 = vadd.s32 %v2308, 3984
        %v2807 = vadd.s32 %v2308, 3992
        %v2808 = vadd.s32 %v2308, 4000
        %v2809 = vadd.s32 %v2308, 4008
        %v2810 = vadd.s32 %v2308, 4016
        %v2811 = vadd.s32 %v2308, 4024
        %v2812 = vadd.s32 %v2308, 4032
        %v2813 = vadd.s32 %v2308, 4040
        %v2814 = vadd.s32 %v2308, 4048
        %v2815 = vadd.s32 %v2308, 4056
        %v2816 = vadd.s32 %v2308, 4064
        %v2817 = vadd.s32 %v2308, 4072
        %v2818 = vadd.s32 %v2308, 4080
        %v2819 = vadd.s32 %v2308, 4088
        %v2820 = vstv %s2306
        %v2821 = vadd.s32 %v2820, %v2308
        %v2822 = vadd.s32 %v2820, %v2309
        %v2823 = vadd.s32 %v2820, %v2310
        %v2824 = vadd.s32 %v2820, %v2311
        %v2825 = vadd.s32 %v2820, %v2312
        %v2826 = vadd.s32 %v2820, %v2313
        %v2827 = vadd.s32 %v2820, %v2314
        %v2828 = vadd.s32 %v2820, %v2315
        %v2829 = vadd.s32 %v2820, %v2316
        %v2830 = vadd.s32 %v2820, %v2317
        %v2831 = vadd.s32 %v2820, %v2318
        %v2832 = vadd.s32 %v2820, %v2319
        %v2833 = vadd.s32 %v2820, %v2320
        %v2834 = vadd.s32 %v2820, %v2321
        %v2835 = vadd.s32 %v2820, %v2322
        %v2836 = vadd.s32 %v2820, %v2323
        %v2837 = vadd.s32 %v2820, %v2324
        %v2838 = vadd.s32 %v2820, %v2325
        %v2839 = vadd.s32 %v2820, %v2326
        %v2840 = vadd.s32 %v2820, %v2327
        %v2841 = vadd.s32 %v2820, %v2328
        %v2842 = vadd.s32 %v2820, %v2329
        %v2843 = vadd.s32 %v2820, %v2330
        %v2844 = vadd.s32 %v2820, %v2331
        %v2845 = vadd.s32 %v2820, %v2332
        %v2846 = vadd.s32 %v2820, %v2333
        %v2847 = vadd.s32 %v2820, %v2334
        %v2848 = vadd.s32 %v2820, %v2335
        %v2849 = vadd.s32 %v2820, %v2336
        %v2850 = vadd.s32 %v2820, %v2337
        %v2851 = vadd.s32 %v2820, %v2338
        %v2852 = vadd.s32 %v2820, %v2339
        %v2853 = vadd.s32 %v2820, %v2340
        %v2854 = vadd.s32 %v2820, %v2341
        %v2855 = vadd.s32 %v2820, %v2342
        %v2856 = vadd.s32 %v2820, %v2343
        %v2857 = vadd.s32 %v2820, %v2344
        %v2858 = vadd.s32 %v2820, %v2345
        %v2859 = vadd.s32 %v2820, %v2346
        %v2860 = vadd.s32 %v2820, %v2347
        %v2861 = vadd.s32 %v2820, %v2348
        %v2862 = vadd.s32 %v2820, %v2349
        %v2863 = vadd.s32 %v2820, %v2350
        %v2864 = vadd.s32 %v2820, %v2351
        %v2865 = vadd.s32 %v2820, %v2352
        %v2866 = vadd.s32 %v2820, %v2353
        %v2867 = vadd.s32 %v2820, %v2354
        %v2868 = vadd.s32 %v2820, %v2355
        %v2869 = vadd.s32 %v2820, %v2356
        %v2870 = vadd.s32 %v2820, %v2357
        %v2871 = vadd.s32 %v2820, %v2358
        %v2872 = vadd.s32 %v2820, %v2359
        %v2873 = vadd.s32 %v2820, %v2360
        %v2874 = vadd.s32 %v2820, %v2361
        %v2875 = vadd.s32 %v2820, %v2362
        %v2876 = vadd.s32 %v2820, %v2363
        %v2877 = vadd.s32 %v2820, %v2364
        %v2878 = vadd.s32 %v2820, %v2365
        %v2879 = vadd.s32 %v2820, %v2366
        %v2880 = vadd.s32 %v2820, %v2367
        %v2881 = vadd.s32 %v2820, %v2368
        %v2882 = vadd.s32 %v2820, %v2369
        %v2883 = vadd.s32 %v2820, %v2370
        %v2884 = vadd.s32 %v2820, %v2371
        %v2885 = vadd.s32 %v2820, %v2372
        %v2886 = vadd.s32 %v2820, %v2373
        %v2887 = vadd.s32 %v2820, %v2374
        %v2888 = vadd.s32 %v2820, %v2375
        %v2889 = vadd.s32 %v2820, %v2376
        %v2890 = vadd.s32 %v2820, %v2377
        %v2891 = vadd.s32 %v2820, %v2378
        %v2892 = vadd.s32 %v2820, %v2379
        %v2893 = vadd.s32 %v2820, %v2380
        %v2894 = vadd.s32 %v2820, %v2381
        %v2895 = vadd.s32 %v2820, %v2382
        %v2896 = vadd.s32 %v2820, %v2383
        %v2897 = vadd.s32 %v2820, %v2384
        %v2898 = vadd.s32 %v2820, %v2385
        %v2899 = vadd.s32 %v2820, %v2386
        %v2900 = vadd.s32 %v2820, %v2387
        %v2901 = vadd.s32 %v2820, %v2388
        %v2902 = vadd.s32 %v2820, %v2389
        %v2903 = vadd.s32 %v2820, %v2390
        %v2904 = vadd.s32 %v2820, %v2391
        %v2905 = vadd.s32 %v2820, %v2392
        %v2906 = vadd.s32 %v2820, %v2393
        %v2907 = vadd.s32 %v2820, %v2394
        %v2908 = vadd.s32 %v2820, %v2395
        %v2909 = vadd.s32 %v2820, %v2396
        %v2910 = vadd.s32 %v2820, %v2397
        %v2911 = vadd.s32 %v2820, %v2398
        %v2912 = vadd.s32 %v2820, %v2399
        %v2913 = vadd.s32 %v2820, %v2400
        %v2914 = vadd.s32 %v2820, %v2401
        %v2915 = vadd.s32 %v2820, %v2402
        %v2916 = vadd.s32 %v2820, %v2403
        %v2917 = vadd.s32 %v2820, %v2404
        %v2918 = vadd.s32 %v2820, %v2405
        %v2919 = vadd.s32 %v2820, %v2406
        %v2920 = vadd.s32 %v2820, %v2407
        %v2921 = vadd.s32 %v2820, %v2408
        %v2922 = vadd.s32 %v2820, %v2409
        %v2923 = vadd.s32 %v2820, %v2410
        %v2924 = vadd.s32 %v2820, %v2411
        %v2925 = vadd.s32 %v2820, %v2412
        %v2926 = vadd.s32 %v2820, %v2413
        %v2927 = vadd.s32 %v2820, %v2414
        %v2928 = vadd.s32 %v2820, %v2415
        %v2929 = vadd.s32 %v2820, %v2416
        %v2930 = vadd.s32 %v2820, %v2417
        %v2931 = vadd.s32 %v2820, %v2418
        %v2932 = vadd.s32 %v2820, %v2419
        %v2933 = vadd.s32 %v2820, %v2420
        %v2934 = vadd.s32 %v2820, %v2421
        %v2935 = vadd.s32 %v2820, %v2422
        %v2936 = vadd.s32 %v2820, %v2423
        %v2937 = vadd.s32 %v2820, %v2424
        %v2938 = vadd.s32 %v2820, %v2425
        %v2939 = vadd.s32 %v2820, %v2426
        %v2940 = vadd.s32 %v2820, %v2427
        %v2941 = vadd.s32 %v2820, %v2428
        %v2942 = vadd.s32 %v2820, %v2429
        %v2943 = vadd.s32 %v2820, %v2430
        %v2944 = vadd.s32 %v2820, %v2431
        %v2945 = vadd.s32 %v2820, %v2432
        %v2946 = vadd.s32 %v2820, %v2433
        %v2947 = vadd.s32 %v2820, %v2434
        %v2948 = vadd.s32 %v2820, %v2435
        %v2949 = vadd.s32 %v2820, %v2436
        %v2950 = vadd.s32 %v2820, %v2437
        %v2951 = vadd.s32 %v2820, %v2438
        %v2952 = vadd.s32 %v2820, %v2439
        %v2953 = vadd.s32 %v2820, %v2440
        %v2954 = vadd.s32 %v2820, %v2441
        %v2955 = vadd.s32 %v2820, %v2442
        %v2956 = vadd.s32 %v2820, %v2443
        %v2957 = vadd.s32 %v2820, %v2444
        %v2958 = vadd.s32 %v2820, %v2445
        %v2959 = vadd.s32 %v2820, %v2446
        %v2960 = vadd.s32 %v2820, %v2447
        %v2961 = vadd.s32 %v2820, %v2448
        %v2962 = vadd.s32 %v2820, %v2449
        %v2963 = vadd.s32 %v2820, %v2450
        %v2964 = vadd.s32 %v2820, %v2451
        %v2965 = vadd.s32 %v2820, %v2452
        %v2966 = vadd.s32 %v2820, %v2453
        %v2967 = vadd.s32 %v2820, %v2454
        %v2968 = vadd.s32 %v2820, %v2455
        %v2969 = vadd.s32 %v2820, %v2456
        %v2970 = vadd.s32 %v2820, %v2457
        %v2971 = vadd.s32 %v2820, %v2458
        %v2972 = vadd.s32 %v2820, %v2459
        %v2973 = vadd.s32 %v2820, %v2460
        %v2974 = vadd.s32 %v2820, %v2461
        %v2975 = vadd.s32 %v2820, %v2462
        %v2976 = vadd.s32 %v2820, %v2463
        %v2977 = vadd.s32 %v2820, %v2464
        %v2978 = vadd.s32 %v2820, %v2465
        %v2979 = vadd.s32 %v2820, %v2466
        %v2980 = vadd.s32 %v2820, %v2467
        %v2981 = vadd.s32 %v2820, %v2468
        %v2982 = vadd.s32 %v2820, %v2469
        %v2983 = vadd.s32 %v2820, %v2470
        %v2984 = vadd.s32 %v2820, %v2471
        %v2985 = vadd.s32 %v2820, %v2472
        %v2986 = vadd.s32 %v2820, %v2473
        %v2987 = vadd.s32 %v2820, %v2474
        %v2988 = vadd.s32 %v2820, %v2475
        %v2989 = vadd.s32 %v2820, %v2476
        %v2990 = vadd.s32 %v2820, %v2477
        %v2991 = vadd.s32 %v2820, %v2478
        %v2992 = vadd.s32 %v2820, %v2479
        %v2993 = vadd.s32 %v2820, %v2480
        %v2994 = vadd.s32 %v2820, %v2481
        %v2995 = vadd.s32 %v2820, %v2482
        %v2996 = vadd.s32 %v2820, %v2483
        %v2997 = vadd.s32 %v2820, %v2484
        %v2998 = vadd.s32 %v2820, %v2485
        %v2999 = vadd.s32 %v2820, %v2486
        %v3000 = vadd.s32 %v2820, %v2487
        %v3001 = vadd.s32 %v2820, %v2488
        %v3002 = vadd.s32 %v2820, %v2489
        %v3003 = vadd.s32 %v2820, %v2490
        %v3004 = vadd.s32 %v2820, %v2491
        %v3005 = vadd.s32 %v2820, %v2492
        %v3006 = vadd.s32 %v2820, %v2493
        %v3007 = vadd.s32 %v2820, %v2494
        %v3008 = vadd.s32 %v2820, %v2495
        %v3009 = vadd.s32 %v2820, %v2496
        %v3010 = vadd.s32 %v2820, %v2497
        %v3011 = vadd.s32 %v2820, %v2498
        %v3012 = vadd.s32 %v2820, %v2499
        %v3013 = vadd.s32 %v2820, %v2500
        %v3014 = vadd.s32 %v2820, %v2501
        %v3015 = vadd.s32 %v2820, %v2502
        %v3016 = vadd.s32 %v2820, %v2503
        %v3017 = vadd.s32 %v2820, %v2504
        %v3018 = vadd.s32 %v2820, %v2505
        %v3019 = vadd.s32 %v2820, %v2506
        %v3020 = vadd.s32 %v2820, %v2507
        %v3021 = vadd.s32 %v2820, %v2508
        %v3022 = vadd.s32 %v2820, %v2509
        %v3023 = vadd.s32 %v2820, %v2510
        %v3024 = vadd.s32 %v2820, %v2511
        %v3025 = vadd.s32 %v2820, %v2512
        %v3026 = vadd.s32 %v2820, %v2513
        %v3027 = vadd.s32 %v2820, %v2514
        %v3028 = vadd.s32 %v2820, %v2515
        %v3029 = vadd.s32 %v2820, %v2516
        %v3030 = vadd.s32 %v2820, %v2517
        %v3031 = vadd.s32 %v2820, %v2518
        %v3032 = vadd.s32 %v2820, %v2519
        %v3033 = vadd.s32 %v2820, %v2520
        %v3034 = vadd.s32 %v2820, %v2521
        %v3035 = vadd.s32 %v2820, %v2522
        %v3036 = vadd.s32 %v2820, %v2523
        %v3037 = vadd.s32 %v2820, %v2524
        %v3038 = vadd.s32 %v2820, %v2525
        %v3039 = vadd.s32 %v2820, %v2526
        %v3040 = vadd.s32 %v2820, %v2527
        %v3041 = vadd.s32 %v2820, %v2528
        %v3042 = vadd.s32 %v2820, %v2529
        %v3043 = vadd.s32 %v2820, %v2530
        %v3044 = vadd.s32 %v2820, %v2531
        %v3045 = vadd.s32 %v2820, %v2532
        %v3046 = vadd.s32 %v2820, %v2533
        %v3047 = vadd.s32 %v2820, %v2534
        %v3048 = vadd.s32 %v2820, %v2535
        %v3049 = vadd.s32 %v2820, %v2536
        %v3050 = vadd.s32 %v2820, %v2537
        %v3051 = vadd.s32 %v2820, %v2538
        %v3052 = vadd.s32 %v2820, %v2539
        %v3053 = vadd.s32 %v2820, %v2540
        %v3054 = vadd.s32 %v2820, %v2541
        %v3055 = vadd.s32 %v2820, %v2542
        %v3056 = vadd.s32 %v2820, %v2543
        %v3057 = vadd.s32 %v2820, %v2544
        %v3058 = vadd.s32 %v2820, %v2545
        %v3059 = vadd.s32 %v2820, %v2546
        %v3060 = vadd.s32 %v2820, %v2547
        %v3061 = vadd.s32 %v2820, %v2548
        %v3062 = vadd.s32 %v2820, %v2549
        %v3063 = vadd.s32 %v2820, %v2550
        %v3064 = vadd.s32 %v2820, %v2551
        %v3065 = vadd.s32 %v2820, %v2552
        %v3066 = vadd.s32 %v2820, %v2553
        %v3067 = vadd.s32 %v2820, %v2554
        %v3068 = vadd.s32 %v2820, %v2555
        %v3069 = vadd.s32 %v2820, %v2556
        %v3070 = vadd.s32 %v2820, %v2557
        %v3071 = vadd.s32 %v2820, %v2558
        %v3072 = vadd.s32 %v2820, %v2559
        %v3073 = vadd.s32 %v2820, %v2560
        %v3074 = vadd.s32 %v2820, %v2561
        %v3075 = vadd.s32 %v2820, %v2562
        %v3076 = vadd.s32 %v2820, %v2563
        %v3077 = vadd.s32 %v2820, %v2564
        %v3078 = vadd.s32 %v2820, %v2565
        %v3079 = vadd.s32 %v2820, %v2566
        %v3080 = vadd.s32 %v2820, %v2567
        %v3081 = vadd.s32 %v2820, %v2568
        %v3082 = vadd.s32 %v2820, %v2569
        %v3083 = vadd.s32 %v2820, %v2570
        %v3084 = vadd.s32 %v2820, %v2571
        %v3085 = vadd.s32 %v2820, %v2572
        %v3086 = vadd.s32 %v2820, %v2573
        %v3087 = vadd.s32 %v2820, %v2574
        %v3088 = vadd.s32 %v2820, %v2575
        %v3089 = vadd.s32 %v2820, %v2576
        %v3090 = vadd.s32 %v2820, %v2577
        %v3091 = vadd.s32 %v2820, %v2578
        %v3092 = vadd.s32 %v2820, %v2579
        %v3093 = vadd.s32 %v2820, %v2580
        %v3094 = vadd.s32 %v2820, %v2581
        %v3095 = vadd.s32 %v2820, %v2582
        %v3096 = vadd.s32 %v2820, %v2583
        %v3097 = vadd.s32 %v2820, %v2584
        %v3098 = vadd.s32 %v2820, %v2585
        %v3099 = vadd.s32 %v2820, %v2586
        %v3100 = vadd.s32 %v2820, %v2587
        %v3101 = vadd.s32 %v2820, %v2588
        %v3102 = vadd.s32 %v2820, %v2589
        %v3103 = vadd.s32 %v2820, %v2590
        %v3104 = vadd.s32 %v2820, %v2591
        %v3105 = vadd.s32 %v2820, %v2592
        %v3106 = vadd.s32 %v2820, %v2593
        %v3107 = vadd.s32 %v2820, %v2594
        %v3108 = vadd.s32 %v2820, %v2595
        %v3109 = vadd.s32 %v2820, %v2596
        %v3110 = vadd.s32 %v2820, %v2597
        %v3111 = vadd.s32 %v2820, %v2598
        %v3112 = vadd.s32 %v2820, %v2599
        %v3113 = vadd.s32 %v2820, %v2600
        %v3114 = vadd.s32 %v2820, %v2601
        %v3115 = vadd.s32 %v2820, %v2602
        %v3116 = vadd.s32 %v2820, %v2603
        %v3117 = vadd.s32 %v2820, %v2604
        %v3118 = vadd.s32 %v2820, %v2605
        %v3119 = vadd.s32 %v2820, %v2606
        %v3120 = vadd.s32 %v2820, %v2607
        %v3121 = vadd.s32 %v2820, %v2608
        %v3122 = vadd.s32 %v2820, %v2609
        %v3123 = vadd.s32 %v2820, %v2610
        %v3124 = vadd.s32 %v2820, %v2611
        %v3125 = vadd.s32 %v2820, %v2612
        %v3126 = vadd.s32 %v2820, %v2613
        %v3127 = vadd.s32 %v2820, %v2614
        %v3128 = vadd.s32 %v2820, %v2615
        %v3129 = vadd.s32 %v2820, %v2616
        %v3130 = vadd.s32 %v2820, %v2617
        %v3131 = vadd.s32 %v2820, %v2618
        %v3132 = vadd.s32 %v2820, %v2619
        %v3133 = vadd.s32 %v2820, %v2620
        %v3134 = vadd.s32 %v2820, %v2621
        %v3135 = vadd.s32 %v2820, %v2622
        %v3136 = vadd.s32 %v2820, %v2623
        %v3137 = vadd.s32 %v2820, %v2624
        %v3138 = vadd.s32 %v2820, %v2625
        %v3139 = vadd.s32 %v2820, %v2626
        %v3140 = vadd.s32 %v2820, %v2627
        %v3141 = vadd.s32 %v2820, %v2628
        %v3142 = vadd.s32 %v2820, %v2629
        %v3143 = vadd.s32 %v2820, %v2630
        %v3144 = vadd.s32 %v2820, %v2631
        %v3145 = vadd.s32 %v2820, %v2632
        %v3146 = vadd.s32 %v2820, %v2633
        %v3147 = vadd.s32 %v2820, %v2634
        %v3148 = vadd.s32 %v2820, %v2635
        %v3149 = vadd.s32 %v2820, %v2636
        %v3150 = vadd.s32 %v2820, %v2637
        %v3151 = vadd.s32 %v2820, %v2638
        %v3152 = vadd.s32 %v2820, %v2639
        %v3153 = vadd.s32 %v2820, %v2640
        %v3154 = vadd.s32 %v2820, %v2641
        %v3155 = vadd.s32 %v2820, %v2642
        %v3156 = vadd.s32 %v2820, %v2643
        %v3157 = vadd.s32 %v2820, %v2644
        %v3158 = vadd.s32 %v2820, %v2645
        %v3159 = vadd.s32 %v2820, %v2646
        %v3160 = vadd.s32 %v2820, %v2647
        %v3161 = vadd.s32 %v2820, %v2648
        %v3162 = vadd.s32 %v2820, %v2649
        %v3163 = vadd.s32 %v2820, %v2650
        %v3164 = vadd.s32 %v2820, %v2651
        %v3165 = vadd.s32 %v2820, %v2652
        %v3166 = vadd.s32 %v2820, %v2653
        %v3167 = vadd.s32 %v2820, %v2654
        %v3168 = vadd.s32 %v2820, %v2655
        %v3169 = vadd.s32 %v2820, %v2656
        %v3170 = vadd.s32 %v2820, %v2657
        %v3171 = vadd.s32 %v2820, %v2658
        %v3172 = vadd.s32 %v2820, %v2659
        %v3173 = vadd.s32 %v2820, %v2660
        %v3174 = vadd.s32 %v2820, %v2661
        %v3175 = vadd.s32 %v2820, %v2662
        %v3176 = vadd.s32 %v2820, %v2663
        %v3177 = vadd.s32 %v2820, %v2664
        %v3178 = vadd.s32 %v2820, %v2665
        %v3179 = vadd.s32 %v2820, %v2666
        %v3180 = vadd.s32 %v2820, %v2667
        %v3181 = vadd.s32 %v2820, %v2668
        %v3182 = vadd.s32 %v2820, %v2669
        %v3183 = vadd.s32 %v2820, %v2670
        %v3184 = vadd.s32 %v2820, %v2671
        %v3185 = vadd.s32 %v2820, %v2672
        %v3186 = vadd.s32 %v2820, %v2673
        %v3187 = vadd.s32 %v2820, %v2674
        %v3188 = vadd.s32 %v2820, %v2675
        %v3189 = vadd.s32 %v2820, %v2676
        %v3190 = vadd.s32 %v2820, %v2677
        %v3191 = vadd.s32 %v2820, %v2678
        %v3192 = vadd.s32 %v2820, %v2679
        %v3193 = vadd.s32 %v2820, %v2680
        %v3194 = vadd.s32 %v2820, %v2681
        %v3195 = vadd.s32 %v2820, %v2682
        %v3196 = vadd.s32 %v2820, %v2683
        %v3197 = vadd.s32 %v2820, %v2684
        %v3198 = vadd.s32 %v2820, %v2685
        %v3199 = vadd.s32 %v2820, %v2686
        %v3200 = vadd.s32 %v2820, %v2687
        %v3201 = vadd.s32 %v2820, %v2688
        %v3202 = vadd.s32 %v2820, %v2689
        %v3203 = vadd.s32 %v2820, %v2690
        %v3204 = vadd.s32 %v2820, %v2691
        %v3205 = vadd.s32 %v2820, %v2692
        %v3206 = vadd.s32 %v2820, %v2693
        %v3207 = vadd.s32 %v2820, %v2694
        %v3208 = vadd.s32 %v2820, %v2695
        %v3209 = vadd.s32 %v2820, %v2696
        %v3210 = vadd.s32 %v2820, %v2697
        %v3211 = vadd.s32 %v2820, %v2698
        %v3212 = vadd.s32 %v2820, %v2699
        %v3213 = vadd.s32 %v2820, %v2700
        %v3214 = vadd.s32 %v2820, %v2701
        %v3215 = vadd.s32 %v2820, %v2702
        %v3216 = vadd.s32 %v2820, %v2703
        %v3217 = vadd.s32 %v2820, %v2704
        %v3218 = vadd.s32 %v2820, %v2705
        %v3219 = vadd.s32 %v2820, %v2706
        %v3220 = vadd.s32 %v2820, %v2707
        %v3221 = vadd.s32 %v2820, %v2708
        %v3222 = vadd.s32 %v2820, %v2709
        %v3223 = vadd.s32 %v2820, %v2710
        %v3224 = vadd.s32 %v2820, %v2711
        %v3225 = vadd.s32 %v2820, %v2712
        %v3226 = vadd.s32 %v2820, %v2713
        %v3227 = vadd.s32 %v2820, %v2714
        %v3228 = vadd.s32 %v2820, %v2715
        %v3229 = vadd.s32 %v2820, %v2716
        %v3230 = vadd.s32 %v2820, %v2717
        %v3231 = vadd.s32 %v2820, %v2718
        %v3232 = vadd.s32 %v2820, %v2719
        %v3233 = vadd.s32 %v2820, %v2720
        %v3234 = vadd.s32 %v2820, %v2721
        %v3235 = vadd.s32 %v2820, %v2722
        %v3236 = vadd.s32 %v2820, %v2723
        %v3237 = vadd.s32 %v2820, %v2724
        %v3238 = vadd.s32 %v2820, %v2725
        %v3239 = vadd.s32 %v2820, %v2726
        %v3240 = vadd.s32 %v2820, %v2727
        %v3241 = vadd.s32 %v2820, %v2728
        %v3242 = vadd.s32 %v2820, %v2729
        %v3243 = vadd.s32 %v2820, %v2730
        %v3244 = vadd.s32 %v2820, %v2731
        %v3245 = vadd.s32 %v2820, %v2732
        %v3246 = vadd.s32 %v2820, %v2733
        %v3247 = vadd.s32 %v2820, %v2734
        %v3248 = vadd.s32 %v2820, %v2735
        %v3249 = vadd.s32 %v2820, %v2736
        %v3250 = vadd.s32 %v2820, %v2737
        %v3251 = vadd.s32 %v2820, %v2738
        %v3252 = vadd.s32 %v2820, %v2739
        %v3253 = vadd.s32 %v2820, %v2740
        %v3254 = vadd.s32 %v2820, %v2741
        %v3255 = vadd.s32 %v2820, %v2742
        %v3256 = vadd.s32 %v2820, %v2743
        %v3257 = vadd.s32 %v2820, %v2744
        %v3258 = vadd.s32 %v2820, %v2745
        %v3259 = vadd.s32 %v2820, %v2746
        %v3260 = vadd.s32 %v2820, %v2747
        %v3261 = vadd.s32 %v2820, %v2748
        %v3262 = vadd.s32 %v2820, %v2749
        %v3263 = vadd.s32 %v2820, %v2750
        %v3264 = vadd.s32 %v2820, %v2751
        %v3265 = vadd.s32 %v2820, %v2752
        %v3266 = vadd.s32 %v2820, %v2753
        %v3267 = vadd.s32 %v2820, %v2754
        %v3268 = vadd.s32 %v2820, %v2755
        %v3269 = vadd.s32 %v2820, %v2756
        %v3270 = vadd.s32 %v2820, %v2757
        %v3271 = vadd.s32 %v2820, %v2758
        %v3272 = vadd.s32 %v2820, %v2759
        %v3273 = vadd.s32 %v2820, %v2760
        %v3274 = vadd.s32 %v2820, %v2761
        %v3275 = vadd.s32 %v2820, %v2762
        %v3276 = vadd.s32 %v2820, %v2763
        %v3277 = vadd.s32 %v2820, %v2764
        %v3278 = vadd.s32 %v2820, %v2765
        %v3279 = vadd.s32 %v2820, %v2766
        %v3280 = vadd.s32 %v2820, %v2767
        %v3281 = vadd.s32 %v2820, %v2768
        %v3282 = vadd.s32 %v2820, %v2769
        %v3283 = vadd.s32 %v2820, %v2770
        %v3284 = vadd.s32 %v2820, %v2771
        %v3285 = vadd.s32 %v2820, %v2772
        %v3286 = vadd.s32 %v2820, %v2773
        %v3287 = vadd.s32 %v2820, %v2774
        %v3288 = vadd.s32 %v2820, %v2775
        %v3289 = vadd.s32 %v2820, %v2776
        %v3290 = vadd.s32 %v2820, %v2777
        %v3291 = vadd.s32 %v2820, %v2778
        %v3292 = vadd.s32 %v2820, %v2779
        %v3293 = vadd.s32 %v2820, %v2780
        %v3294 = vadd.s32 %v2820, %v2781
        %v3295 = vadd.s32 %v2820, %v2782
        %v3296 = vadd.s32 %v2820, %v2783
        %v3297 = vadd.s32 %v2820, %v2784
        %v3298 = vadd.s32 %v2820, %v2785
        %v3299 = vadd.s32 %v2820, %v2786
        %v3300 = vadd.s32 %v2820, %v2787
        %v3301 = vadd.s32 %v2820, %v2788
        %v3302 = vadd.s32 %v2820, %v2789
        %v3303 = vadd.s32 %v2820, %v2790
        %v3304 = vadd.s32 %v2820, %v2791
        %v3305 = vadd.s32 %v2820, %v2792
        %v3306 = vadd.s32 %v2820, %v2793
        %v3307 = vadd.s32 %v2820, %v2794
        %v3308 = vadd.s32 %v2820, %v2795
        %v3309 = vadd.s32 %v2820, %v2796
        %v3310 = vadd.s32 %v2820, %v2797
        %v3311 = vadd.s32 %v2820, %v2798
        %v3312 = vadd.s32 %v2820, %v2799
        %v3313 = vadd.s32 %v2820, %v2800
        %v3314 = vadd.s32 %v2820, %v2801
        %v3315 = vadd.s32 %v2820, %v2802
        %v3316 = vadd.s32 %v2820, %v2803
        %v3317 = vadd.s32 %v2820, %v2804
        %v3318 = vadd.s32 %v2820, %v2805
        %v3319 = vadd.s32 %v2820, %v2806
        %v3320 = vadd.s32 %v2820, %v2807
        %v3321 = vadd.s32 %v2820, %v2808
        %v3322 = vadd.s32 %v2820, %v2809
        %v3323 = vadd.s32 %v2820, %v2810
        %v3324 = vadd.s32 %v2820, %v2811
        %v3325 = vadd.s32 %v2820, %v2812
        %v3326 = vadd.s32 %v2820, %v2813
        %v3327 = vadd.s32 %v2820, %v2814
        %v3328 = vadd.s32 %v2820, %v2815
        %v3329 = vadd.s32 %v2820, %v2816
        %v3330 = vadd.s32 %v2820, %v2817
        %v3331 = vadd.s32 %v2820, %v2818
        %v3332 = vadd.s32 %v2820, %v2819
        %vm3333 = vcmp.lt.s32.totalorder %v2821, 8
        %vm3334 = vcmp.lt.s32.totalorder %v2822, 8
        %vm3335 = vcmp.lt.s32.totalorder %v2823, 8
        %vm3336 = vcmp.lt.s32.totalorder %v2824, 8
        %vm3337 = vcmp.lt.s32.totalorder %v2825, 8
        %vm3338 = vcmp.lt.s32.totalorder %v2826, 8
        %vm3339 = vcmp.lt.s32.totalorder %v2827, 8
        %vm3340 = vcmp.lt.s32.totalorder %v2828, 8
        %vm3341 = vcmp.lt.s32.totalorder %v2829, 8
        %vm3342 = vcmp.lt.s32.totalorder %v2830, 8
        %vm3343 = vcmp.lt.s32.totalorder %v2831, 8
        %vm3344 = vcmp.lt.s32.totalorder %v2832, 8
        %vm3345 = vcmp.lt.s32.totalorder %v2833, 8
        %vm3346 = vcmp.lt.s32.totalorder %v2834, 8
        %vm3347 = vcmp.lt.s32.totalorder %v2835, 8
        %vm3348 = vcmp.lt.s32.totalorder %v2836, 8
        %vm3349 = vcmp.lt.s32.totalorder %v2837, 8
        %vm3350 = vcmp.lt.s32.totalorder %v2838, 8
        %vm3351 = vcmp.lt.s32.totalorder %v2839, 8
        %vm3352 = vcmp.lt.s32.totalorder %v2840, 8
        %vm3353 = vcmp.lt.s32.totalorder %v2841, 8
        %vm3354 = vcmp.lt.s32.totalorder %v2842, 8
        %vm3355 = vcmp.lt.s32.totalorder %v2843, 8
        %vm3356 = vcmp.lt.s32.totalorder %v2844, 8
        %vm3357 = vcmp.lt.s32.totalorder %v2845, 8
        %vm3358 = vcmp.lt.s32.totalorder %v2846, 8
        %vm3359 = vcmp.lt.s32.totalorder %v2847, 8
        %vm3360 = vcmp.lt.s32.totalorder %v2848, 8
        %vm3361 = vcmp.lt.s32.totalorder %v2849, 8
        %vm3362 = vcmp.lt.s32.totalorder %v2850, 8
        %vm3363 = vcmp.lt.s32.totalorder %v2851, 8
        %vm3364 = vcmp.lt.s32.totalorder %v2852, 8
        %vm3365 = vcmp.lt.s32.totalorder %v2853, 8
        %vm3366 = vcmp.lt.s32.totalorder %v2854, 8
        %vm3367 = vcmp.lt.s32.totalorder %v2855, 8
        %vm3368 = vcmp.lt.s32.totalorder %v2856, 8
        %vm3369 = vcmp.lt.s32.totalorder %v2857, 8
        %vm3370 = vcmp.lt.s32.totalorder %v2858, 8
        %vm3371 = vcmp.lt.s32.totalorder %v2859, 8
        %vm3372 = vcmp.lt.s32.totalorder %v2860, 8
        %vm3373 = vcmp.lt.s32.totalorder %v2861, 8
        %vm3374 = vcmp.lt.s32.totalorder %v2862, 8
        %vm3375 = vcmp.lt.s32.totalorder %v2863, 8
        %vm3376 = vcmp.lt.s32.totalorder %v2864, 8
        %vm3377 = vcmp.lt.s32.totalorder %v2865, 8
        %vm3378 = vcmp.lt.s32.totalorder %v2866, 8
        %vm3379 = vcmp.lt.s32.totalorder %v2867, 8
        %vm3380 = vcmp.lt.s32.totalorder %v2868, 8
        %vm3381 = vcmp.lt.s32.totalorder %v2869, 8
        %vm3382 = vcmp.lt.s32.totalorder %v2870, 8
        %vm3383 = vcmp.lt.s32.totalorder %v2871, 8
        %vm3384 = vcmp.lt.s32.totalorder %v2872, 8
        %vm3385 = vcmp.lt.s32.totalorder %v2873, 8
        %vm3386 = vcmp.lt.s32.totalorder %v2874, 8
        %vm3387 = vcmp.lt.s32.totalorder %v2875, 8
        %vm3388 = vcmp.lt.s32.totalorder %v2876, 8
        %vm3389 = vcmp.lt.s32.totalorder %v2877, 8
        %vm3390 = vcmp.lt.s32.totalorder %v2878, 8
        %vm3391 = vcmp.lt.s32.totalorder %v2879, 8
        %vm3392 = vcmp.lt.s32.totalorder %v2880, 8
        %vm3393 = vcmp.lt.s32.totalorder %v2881, 8
        %vm3394 = vcmp.lt.s32.totalorder %v2882, 8
        %vm3395 = vcmp.lt.s32.totalorder %v2883, 8
        %vm3396 = vcmp.lt.s32.totalorder %v2884, 8
        %vm3397 = vcmp.lt.s32.totalorder %v2885, 8
        %vm3398 = vcmp.lt.s32.totalorder %v2886, 8
        %vm3399 = vcmp.lt.s32.totalorder %v2887, 8
        %vm3400 = vcmp.lt.s32.totalorder %v2888, 8
        %vm3401 = vcmp.lt.s32.totalorder %v2889, 8
        %vm3402 = vcmp.lt.s32.totalorder %v2890, 8
        %vm3403 = vcmp.lt.s32.totalorder %v2891, 8
        %vm3404 = vcmp.lt.s32.totalorder %v2892, 8
        %vm3405 = vcmp.lt.s32.totalorder %v2893, 8
        %vm3406 = vcmp.lt.s32.totalorder %v2894, 8
        %vm3407 = vcmp.lt.s32.totalorder %v2895, 8
        %vm3408 = vcmp.lt.s32.totalorder %v2896, 8
        %vm3409 = vcmp.lt.s32.totalorder %v2897, 8
        %vm3410 = vcmp.lt.s32.totalorder %v2898, 8
        %vm3411 = vcmp.lt.s32.totalorder %v2899, 8
        %vm3412 = vcmp.lt.s32.totalorder %v2900, 8
        %vm3413 = vcmp.lt.s32.totalorder %v2901, 8
        %vm3414 = vcmp.lt.s32.totalorder %v2902, 8
        %vm3415 = vcmp.lt.s32.totalorder %v2903, 8
        %vm3416 = vcmp.lt.s32.totalorder %v2904, 8
        %vm3417 = vcmp.lt.s32.totalorder %v2905, 8
        %vm3418 = vcmp.lt.s32.totalorder %v2906, 8
        %vm3419 = vcmp.lt.s32.totalorder %v2907, 8
        %vm3420 = vcmp.lt.s32.totalorder %v2908, 8
        %vm3421 = vcmp.lt.s32.totalorder %v2909, 8
        %vm3422 = vcmp.lt.s32.totalorder %v2910, 8
        %vm3423 = vcmp.lt.s32.totalorder %v2911, 8
        %vm3424 = vcmp.lt.s32.totalorder %v2912, 8
        %vm3425 = vcmp.lt.s32.totalorder %v2913, 8
        %vm3426 = vcmp.lt.s32.totalorder %v2914, 8
        %vm3427 = vcmp.lt.s32.totalorder %v2915, 8
        %vm3428 = vcmp.lt.s32.totalorder %v2916, 8
        %vm3429 = vcmp.lt.s32.totalorder %v2917, 8
        %vm3430 = vcmp.lt.s32.totalorder %v2918, 8
        %vm3431 = vcmp.lt.s32.totalorder %v2919, 8
        %vm3432 = vcmp.lt.s32.totalorder %v2920, 8
        %vm3433 = vcmp.lt.s32.totalorder %v2921, 8
        %vm3434 = vcmp.lt.s32.totalorder %v2922, 8
        %vm3435 = vcmp.lt.s32.totalorder %v2923, 8
        %vm3436 = vcmp.lt.s32.totalorder %v2924, 8
        %vm3437 = vcmp.lt.s32.totalorder %v2925, 8
        %vm3438 = vcmp.lt.s32.totalorder %v2926, 8
        %vm3439 = vcmp.lt.s32.totalorder %v2927, 8
        %vm3440 = vcmp.lt.s32.totalorder %v2928, 8
        %vm3441 = vcmp.lt.s32.totalorder %v2929, 8
        %vm3442 = vcmp.lt.s32.totalorder %v2930, 8
        %vm3443 = vcmp.lt.s32.totalorder %v2931, 8
        %vm3444 = vcmp.lt.s32.totalorder %v2932, 8
        %vm3445 = vcmp.lt.s32.totalorder %v2933, 8
        %vm3446 = vcmp.lt.s32.totalorder %v2934, 8
        %vm3447 = vcmp.lt.s32.totalorder %v2935, 8
        %vm3448 = vcmp.lt.s32.totalorder %v2936, 8
        %vm3449 = vcmp.lt.s32.totalorder %v2937, 8
        %vm3450 = vcmp.lt.s32.totalorder %v2938, 8
        %vm3451 = vcmp.lt.s32.totalorder %v2939, 8
        %vm3452 = vcmp.lt.s32.totalorder %v2940, 8
        %vm3453 = vcmp.lt.s32.totalorder %v2941, 8
        %vm3454 = vcmp.lt.s32.totalorder %v2942, 8
        %vm3455 = vcmp.lt.s32.totalorder %v2943, 8
        %vm3456 = vcmp.lt.s32.totalorder %v2944, 8
        %vm3457 = vcmp.lt.s32.totalorder %v2945, 8
        %vm3458 = vcmp.lt.s32.totalorder %v2946, 8
        %vm3459 = vcmp.lt.s32.totalorder %v2947, 8
        %vm3460 = vcmp.lt.s32.totalorder %v2948, 8
        %vm3461 = vcmp.lt.s32.totalorder %v2949, 8
        %vm3462 = vcmp.lt.s32.totalorder %v2950, 8
        %vm3463 = vcmp.lt.s32.totalorder %v2951, 8
        %vm3464 = vcmp.lt.s32.totalorder %v2952, 8
        %vm3465 = vcmp.lt.s32.totalorder %v2953, 8
        %vm3466 = vcmp.lt.s32.totalorder %v2954, 8
        %vm3467 = vcmp.lt.s32.totalorder %v2955, 8
        %vm3468 = vcmp.lt.s32.totalorder %v2956, 8
        %vm3469 = vcmp.lt.s32.totalorder %v2957, 8
        %vm3470 = vcmp.lt.s32.totalorder %v2958, 8
        %vm3471 = vcmp.lt.s32.totalorder %v2959, 8
        %vm3472 = vcmp.lt.s32.totalorder %v2960, 8
        %vm3473 = vcmp.lt.s32.totalorder %v2961, 8
        %vm3474 = vcmp.lt.s32.totalorder %v2962, 8
        %vm3475 = vcmp.lt.s32.totalorder %v2963, 8
        %vm3476 = vcmp.lt.s32.totalorder %v2964, 8
        %vm3477 = vcmp.lt.s32.totalorder %v2965, 8
        %vm3478 = vcmp.lt.s32.totalorder %v2966, 8
        %vm3479 = vcmp.lt.s32.totalorder %v2967, 8
        %vm3480 = vcmp.lt.s32.totalorder %v2968, 8
        %vm3481 = vcmp.lt.s32.totalorder %v2969, 8
        %vm3482 = vcmp.lt.s32.totalorder %v2970, 8
        %vm3483 = vcmp.lt.s32.totalorder %v2971, 8
        %vm3484 = vcmp.lt.s32.totalorder %v2972, 8
        %vm3485 = vcmp.lt.s32.totalorder %v2973, 8
        %vm3486 = vcmp.lt.s32.totalorder %v2974, 8
        %vm3487 = vcmp.lt.s32.totalorder %v2975, 8
        %vm3488 = vcmp.lt.s32.totalorder %v2976, 8
        %vm3489 = vcmp.lt.s32.totalorder %v2977, 8
        %vm3490 = vcmp.lt.s32.totalorder %v2978, 8
        %vm3491 = vcmp.lt.s32.totalorder %v2979, 8
        %vm3492 = vcmp.lt.s32.totalorder %v2980, 8
        %vm3493 = vcmp.lt.s32.totalorder %v2981, 8
        %vm3494 = vcmp.lt.s32.totalorder %v2982, 8
        %vm3495 = vcmp.lt.s32.totalorder %v2983, 8
        %vm3496 = vcmp.lt.s32.totalorder %v2984, 8
        %vm3497 = vcmp.lt.s32.totalorder %v2985, 8
        %vm3498 = vcmp.lt.s32.totalorder %v2986, 8
        %vm3499 = vcmp.lt.s32.totalorder %v2987, 8
        %vm3500 = vcmp.lt.s32.totalorder %v2988, 8
        %vm3501 = vcmp.lt.s32.totalorder %v2989, 8
        %vm3502 = vcmp.lt.s32.totalorder %v2990, 8
        %vm3503 = vcmp.lt.s32.totalorder %v2991, 8
        %vm3504 = vcmp.lt.s32.totalorder %v2992, 8
        %vm3505 = vcmp.lt.s32.totalorder %v2993, 8
        %vm3506 = vcmp.lt.s32.totalorder %v2994, 8
        %vm3507 = vcmp.lt.s32.totalorder %v2995, 8
        %vm3508 = vcmp.lt.s32.totalorder %v2996, 8
        %vm3509 = vcmp.lt.s32.totalorder %v2997, 8
        %vm3510 = vcmp.lt.s32.totalorder %v2998, 8
        %vm3511 = vcmp.lt.s32.totalorder %v2999, 8
        %vm3512 = vcmp.lt.s32.totalorder %v3000, 8
        %vm3513 = vcmp.lt.s32.totalorder %v3001, 8
        %vm3514 = vcmp.lt.s32.totalorder %v3002, 8
        %vm3515 = vcmp.lt.s32.totalorder %v3003, 8
        %vm3516 = vcmp.lt.s32.totalorder %v3004, 8
        %vm3517 = vcmp.lt.s32.totalorder %v3005, 8
        %vm3518 = vcmp.lt.s32.totalorder %v3006, 8
        %vm3519 = vcmp.lt.s32.totalorder %v3007, 8
        %vm3520 = vcmp.lt.s32.totalorder %v3008, 8
        %vm3521 = vcmp.lt.s32.totalorder %v3009, 8
        %vm3522 = vcmp.lt.s32.totalorder %v3010, 8
        %vm3523 = vcmp.lt.s32.totalorder %v3011, 8
        %vm3524 = vcmp.lt.s32.totalorder %v3012, 8
        %vm3525 = vcmp.lt.s32.totalorder %v3013, 8
        %vm3526 = vcmp.lt.s32.totalorder %v3014, 8
        %vm3527 = vcmp.lt.s32.totalorder %v3015, 8
        %vm3528 = vcmp.lt.s32.totalorder %v3016, 8
        %vm3529 = vcmp.lt.s32.totalorder %v3017, 8
        %vm3530 = vcmp.lt.s32.totalorder %v3018, 8
        %vm3531 = vcmp.lt.s32.totalorder %v3019, 8
        %vm3532 = vcmp.lt.s32.totalorder %v3020, 8
        %vm3533 = vcmp.lt.s32.totalorder %v3021, 8
        %vm3534 = vcmp.lt.s32.totalorder %v3022, 8
        %vm3535 = vcmp.lt.s32.totalorder %v3023, 8
        %vm3536 = vcmp.lt.s32.totalorder %v3024, 8
        %vm3537 = vcmp.lt.s32.totalorder %v3025, 8
        %vm3538 = vcmp.lt.s32.totalorder %v3026, 8
        %vm3539 = vcmp.lt.s32.totalorder %v3027, 8
        %vm3540 = vcmp.lt.s32.totalorder %v3028, 8
        %vm3541 = vcmp.lt.s32.totalorder %v3029, 8
        %vm3542 = vcmp.lt.s32.totalorder %v3030, 8
        %vm3543 = vcmp.lt.s32.totalorder %v3031, 8
        %vm3544 = vcmp.lt.s32.totalorder %v3032, 8
        %vm3545 = vcmp.lt.s32.totalorder %v3033, 8
        %vm3546 = vcmp.lt.s32.totalorder %v3034, 8
        %vm3547 = vcmp.lt.s32.totalorder %v3035, 8
        %vm3548 = vcmp.lt.s32.totalorder %v3036, 8
        %vm3549 = vcmp.lt.s32.totalorder %v3037, 8
        %vm3550 = vcmp.lt.s32.totalorder %v3038, 8
        %vm3551 = vcmp.lt.s32.totalorder %v3039, 8
        %vm3552 = vcmp.lt.s32.totalorder %v3040, 8
        %vm3553 = vcmp.lt.s32.totalorder %v3041, 8
        %vm3554 = vcmp.lt.s32.totalorder %v3042, 8
        %vm3555 = vcmp.lt.s32.totalorder %v3043, 8
        %vm3556 = vcmp.lt.s32.totalorder %v3044, 8
        %vm3557 = vcmp.lt.s32.totalorder %v3045, 8
        %vm3558 = vcmp.lt.s32.totalorder %v3046, 8
        %vm3559 = vcmp.lt.s32.totalorder %v3047, 8
        %vm3560 = vcmp.lt.s32.totalorder %v3048, 8
        %vm3561 = vcmp.lt.s32.totalorder %v3049, 8
        %vm3562 = vcmp.lt.s32.totalorder %v3050, 8
        %vm3563 = vcmp.lt.s32.totalorder %v3051, 8
        %vm3564 = vcmp.lt.s32.totalorder %v3052, 8
        %vm3565 = vcmp.lt.s32.totalorder %v3053, 8
        %vm3566 = vcmp.lt.s32.totalorder %v3054, 8
        %vm3567 = vcmp.lt.s32.totalorder %v3055, 8
        %vm3568 = vcmp.lt.s32.totalorder %v3056, 8
        %vm3569 = vcmp.lt.s32.totalorder %v3057, 8
        %vm3570 = vcmp.lt.s32.totalorder %v3058, 8
        %vm3571 = vcmp.lt.s32.totalorder %v3059, 8
        %vm3572 = vcmp.lt.s32.totalorder %v3060, 8
        %vm3573 = vcmp.lt.s32.totalorder %v3061, 8
        %vm3574 = vcmp.lt.s32.totalorder %v3062, 8
        %vm3575 = vcmp.lt.s32.totalorder %v3063, 8
        %vm3576 = vcmp.lt.s32.totalorder %v3064, 8
        %vm3577 = vcmp.lt.s32.totalorder %v3065, 8
        %vm3578 = vcmp.lt.s32.totalorder %v3066, 8
        %vm3579 = vcmp.lt.s32.totalorder %v3067, 8
        %vm3580 = vcmp.lt.s32.totalorder %v3068, 8
        %vm3581 = vcmp.lt.s32.totalorder %v3069, 8
        %vm3582 = vcmp.lt.s32.totalorder %v3070, 8
        %vm3583 = vcmp.lt.s32.totalorder %v3071, 8
        %vm3584 = vcmp.lt.s32.totalorder %v3072, 8
        %vm3585 = vcmp.lt.s32.totalorder %v3073, 8
        %vm3586 = vcmp.lt.s32.totalorder %v3074, 8
        %vm3587 = vcmp.lt.s32.totalorder %v3075, 8
        %vm3588 = vcmp.lt.s32.totalorder %v3076, 8
        %vm3589 = vcmp.lt.s32.totalorder %v3077, 8
        %vm3590 = vcmp.lt.s32.totalorder %v3078, 8
        %vm3591 = vcmp.lt.s32.totalorder %v3079, 8
        %vm3592 = vcmp.lt.s32.totalorder %v3080, 8
        %vm3593 = vcmp.lt.s32.totalorder %v3081, 8
        %vm3594 = vcmp.lt.s32.totalorder %v3082, 8
        %vm3595 = vcmp.lt.s32.totalorder %v3083, 8
        %vm3596 = vcmp.lt.s32.totalorder %v3084, 8
        %vm3597 = vcmp.lt.s32.totalorder %v3085, 8
        %vm3598 = vcmp.lt.s32.totalorder %v3086, 8
        %vm3599 = vcmp.lt.s32.totalorder %v3087, 8
        %vm3600 = vcmp.lt.s32.totalorder %v3088, 8
        %vm3601 = vcmp.lt.s32.totalorder %v3089, 8
        %vm3602 = vcmp.lt.s32.totalorder %v3090, 8
        %vm3603 = vcmp.lt.s32.totalorder %v3091, 8
        %vm3604 = vcmp.lt.s32.totalorder %v3092, 8
        %vm3605 = vcmp.lt.s32.totalorder %v3093, 8
        %vm3606 = vcmp.lt.s32.totalorder %v3094, 8
        %vm3607 = vcmp.lt.s32.totalorder %v3095, 8
        %vm3608 = vcmp.lt.s32.totalorder %v3096, 8
        %vm3609 = vcmp.lt.s32.totalorder %v3097, 8
        %vm3610 = vcmp.lt.s32.totalorder %v3098, 8
        %vm3611 = vcmp.lt.s32.totalorder %v3099, 8
        %vm3612 = vcmp.lt.s32.totalorder %v3100, 8
        %vm3613 = vcmp.lt.s32.totalorder %v3101, 8
        %vm3614 = vcmp.lt.s32.totalorder %v3102, 8
        %vm3615 = vcmp.lt.s32.totalorder %v3103, 8
        %vm3616 = vcmp.lt.s32.totalorder %v3104, 8
        %vm3617 = vcmp.lt.s32.totalorder %v3105, 8
        %vm3618 = vcmp.lt.s32.totalorder %v3106, 8
        %vm3619 = vcmp.lt.s32.totalorder %v3107, 8
        %vm3620 = vcmp.lt.s32.totalorder %v3108, 8
        %vm3621 = vcmp.lt.s32.totalorder %v3109, 8
        %vm3622 = vcmp.lt.s32.totalorder %v3110, 8
        %vm3623 = vcmp.lt.s32.totalorder %v3111, 8
        %vm3624 = vcmp.lt.s32.totalorder %v3112, 8
        %vm3625 = vcmp.lt.s32.totalorder %v3113, 8
        %vm3626 = vcmp.lt.s32.totalorder %v3114, 8
        %vm3627 = vcmp.lt.s32.totalorder %v3115, 8
        %vm3628 = vcmp.lt.s32.totalorder %v3116, 8
        %vm3629 = vcmp.lt.s32.totalorder %v3117, 8
        %vm3630 = vcmp.lt.s32.totalorder %v3118, 8
        %vm3631 = vcmp.lt.s32.totalorder %v3119, 8
        %vm3632 = vcmp.lt.s32.totalorder %v3120, 8
        %vm3633 = vcmp.lt.s32.totalorder %v3121, 8
        %vm3634 = vcmp.lt.s32.totalorder %v3122, 8
        %vm3635 = vcmp.lt.s32.totalorder %v3123, 8
        %vm3636 = vcmp.lt.s32.totalorder %v3124, 8
        %vm3637 = vcmp.lt.s32.totalorder %v3125, 8
        %vm3638 = vcmp.lt.s32.totalorder %v3126, 8
        %vm3639 = vcmp.lt.s32.totalorder %v3127, 8
        %vm3640 = vcmp.lt.s32.totalorder %v3128, 8
        %vm3641 = vcmp.lt.s32.totalorder %v3129, 8
        %vm3642 = vcmp.lt.s32.totalorder %v3130, 8
        %vm3643 = vcmp.lt.s32.totalorder %v3131, 8
        %vm3644 = vcmp.lt.s32.totalorder %v3132, 8
        %vm3645 = vcmp.lt.s32.totalorder %v3133, 8
        %vm3646 = vcmp.lt.s32.totalorder %v3134, 8
        %vm3647 = vcmp.lt.s32.totalorder %v3135, 8
        %vm3648 = vcmp.lt.s32.totalorder %v3136, 8
        %vm3649 = vcmp.lt.s32.totalorder %v3137, 8
        %vm3650 = vcmp.lt.s32.totalorder %v3138, 8
        %vm3651 = vcmp.lt.s32.totalorder %v3139, 8
        %vm3652 = vcmp.lt.s32.totalorder %v3140, 8
        %vm3653 = vcmp.lt.s32.totalorder %v3141, 8
        %vm3654 = vcmp.lt.s32.totalorder %v3142, 8
        %vm3655 = vcmp.lt.s32.totalorder %v3143, 8
        %vm3656 = vcmp.lt.s32.totalorder %v3144, 8
        %vm3657 = vcmp.lt.s32.totalorder %v3145, 8
        %vm3658 = vcmp.lt.s32.totalorder %v3146, 8
        %vm3659 = vcmp.lt.s32.totalorder %v3147, 8
        %vm3660 = vcmp.lt.s32.totalorder %v3148, 8
        %vm3661 = vcmp.lt.s32.totalorder %v3149, 8
        %vm3662 = vcmp.lt.s32.totalorder %v3150, 8
        %vm3663 = vcmp.lt.s32.totalorder %v3151, 8
        %vm3664 = vcmp.lt.s32.totalorder %v3152, 8
        %vm3665 = vcmp.lt.s32.totalorder %v3153, 8
        %vm3666 = vcmp.lt.s32.totalorder %v3154, 8
        %vm3667 = vcmp.lt.s32.totalorder %v3155, 8
        %vm3668 = vcmp.lt.s32.totalorder %v3156, 8
        %vm3669 = vcmp.lt.s32.totalorder %v3157, 8
        %vm3670 = vcmp.lt.s32.totalorder %v3158, 8
        %vm3671 = vcmp.lt.s32.totalorder %v3159, 8
        %vm3672 = vcmp.lt.s32.totalorder %v3160, 8
        %vm3673 = vcmp.lt.s32.totalorder %v3161, 8
        %vm3674 = vcmp.lt.s32.totalorder %v3162, 8
        %vm3675 = vcmp.lt.s32.totalorder %v3163, 8
        %vm3676 = vcmp.lt.s32.totalorder %v3164, 8
        %vm3677 = vcmp.lt.s32.totalorder %v3165, 8
        %vm3678 = vcmp.lt.s32.totalorder %v3166, 8
        %vm3679 = vcmp.lt.s32.totalorder %v3167, 8
        %vm3680 = vcmp.lt.s32.totalorder %v3168, 8
        %vm3681 = vcmp.lt.s32.totalorder %v3169, 8
        %vm3682 = vcmp.lt.s32.totalorder %v3170, 8
        %vm3683 = vcmp.lt.s32.totalorder %v3171, 8
        %vm3684 = vcmp.lt.s32.totalorder %v3172, 8
        %vm3685 = vcmp.lt.s32.totalorder %v3173, 8
        %vm3686 = vcmp.lt.s32.totalorder %v3174, 8
        %vm3687 = vcmp.lt.s32.totalorder %v3175, 8
        %vm3688 = vcmp.lt.s32.totalorder %v3176, 8
        %vm3689 = vcmp.lt.s32.totalorder %v3177, 8
        %vm3690 = vcmp.lt.s32.totalorder %v3178, 8
        %vm3691 = vcmp.lt.s32.totalorder %v3179, 8
        %vm3692 = vcmp.lt.s32.totalorder %v3180, 8
        %vm3693 = vcmp.lt.s32.totalorder %v3181, 8
        %vm3694 = vcmp.lt.s32.totalorder %v3182, 8
        %vm3695 = vcmp.lt.s32.totalorder %v3183, 8
        %vm3696 = vcmp.lt.s32.totalorder %v3184, 8
        %vm3697 = vcmp.lt.s32.totalorder %v3185, 8
        %vm3698 = vcmp.lt.s32.totalorder %v3186, 8
        %vm3699 = vcmp.lt.s32.totalorder %v3187, 8
        %vm3700 = vcmp.lt.s32.totalorder %v3188, 8
        %vm3701 = vcmp.lt.s32.totalorder %v3189, 8
        %vm3702 = vcmp.lt.s32.totalorder %v3190, 8
        %vm3703 = vcmp.lt.s32.totalorder %v3191, 8
        %vm3704 = vcmp.lt.s32.totalorder %v3192, 8
        %vm3705 = vcmp.lt.s32.totalorder %v3193, 8
        %vm3706 = vcmp.lt.s32.totalorder %v3194, 8
        %vm3707 = vcmp.lt.s32.totalorder %v3195, 8
        %vm3708 = vcmp.lt.s32.totalorder %v3196, 8
        %vm3709 = vcmp.lt.s32.totalorder %v3197, 8
        %vm3710 = vcmp.lt.s32.totalorder %v3198, 8
        %vm3711 = vcmp.lt.s32.totalorder %v3199, 8
        %vm3712 = vcmp.lt.s32.totalorder %v3200, 8
        %vm3713 = vcmp.lt.s32.totalorder %v3201, 8
        %vm3714 = vcmp.lt.s32.totalorder %v3202, 8
        %vm3715 = vcmp.lt.s32.totalorder %v3203, 8
        %vm3716 = vcmp.lt.s32.totalorder %v3204, 8
        %vm3717 = vcmp.lt.s32.totalorder %v3205, 8
        %vm3718 = vcmp.lt.s32.totalorder %v3206, 8
        %vm3719 = vcmp.lt.s32.totalorder %v3207, 8
        %vm3720 = vcmp.lt.s32.totalorder %v3208, 8
        %vm3721 = vcmp.lt.s32.totalorder %v3209, 8
        %vm3722 = vcmp.lt.s32.totalorder %v3210, 8
        %vm3723 = vcmp.lt.s32.totalorder %v3211, 8
        %vm3724 = vcmp.lt.s32.totalorder %v3212, 8
        %vm3725 = vcmp.lt.s32.totalorder %v3213, 8
        %vm3726 = vcmp.lt.s32.totalorder %v3214, 8
        %vm3727 = vcmp.lt.s32.totalorder %v3215, 8
        %vm3728 = vcmp.lt.s32.totalorder %v3216, 8
        %vm3729 = vcmp.lt.s32.totalorder %v3217, 8
        %vm3730 = vcmp.lt.s32.totalorder %v3218, 8
        %vm3731 = vcmp.lt.s32.totalorder %v3219, 8
        %vm3732 = vcmp.lt.s32.totalorder %v3220, 8
        %vm3733 = vcmp.lt.s32.totalorder %v3221, 8
        %vm3734 = vcmp.lt.s32.totalorder %v3222, 8
        %vm3735 = vcmp.lt.s32.totalorder %v3223, 8
        %vm3736 = vcmp.lt.s32.totalorder %v3224, 8
        %vm3737 = vcmp.lt.s32.totalorder %v3225, 8
        %vm3738 = vcmp.lt.s32.totalorder %v3226, 8
        %vm3739 = vcmp.lt.s32.totalorder %v3227, 8
        %vm3740 = vcmp.lt.s32.totalorder %v3228, 8
        %vm3741 = vcmp.lt.s32.totalorder %v3229, 8
        %vm3742 = vcmp.lt.s32.totalorder %v3230, 8
        %vm3743 = vcmp.lt.s32.totalorder %v3231, 8
        %vm3744 = vcmp.lt.s32.totalorder %v3232, 8
        %vm3745 = vcmp.lt.s32.totalorder %v3233, 8
        %vm3746 = vcmp.lt.s32.totalorder %v3234, 8
        %vm3747 = vcmp.lt.s32.totalorder %v3235, 8
        %vm3748 = vcmp.lt.s32.totalorder %v3236, 8
        %vm3749 = vcmp.lt.s32.totalorder %v3237, 8
        %vm3750 = vcmp.lt.s32.totalorder %v3238, 8
        %vm3751 = vcmp.lt.s32.totalorder %v3239, 8
        %vm3752 = vcmp.lt.s32.totalorder %v3240, 8
        %vm3753 = vcmp.lt.s32.totalorder %v3241, 8
        %vm3754 = vcmp.lt.s32.totalorder %v3242, 8
        %vm3755 = vcmp.lt.s32.totalorder %v3243, 8
        %vm3756 = vcmp.lt.s32.totalorder %v3244, 8
        %vm3757 = vcmp.lt.s32.totalorder %v3245, 8
        %vm3758 = vcmp.lt.s32.totalorder %v3246, 8
        %vm3759 = vcmp.lt.s32.totalorder %v3247, 8
        %vm3760 = vcmp.lt.s32.totalorder %v3248, 8
        %vm3761 = vcmp.lt.s32.totalorder %v3249, 8
        %vm3762 = vcmp.lt.s32.totalorder %v3250, 8
        %vm3763 = vcmp.lt.s32.totalorder %v3251, 8
        %vm3764 = vcmp.lt.s32.totalorder %v3252, 8
        %vm3765 = vcmp.lt.s32.totalorder %v3253, 8
        %vm3766 = vcmp.lt.s32.totalorder %v3254, 8
        %vm3767 = vcmp.lt.s32.totalorder %v3255, 8
        %vm3768 = vcmp.lt.s32.totalorder %v3256, 8
        %vm3769 = vcmp.lt.s32.totalorder %v3257, 8
        %vm3770 = vcmp.lt.s32.totalorder %v3258, 8
        %vm3771 = vcmp.lt.s32.totalorder %v3259, 8
        %vm3772 = vcmp.lt.s32.totalorder %v3260, 8
        %vm3773 = vcmp.lt.s32.totalorder %v3261, 8
        %vm3774 = vcmp.lt.s32.totalorder %v3262, 8
        %vm3775 = vcmp.lt.s32.totalorder %v3263, 8
        %vm3776 = vcmp.lt.s32.totalorder %v3264, 8
        %vm3777 = vcmp.lt.s32.totalorder %v3265, 8
        %vm3778 = vcmp.lt.s32.totalorder %v3266, 8
        %vm3779 = vcmp.lt.s32.totalorder %v3267, 8
        %vm3780 = vcmp.lt.s32.totalorder %v3268, 8
        %vm3781 = vcmp.lt.s32.totalorder %v3269, 8
        %vm3782 = vcmp.lt.s32.totalorder %v3270, 8
        %vm3783 = vcmp.lt.s32.totalorder %v3271, 8
        %vm3784 = vcmp.lt.s32.totalorder %v3272, 8
        %vm3785 = vcmp.lt.s32.totalorder %v3273, 8
        %vm3786 = vcmp.lt.s32.totalorder %v3274, 8
        %vm3787 = vcmp.lt.s32.totalorder %v3275, 8
        %vm3788 = vcmp.lt.s32.totalorder %v3276, 8
        %vm3789 = vcmp.lt.s32.totalorder %v3277, 8
        %vm3790 = vcmp.lt.s32.totalorder %v3278, 8
        %vm3791 = vcmp.lt.s32.totalorder %v3279, 8
        %vm3792 = vcmp.lt.s32.totalorder %v3280, 8
        %vm3793 = vcmp.lt.s32.totalorder %v3281, 8
        %vm3794 = vcmp.lt.s32.totalorder %v3282, 8
        %vm3795 = vcmp.lt.s32.totalorder %v3283, 8
        %vm3796 = vcmp.lt.s32.totalorder %v3284, 8
        %vm3797 = vcmp.lt.s32.totalorder %v3285, 8
        %vm3798 = vcmp.lt.s32.totalorder %v3286, 8
        %vm3799 = vcmp.lt.s32.totalorder %v3287, 8
        %vm3800 = vcmp.lt.s32.totalorder %v3288, 8
        %vm3801 = vcmp.lt.s32.totalorder %v3289, 8
        %vm3802 = vcmp.lt.s32.totalorder %v3290, 8
        %vm3803 = vcmp.lt.s32.totalorder %v3291, 8
        %vm3804 = vcmp.lt.s32.totalorder %v3292, 8
        %vm3805 = vcmp.lt.s32.totalorder %v3293, 8
        %vm3806 = vcmp.lt.s32.totalorder %v3294, 8
        %vm3807 = vcmp.lt.s32.totalorder %v3295, 8
        %vm3808 = vcmp.lt.s32.totalorder %v3296, 8
        %vm3809 = vcmp.lt.s32.totalorder %v3297, 8
        %vm3810 = vcmp.lt.s32.totalorder %v3298, 8
        %vm3811 = vcmp.lt.s32.totalorder %v3299, 8
        %vm3812 = vcmp.lt.s32.totalorder %v3300, 8
        %vm3813 = vcmp.lt.s32.totalorder %v3301, 8
        %vm3814 = vcmp.lt.s32.totalorder %v3302, 8
        %vm3815 = vcmp.lt.s32.totalorder %v3303, 8
        %vm3816 = vcmp.lt.s32.totalorder %v3304, 8
        %vm3817 = vcmp.lt.s32.totalorder %v3305, 8
        %vm3818 = vcmp.lt.s32.totalorder %v3306, 8
        %vm3819 = vcmp.lt.s32.totalorder %v3307, 8
        %vm3820 = vcmp.lt.s32.totalorder %v3308, 8
        %vm3821 = vcmp.lt.s32.totalorder %v3309, 8
        %vm3822 = vcmp.lt.s32.totalorder %v3310, 8
        %vm3823 = vcmp.lt.s32.totalorder %v3311, 8
        %vm3824 = vcmp.lt.s32.totalorder %v3312, 8
        %vm3825 = vcmp.lt.s32.totalorder %v3313, 8
        %vm3826 = vcmp.lt.s32.totalorder %v3314, 8
        %vm3827 = vcmp.lt.s32.totalorder %v3315, 8
        %vm3828 = vcmp.lt.s32.totalorder %v3316, 8
        %vm3829 = vcmp.lt.s32.totalorder %v3317, 8
        %vm3830 = vcmp.lt.s32.totalorder %v3318, 8
        %vm3831 = vcmp.lt.s32.totalorder %v3319, 8
        %vm3832 = vcmp.lt.s32.totalorder %v3320, 8
        %vm3833 = vcmp.lt.s32.totalorder %v3321, 8
        %vm3834 = vcmp.lt.s32.totalorder %v3322, 8
        %vm3835 = vcmp.lt.s32.totalorder %v3323, 8
        %vm3836 = vcmp.lt.s32.totalorder %v3324, 8
        %vm3837 = vcmp.lt.s32.totalorder %v3325, 8
        %vm3838 = vcmp.lt.s32.totalorder %v3326, 8
        %vm3839 = vcmp.lt.s32.totalorder %v3327, 8
        %vm3840 = vcmp.lt.s32.totalorder %v3328, 8
        %vm3841 = vcmp.lt.s32.totalorder %v3329, 8
        %vm3842 = vcmp.lt.s32.totalorder %v3330, 8
        %vm3843 = vcmp.lt.s32.totalorder %v3331, 8
        %vm3844 = vcmp.lt.s32.totalorder %v3332, 8
        %v3845 = vsel %vm3333, %v1793, 0.0
        %v3846 = vsel %vm3334, %v1794, 0.0
        %v3847 = vsel %vm3335, %v1795, 0.0
        %v3848 = vsel %vm3336, %v1796, 0.0
        %v3849 = vsel %vm3337, %v1797, 0.0
        %v3850 = vsel %vm3338, %v1798, 0.0
        %v3851 = vsel %vm3339, %v1799, 0.0
        %v3852 = vsel %vm3340, %v1800, 0.0
        %v3853 = vsel %vm3341, %v1801, 0.0
        %v3854 = vsel %vm3342, %v1802, 0.0
        %v3855 = vsel %vm3343, %v1803, 0.0
        %v3856 = vsel %vm3344, %v1804, 0.0
        %v3857 = vsel %vm3345, %v1805, 0.0
        %v3858 = vsel %vm3346, %v1806, 0.0
        %v3859 = vsel %vm3347, %v1807, 0.0
        %v3860 = vsel %vm3348, %v1808, 0.0
        %v3861 = vsel %vm3349, %v1809, 0.0
        %v3862 = vsel %vm3350, %v1810, 0.0
        %v3863 = vsel %vm3351, %v1811, 0.0
        %v3864 = vsel %vm3352, %v1812, 0.0
        %v3865 = vsel %vm3353, %v1813, 0.0
        %v3866 = vsel %vm3354, %v1814, 0.0
        %v3867 = vsel %vm3355, %v1815, 0.0
        %v3868 = vsel %vm3356, %v1816, 0.0
        %v3869 = vsel %vm3357, %v1817, 0.0
        %v3870 = vsel %vm3358, %v1818, 0.0
        %v3871 = vsel %vm3359, %v1819, 0.0
        %v3872 = vsel %vm3360, %v1820, 0.0
        %v3873 = vsel %vm3361, %v1821, 0.0
        %v3874 = vsel %vm3362, %v1822, 0.0
        %v3875 = vsel %vm3363, %v1823, 0.0
        %v3876 = vsel %vm3364, %v1824, 0.0
        %v3877 = vsel %vm3365, %v1825, 0.0
        %v3878 = vsel %vm3366, %v1826, 0.0
        %v3879 = vsel %vm3367, %v1827, 0.0
        %v3880 = vsel %vm3368, %v1828, 0.0
        %v3881 = vsel %vm3369, %v1829, 0.0
        %v3882 = vsel %vm3370, %v1830, 0.0
        %v3883 = vsel %vm3371, %v1831, 0.0
        %v3884 = vsel %vm3372, %v1832, 0.0
        %v3885 = vsel %vm3373, %v1833, 0.0
        %v3886 = vsel %vm3374, %v1834, 0.0
        %v3887 = vsel %vm3375, %v1835, 0.0
        %v3888 = vsel %vm3376, %v1836, 0.0
        %v3889 = vsel %vm3377, %v1837, 0.0
        %v3890 = vsel %vm3378, %v1838, 0.0
        %v3891 = vsel %vm3379, %v1839, 0.0
        %v3892 = vsel %vm3380, %v1840, 0.0
        %v3893 = vsel %vm3381, %v1841, 0.0
        %v3894 = vsel %vm3382, %v1842, 0.0
        %v3895 = vsel %vm3383, %v1843, 0.0
        %v3896 = vsel %vm3384, %v1844, 0.0
        %v3897 = vsel %vm3385, %v1845, 0.0
        %v3898 = vsel %vm3386, %v1846, 0.0
        %v3899 = vsel %vm3387, %v1847, 0.0
        %v3900 = vsel %vm3388, %v1848, 0.0
        %v3901 = vsel %vm3389, %v1849, 0.0
        %v3902 = vsel %vm3390, %v1850, 0.0
        %v3903 = vsel %vm3391, %v1851, 0.0
        %v3904 = vsel %vm3392, %v1852, 0.0
        %v3905 = vsel %vm3393, %v1853, 0.0
        %v3906 = vsel %vm3394, %v1854, 0.0
        %v3907 = vsel %vm3395, %v1855, 0.0
        %v3908 = vsel %vm3396, %v1856, 0.0
        %v3909 = vsel %vm3397, %v1857, 0.0
        %v3910 = vsel %vm3398, %v1858, 0.0
        %v3911 = vsel %vm3399, %v1859, 0.0
        %v3912 = vsel %vm3400, %v1860, 0.0
        %v3913 = vsel %vm3401, %v1861, 0.0
        %v3914 = vsel %vm3402, %v1862, 0.0
        %v3915 = vsel %vm3403, %v1863, 0.0
        %v3916 = vsel %vm3404, %v1864, 0.0
        %v3917 = vsel %vm3405, %v1865, 0.0
        %v3918 = vsel %vm3406, %v1866, 0.0
        %v3919 = vsel %vm3407, %v1867, 0.0
        %v3920 = vsel %vm3408, %v1868, 0.0
        %v3921 = vsel %vm3409, %v1869, 0.0
        %v3922 = vsel %vm3410, %v1870, 0.0
        %v3923 = vsel %vm3411, %v1871, 0.0
        %v3924 = vsel %vm3412, %v1872, 0.0
        %v3925 = vsel %vm3413, %v1873, 0.0
        %v3926 = vsel %vm3414, %v1874, 0.0
        %v3927 = vsel %vm3415, %v1875, 0.0
        %v3928 = vsel %vm3416, %v1876, 0.0
        %v3929 = vsel %vm3417, %v1877, 0.0
        %v3930 = vsel %vm3418, %v1878, 0.0
        %v3931 = vsel %vm3419, %v1879, 0.0
        %v3932 = vsel %vm3420, %v1880, 0.0
        %v3933 = vsel %vm3421, %v1881, 0.0
        %v3934 = vsel %vm3422, %v1882, 0.0
        %v3935 = vsel %vm3423, %v1883, 0.0
        %v3936 = vsel %vm3424, %v1884, 0.0
        %v3937 = vsel %vm3425, %v1885, 0.0
        %v3938 = vsel %vm3426, %v1886, 0.0
        %v3939 = vsel %vm3427, %v1887, 0.0
        %v3940 = vsel %vm3428, %v1888, 0.0
        %v3941 = vsel %vm3429, %v1889, 0.0
        %v3942 = vsel %vm3430, %v1890, 0.0
        %v3943 = vsel %vm3431, %v1891, 0.0
        %v3944 = vsel %vm3432, %v1892, 0.0
        %v3945 = vsel %vm3433, %v1893, 0.0
        %v3946 = vsel %vm3434, %v1894, 0.0
        %v3947 = vsel %vm3435, %v1895, 0.0
        %v3948 = vsel %vm3436, %v1896, 0.0
        %v3949 = vsel %vm3437, %v1897, 0.0
        %v3950 = vsel %vm3438, %v1898, 0.0
        %v3951 = vsel %vm3439, %v1899, 0.0
        %v3952 = vsel %vm3440, %v1900, 0.0
        %v3953 = vsel %vm3441, %v1901, 0.0
        %v3954 = vsel %vm3442, %v1902, 0.0
        %v3955 = vsel %vm3443, %v1903, 0.0
        %v3956 = vsel %vm3444, %v1904, 0.0
        %v3957 = vsel %vm3445, %v1905, 0.0
        %v3958 = vsel %vm3446, %v1906, 0.0
        %v3959 = vsel %vm3447, %v1907, 0.0
        %v3960 = vsel %vm3448, %v1908, 0.0
        %v3961 = vsel %vm3449, %v1909, 0.0
        %v3962 = vsel %vm3450, %v1910, 0.0
        %v3963 = vsel %vm3451, %v1911, 0.0
        %v3964 = vsel %vm3452, %v1912, 0.0
        %v3965 = vsel %vm3453, %v1913, 0.0
        %v3966 = vsel %vm3454, %v1914, 0.0
        %v3967 = vsel %vm3455, %v1915, 0.0
        %v3968 = vsel %vm3456, %v1916, 0.0
        %v3969 = vsel %vm3457, %v1917, 0.0
        %v3970 = vsel %vm3458, %v1918, 0.0
        %v3971 = vsel %vm3459, %v1919, 0.0
        %v3972 = vsel %vm3460, %v1920, 0.0
        %v3973 = vsel %vm3461, %v1921, 0.0
        %v3974 = vsel %vm3462, %v1922, 0.0
        %v3975 = vsel %vm3463, %v1923, 0.0
        %v3976 = vsel %vm3464, %v1924, 0.0
        %v3977 = vsel %vm3465, %v1925, 0.0
        %v3978 = vsel %vm3466, %v1926, 0.0
        %v3979 = vsel %vm3467, %v1927, 0.0
        %v3980 = vsel %vm3468, %v1928, 0.0
        %v3981 = vsel %vm3469, %v1929, 0.0
        %v3982 = vsel %vm3470, %v1930, 0.0
        %v3983 = vsel %vm3471, %v1931, 0.0
        %v3984 = vsel %vm3472, %v1932, 0.0
        %v3985 = vsel %vm3473, %v1933, 0.0
        %v3986 = vsel %vm3474, %v1934, 0.0
        %v3987 = vsel %vm3475, %v1935, 0.0
        %v3988 = vsel %vm3476, %v1936, 0.0
        %v3989 = vsel %vm3477, %v1937, 0.0
        %v3990 = vsel %vm3478, %v1938, 0.0
        %v3991 = vsel %vm3479, %v1939, 0.0
        %v3992 = vsel %vm3480, %v1940, 0.0
        %v3993 = vsel %vm3481, %v1941, 0.0
        %v3994 = vsel %vm3482, %v1942, 0.0
        %v3995 = vsel %vm3483, %v1943, 0.0
        %v3996 = vsel %vm3484, %v1944, 0.0
        %v3997 = vsel %vm3485, %v1945, 0.0
        %v3998 = vsel %vm3486, %v1946, 0.0
        %v3999 = vsel %vm3487, %v1947, 0.0
        %v4000 = vsel %vm3488, %v1948, 0.0
        %v4001 = vsel %vm3489, %v1949, 0.0
        %v4002 = vsel %vm3490, %v1950, 0.0
        %v4003 = vsel %vm3491, %v1951, 0.0
        %v4004 = vsel %vm3492, %v1952, 0.0
        %v4005 = vsel %vm3493, %v1953, 0.0
        %v4006 = vsel %vm3494, %v1954, 0.0
        %v4007 = vsel %vm3495, %v1955, 0.0
        %v4008 = vsel %vm3496, %v1956, 0.0
        %v4009 = vsel %vm3497, %v1957, 0.0
        %v4010 = vsel %vm3498, %v1958, 0.0
        %v4011 = vsel %vm3499, %v1959, 0.0
        %v4012 = vsel %vm3500, %v1960, 0.0
        %v4013 = vsel %vm3501, %v1961, 0.0
        %v4014 = vsel %vm3502, %v1962, 0.0
        %v4015 = vsel %vm3503, %v1963, 0.0
        %v4016 = vsel %vm3504, %v1964, 0.0
        %v4017 = vsel %vm3505, %v1965, 0.0
        %v4018 = vsel %vm3506, %v1966, 0.0
        %v4019 = vsel %vm3507, %v1967, 0.0
        %v4020 = vsel %vm3508, %v1968, 0.0
        %v4021 = vsel %vm3509, %v1969, 0.0
        %v4022 = vsel %vm3510, %v1970, 0.0
        %v4023 = vsel %vm3511, %v1971, 0.0
        %v4024 = vsel %vm3512, %v1972, 0.0
        %v4025 = vsel %vm3513, %v1973, 0.0
        %v4026 = vsel %vm3514, %v1974, 0.0
        %v4027 = vsel %vm3515, %v1975, 0.0
        %v4028 = vsel %vm3516, %v1976, 0.0
        %v4029 = vsel %vm3517, %v1977, 0.0
        %v4030 = vsel %vm3518, %v1978, 0.0
        %v4031 = vsel %vm3519, %v1979, 0.0
        %v4032 = vsel %vm3520, %v1980, 0.0
        %v4033 = vsel %vm3521, %v1981, 0.0
        %v4034 = vsel %vm3522, %v1982, 0.0
        %v4035 = vsel %vm3523, %v1983, 0.0
        %v4036 = vsel %vm3524, %v1984, 0.0
        %v4037 = vsel %vm3525, %v1985, 0.0
        %v4038 = vsel %vm3526, %v1986, 0.0
        %v4039 = vsel %vm3527, %v1987, 0.0
        %v4040 = vsel %vm3528, %v1988, 0.0
        %v4041 = vsel %vm3529, %v1989, 0.0
        %v4042 = vsel %vm3530, %v1990, 0.0
        %v4043 = vsel %vm3531, %v1991, 0.0
        %v4044 = vsel %vm3532, %v1992, 0.0
        %v4045 = vsel %vm3533, %v1993, 0.0
        %v4046 = vsel %vm3534, %v1994, 0.0
        %v4047 = vsel %vm3535, %v1995, 0.0
        %v4048 = vsel %vm3536, %v1996, 0.0
        %v4049 = vsel %vm3537, %v1997, 0.0
        %v4050 = vsel %vm3538, %v1998, 0.0
        %v4051 = vsel %vm3539, %v1999, 0.0
        %v4052 = vsel %vm3540, %v2000, 0.0
        %v4053 = vsel %vm3541, %v2001, 0.0
        %v4054 = vsel %vm3542, %v2002, 0.0
        %v4055 = vsel %vm3543, %v2003, 0.0
        %v4056 = vsel %vm3544, %v2004, 0.0
        %v4057 = vsel %vm3545, %v2005, 0.0
        %v4058 = vsel %vm3546, %v2006, 0.0
        %v4059 = vsel %vm3547, %v2007, 0.0
        %v4060 = vsel %vm3548, %v2008, 0.0
        %v4061 = vsel %vm3549, %v2009, 0.0
        %v4062 = vsel %vm3550, %v2010, 0.0
        %v4063 = vsel %vm3551, %v2011, 0.0
        %v4064 = vsel %vm3552, %v2012, 0.0
        %v4065 = vsel %vm3553, %v2013, 0.0
        %v4066 = vsel %vm3554, %v2014, 0.0
        %v4067 = vsel %vm3555, %v2015, 0.0
        %v4068 = vsel %vm3556, %v2016, 0.0
        %v4069 = vsel %vm3557, %v2017, 0.0
        %v4070 = vsel %vm3558, %v2018, 0.0
        %v4071 = vsel %vm3559, %v2019, 0.0
        %v4072 = vsel %vm3560, %v2020, 0.0
        %v4073 = vsel %vm3561, %v2021, 0.0
        %v4074 = vsel %vm3562, %v2022, 0.0
        %v4075 = vsel %vm3563, %v2023, 0.0
        %v4076 = vsel %vm3564, %v2024, 0.0
        %v4077 = vsel %vm3565, %v2025, 0.0
        %v4078 = vsel %vm3566, %v2026, 0.0
        %v4079 = vsel %vm3567, %v2027, 0.0
        %v4080 = vsel %vm3568, %v2028, 0.0
        %v4081 = vsel %vm3569, %v2029, 0.0
        %v4082 = vsel %vm3570, %v2030, 0.0
        %v4083 = vsel %vm3571, %v2031, 0.0
        %v4084 = vsel %vm3572, %v2032, 0.0
        %v4085 = vsel %vm3573, %v2033, 0.0
        %v4086 = vsel %vm3574, %v2034, 0.0
        %v4087 = vsel %vm3575, %v2035, 0.0
        %v4088 = vsel %vm3576, %v2036, 0.0
        %v4089 = vsel %vm3577, %v2037, 0.0
        %v4090 = vsel %vm3578, %v2038, 0.0
        %v4091 = vsel %vm3579, %v2039, 0.0
        %v4092 = vsel %vm3580, %v2040, 0.0
        %v4093 = vsel %vm3581, %v2041, 0.0
        %v4094 = vsel %vm3582, %v2042, 0.0
        %v4095 = vsel %vm3583, %v2043, 0.0
        %v4096 = vsel %vm3584, %v2044, 0.0
        %v4097 = vsel %vm3585, %v2045, 0.0
        %v4098 = vsel %vm3586, %v2046, 0.0
        %v4099 = vsel %vm3587, %v2047, 0.0
        %v4100 = vsel %vm3588, %v2048, 0.0
        %v4101 = vsel %vm3589, %v2049, 0.0
        %v4102 = vsel %vm3590, %v2050, 0.0
        %v4103 = vsel %vm3591, %v2051, 0.0
        %v4104 = vsel %vm3592, %v2052, 0.0
        %v4105 = vsel %vm3593, %v2053, 0.0
        %v4106 = vsel %vm3594, %v2054, 0.0
        %v4107 = vsel %vm3595, %v2055, 0.0
        %v4108 = vsel %vm3596, %v2056, 0.0
        %v4109 = vsel %vm3597, %v2057, 0.0
        %v4110 = vsel %vm3598, %v2058, 0.0
        %v4111 = vsel %vm3599, %v2059, 0.0
        %v4112 = vsel %vm3600, %v2060, 0.0
        %v4113 = vsel %vm3601, %v2061, 0.0
        %v4114 = vsel %vm3602, %v2062, 0.0
        %v4115 = vsel %vm3603, %v2063, 0.0
        %v4116 = vsel %vm3604, %v2064, 0.0
        %v4117 = vsel %vm3605, %v2065, 0.0
        %v4118 = vsel %vm3606, %v2066, 0.0
        %v4119 = vsel %vm3607, %v2067, 0.0
        %v4120 = vsel %vm3608, %v2068, 0.0
        %v4121 = vsel %vm3609, %v2069, 0.0
        %v4122 = vsel %vm3610, %v2070, 0.0
        %v4123 = vsel %vm3611, %v2071, 0.0
        %v4124 = vsel %vm3612, %v2072, 0.0
        %v4125 = vsel %vm3613, %v2073, 0.0
        %v4126 = vsel %vm3614, %v2074, 0.0
        %v4127 = vsel %vm3615, %v2075, 0.0
        %v4128 = vsel %vm3616, %v2076, 0.0
        %v4129 = vsel %vm3617, %v2077, 0.0
        %v4130 = vsel %vm3618, %v2078, 0.0
        %v4131 = vsel %vm3619, %v2079, 0.0
        %v4132 = vsel %vm3620, %v2080, 0.0
        %v4133 = vsel %vm3621, %v2081, 0.0
        %v4134 = vsel %vm3622, %v2082, 0.0
        %v4135 = vsel %vm3623, %v2083, 0.0
        %v4136 = vsel %vm3624, %v2084, 0.0
        %v4137 = vsel %vm3625, %v2085, 0.0
        %v4138 = vsel %vm3626, %v2086, 0.0
        %v4139 = vsel %vm3627, %v2087, 0.0
        %v4140 = vsel %vm3628, %v2088, 0.0
        %v4141 = vsel %vm3629, %v2089, 0.0
        %v4142 = vsel %vm3630, %v2090, 0.0
        %v4143 = vsel %vm3631, %v2091, 0.0
        %v4144 = vsel %vm3632, %v2092, 0.0
        %v4145 = vsel %vm3633, %v2093, 0.0
        %v4146 = vsel %vm3634, %v2094, 0.0
        %v4147 = vsel %vm3635, %v2095, 0.0
        %v4148 = vsel %vm3636, %v2096, 0.0
        %v4149 = vsel %vm3637, %v2097, 0.0
        %v4150 = vsel %vm3638, %v2098, 0.0
        %v4151 = vsel %vm3639, %v2099, 0.0
        %v4152 = vsel %vm3640, %v2100, 0.0
        %v4153 = vsel %vm3641, %v2101, 0.0
        %v4154 = vsel %vm3642, %v2102, 0.0
        %v4155 = vsel %vm3643, %v2103, 0.0
        %v4156 = vsel %vm3644, %v2104, 0.0
        %v4157 = vsel %vm3645, %v2105, 0.0
        %v4158 = vsel %vm3646, %v2106, 0.0
        %v4159 = vsel %vm3647, %v2107, 0.0
        %v4160 = vsel %vm3648, %v2108, 0.0
        %v4161 = vsel %vm3649, %v2109, 0.0
        %v4162 = vsel %vm3650, %v2110, 0.0
        %v4163 = vsel %vm3651, %v2111, 0.0
        %v4164 = vsel %vm3652, %v2112, 0.0
        %v4165 = vsel %vm3653, %v2113, 0.0
        %v4166 = vsel %vm3654, %v2114, 0.0
        %v4167 = vsel %vm3655, %v2115, 0.0
        %v4168 = vsel %vm3656, %v2116, 0.0
        %v4169 = vsel %vm3657, %v2117, 0.0
        %v4170 = vsel %vm3658, %v2118, 0.0
        %v4171 = vsel %vm3659, %v2119, 0.0
        %v4172 = vsel %vm3660, %v2120, 0.0
        %v4173 = vsel %vm3661, %v2121, 0.0
        %v4174 = vsel %vm3662, %v2122, 0.0
        %v4175 = vsel %vm3663, %v2123, 0.0
        %v4176 = vsel %vm3664, %v2124, 0.0
        %v4177 = vsel %vm3665, %v2125, 0.0
        %v4178 = vsel %vm3666, %v2126, 0.0
        %v4179 = vsel %vm3667, %v2127, 0.0
        %v4180 = vsel %vm3668, %v2128, 0.0
        %v4181 = vsel %vm3669, %v2129, 0.0
        %v4182 = vsel %vm3670, %v2130, 0.0
        %v4183 = vsel %vm3671, %v2131, 0.0
        %v4184 = vsel %vm3672, %v2132, 0.0
        %v4185 = vsel %vm3673, %v2133, 0.0
        %v4186 = vsel %vm3674, %v2134, 0.0
        %v4187 = vsel %vm3675, %v2135, 0.0
        %v4188 = vsel %vm3676, %v2136, 0.0
        %v4189 = vsel %vm3677, %v2137, 0.0
        %v4190 = vsel %vm3678, %v2138, 0.0
        %v4191 = vsel %vm3679, %v2139, 0.0
        %v4192 = vsel %vm3680, %v2140, 0.0
        %v4193 = vsel %vm3681, %v2141, 0.0
        %v4194 = vsel %vm3682, %v2142, 0.0
        %v4195 = vsel %vm3683, %v2143, 0.0
        %v4196 = vsel %vm3684, %v2144, 0.0
        %v4197 = vsel %vm3685, %v2145, 0.0
        %v4198 = vsel %vm3686, %v2146, 0.0
        %v4199 = vsel %vm3687, %v2147, 0.0
        %v4200 = vsel %vm3688, %v2148, 0.0
        %v4201 = vsel %vm3689, %v2149, 0.0
        %v4202 = vsel %vm3690, %v2150, 0.0
        %v4203 = vsel %vm3691, %v2151, 0.0
        %v4204 = vsel %vm3692, %v2152, 0.0
        %v4205 = vsel %vm3693, %v2153, 0.0
        %v4206 = vsel %vm3694, %v2154, 0.0
        %v4207 = vsel %vm3695, %v2155, 0.0
        %v4208 = vsel %vm3696, %v2156, 0.0
        %v4209 = vsel %vm3697, %v2157, 0.0
        %v4210 = vsel %vm3698, %v2158, 0.0
        %v4211 = vsel %vm3699, %v2159, 0.0
        %v4212 = vsel %vm3700, %v2160, 0.0
        %v4213 = vsel %vm3701, %v2161, 0.0
        %v4214 = vsel %vm3702, %v2162, 0.0
        %v4215 = vsel %vm3703, %v2163, 0.0
        %v4216 = vsel %vm3704, %v2164, 0.0
        %v4217 = vsel %vm3705, %v2165, 0.0
        %v4218 = vsel %vm3706, %v2166, 0.0
        %v4219 = vsel %vm3707, %v2167, 0.0
        %v4220 = vsel %vm3708, %v2168, 0.0
        %v4221 = vsel %vm3709, %v2169, 0.0
        %v4222 = vsel %vm3710, %v2170, 0.0
        %v4223 = vsel %vm3711, %v2171, 0.0
        %v4224 = vsel %vm3712, %v2172, 0.0
        %v4225 = vsel %vm3713, %v2173, 0.0
        %v4226 = vsel %vm3714, %v2174, 0.0
        %v4227 = vsel %vm3715, %v2175, 0.0
        %v4228 = vsel %vm3716, %v2176, 0.0
        %v4229 = vsel %vm3717, %v2177, 0.0
        %v4230 = vsel %vm3718, %v2178, 0.0
        %v4231 = vsel %vm3719, %v2179, 0.0
        %v4232 = vsel %vm3720, %v2180, 0.0
        %v4233 = vsel %vm3721, %v2181, 0.0
        %v4234 = vsel %vm3722, %v2182, 0.0
        %v4235 = vsel %vm3723, %v2183, 0.0
        %v4236 = vsel %vm3724, %v2184, 0.0
        %v4237 = vsel %vm3725, %v2185, 0.0
        %v4238 = vsel %vm3726, %v2186, 0.0
        %v4239 = vsel %vm3727, %v2187, 0.0
        %v4240 = vsel %vm3728, %v2188, 0.0
        %v4241 = vsel %vm3729, %v2189, 0.0
        %v4242 = vsel %vm3730, %v2190, 0.0
        %v4243 = vsel %vm3731, %v2191, 0.0
        %v4244 = vsel %vm3732, %v2192, 0.0
        %v4245 = vsel %vm3733, %v2193, 0.0
        %v4246 = vsel %vm3734, %v2194, 0.0
        %v4247 = vsel %vm3735, %v2195, 0.0
        %v4248 = vsel %vm3736, %v2196, 0.0
        %v4249 = vsel %vm3737, %v2197, 0.0
        %v4250 = vsel %vm3738, %v2198, 0.0
        %v4251 = vsel %vm3739, %v2199, 0.0
        %v4252 = vsel %vm3740, %v2200, 0.0
        %v4253 = vsel %vm3741, %v2201, 0.0
        %v4254 = vsel %vm3742, %v2202, 0.0
        %v4255 = vsel %vm3743, %v2203, 0.0
        %v4256 = vsel %vm3744, %v2204, 0.0
        %v4257 = vsel %vm3745, %v2205, 0.0
        %v4258 = vsel %vm3746, %v2206, 0.0
        %v4259 = vsel %vm3747, %v2207, 0.0
        %v4260 = vsel %vm3748, %v2208, 0.0
        %v4261 = vsel %vm3749, %v2209, 0.0
        %v4262 = vsel %vm3750, %v2210, 0.0
        %v4263 = vsel %vm3751, %v2211, 0.0
        %v4264 = vsel %vm3752, %v2212, 0.0
        %v4265 = vsel %vm3753, %v2213, 0.0
        %v4266 = vsel %vm3754, %v2214, 0.0
        %v4267 = vsel %vm3755, %v2215, 0.0
        %v4268 = vsel %vm3756, %v2216, 0.0
        %v4269 = vsel %vm3757, %v2217, 0.0
        %v4270 = vsel %vm3758, %v2218, 0.0
        %v4271 = vsel %vm3759, %v2219, 0.0
        %v4272 = vsel %vm3760, %v2220, 0.0
        %v4273 = vsel %vm3761, %v2221, 0.0
        %v4274 = vsel %vm3762, %v2222, 0.0
        %v4275 = vsel %vm3763, %v2223, 0.0
        %v4276 = vsel %vm3764, %v2224, 0.0
        %v4277 = vsel %vm3765, %v2225, 0.0
        %v4278 = vsel %vm3766, %v2226, 0.0
        %v4279 = vsel %vm3767, %v2227, 0.0
        %v4280 = vsel %vm3768, %v2228, 0.0
        %v4281 = vsel %vm3769, %v2229, 0.0
        %v4282 = vsel %vm3770, %v2230, 0.0
        %v4283 = vsel %vm3771, %v2231, 0.0
        %v4284 = vsel %vm3772, %v2232, 0.0
        %v4285 = vsel %vm3773, %v2233, 0.0
        %v4286 = vsel %vm3774, %v2234, 0.0
        %v4287 = vsel %vm3775, %v2235, 0.0
        %v4288 = vsel %vm3776, %v2236, 0.0
        %v4289 = vsel %vm3777, %v2237, 0.0
        %v4290 = vsel %vm3778, %v2238, 0.0
        %v4291 = vsel %vm3779, %v2239, 0.0
        %v4292 = vsel %vm3780, %v2240, 0.0
        %v4293 = vsel %vm3781, %v2241, 0.0
        %v4294 = vsel %vm3782, %v2242, 0.0
        %v4295 = vsel %vm3783, %v2243, 0.0
        %v4296 = vsel %vm3784, %v2244, 0.0
        %v4297 = vsel %vm3785, %v2245, 0.0
        %v4298 = vsel %vm3786, %v2246, 0.0
        %v4299 = vsel %vm3787, %v2247, 0.0
        %v4300 = vsel %vm3788, %v2248, 0.0
        %v4301 = vsel %vm3789, %v2249, 0.0
        %v4302 = vsel %vm3790, %v2250, 0.0
        %v4303 = vsel %vm3791, %v2251, 0.0
        %v4304 = vsel %vm3792, %v2252, 0.0
        %v4305 = vsel %vm3793, %v2253, 0.0
        %v4306 = vsel %vm3794, %v2254, 0.0
        %v4307 = vsel %vm3795, %v2255, 0.0
        %v4308 = vsel %vm3796, %v2256, 0.0
        %v4309 = vsel %vm3797, %v2257, 0.0
        %v4310 = vsel %vm3798, %v2258, 0.0
        %v4311 = vsel %vm3799, %v2259, 0.0
        %v4312 = vsel %vm3800, %v2260, 0.0
        %v4313 = vsel %vm3801, %v2261, 0.0
        %v4314 = vsel %vm3802, %v2262, 0.0
        %v4315 = vsel %vm3803, %v2263, 0.0
        %v4316 = vsel %vm3804, %v2264, 0.0
        %v4317 = vsel %vm3805, %v2265, 0.0
        %v4318 = vsel %vm3806, %v2266, 0.0
        %v4319 = vsel %vm3807, %v2267, 0.0
        %v4320 = vsel %vm3808, %v2268, 0.0
        %v4321 = vsel %vm3809, %v2269, 0.0
        %v4322 = vsel %vm3810, %v2270, 0.0
        %v4323 = vsel %vm3811, %v2271, 0.0
        %v4324 = vsel %vm3812, %v2272, 0.0
        %v4325 = vsel %vm3813, %v2273, 0.0
        %v4326 = vsel %vm3814, %v2274, 0.0
        %v4327 = vsel %vm3815, %v2275, 0.0
        %v4328 = vsel %vm3816, %v2276, 0.0
        %v4329 = vsel %vm3817, %v2277, 0.0
        %v4330 = vsel %vm3818, %v2278, 0.0
        %v4331 = vsel %vm3819, %v2279, 0.0
        %v4332 = vsel %vm3820, %v2280, 0.0
        %v4333 = vsel %vm3821, %v2281, 0.0
        %v4334 = vsel %vm3822, %v2282, 0.0
        %v4335 = vsel %vm3823, %v2283, 0.0
        %v4336 = vsel %vm3824, %v2284, 0.0
        %v4337 = vsel %vm3825, %v2285, 0.0
        %v4338 = vsel %vm3826, %v2286, 0.0
        %v4339 = vsel %vm3827, %v2287, 0.0
        %v4340 = vsel %vm3828, %v2288, 0.0
        %v4341 = vsel %vm3829, %v2289, 0.0
        %v4342 = vsel %vm3830, %v2290, 0.0
        %v4343 = vsel %vm3831, %v2291, 0.0
        %v4344 = vsel %vm3832, %v2292, 0.0
        %v4345 = vsel %vm3833, %v2293, 0.0
        %v4346 = vsel %vm3834, %v2294, 0.0
        %v4347 = vsel %vm3835, %v2295, 0.0
        %v4348 = vsel %vm3836, %v2296, 0.0
        %v4349 = vsel %vm3837, %v2297, 0.0
        %v4350 = vsel %vm3838, %v2298, 0.0
        %v4351 = vsel %vm3839, %v2299, 0.0
        %v4352 = vsel %vm3840, %v2300, 0.0
        %v4353 = vsel %vm3841, %v2301, 0.0
        %v4354 = vsel %vm3842, %v2302, 0.0
        %v4355 = vsel %vm3843, %v2303, 0.0
        %v4356 = vsel %vm3844, %v2304, 0.0
        %v4357 = vld [vmem:[#allocation2] sm:$0xff]
        %v4358 = vadd.f32 %v3845, %v3846
        %v4359 = vadd.f32 %v4358, %v3847
        %v4360 = vadd.f32 %v4359, %v3848
        %v4361 = vadd.f32 %v4360, %v3849
        %v4362 = vadd.f32 %v4361, %v3850
        %v4363 = vadd.f32 %v4362, %v3851
        %v4364 = vadd.f32 %v4363, %v3852
        %v4365 = vadd.f32 %v4364, %v3853
        %v4366 = vadd.f32 %v4365, %v3854
        %v4367 = vadd.f32 %v4366, %v3855
        %v4368 = vadd.f32 %v4367, %v3856
        %v4369 = vadd.f32 %v4368, %v3857
        %v4370 = vadd.f32 %v4369, %v3858
        %v4371 = vadd.f32 %v4370, %v3859
        %v4372 = vadd.f32 %v4371, %v3860
        %v4373 = vadd.f32 %v4372, %v3861
        %v4374 = vadd.f32 %v4373, %v3862
        %v4375 = vadd.f32 %v4374, %v3863
        %v4376 = vadd.f32 %v4375, %v3864
        %v4377 = vadd.f32 %v4376, %v3865
        %v4378 = vadd.f32 %v4377, %v3866
        %v4379 = vadd.f32 %v4378, %v3867
        %v4380 = vadd.f32 %v4379, %v3868
        %v4381 = vadd.f32 %v4380, %v3869
        %v4382 = vadd.f32 %v4381, %v3870
        %v4383 = vadd.f32 %v4382, %v3871
        %v4384 = vadd.f32 %v4383, %v3872
        %v4385 = vadd.f32 %v4384, %v3873
        %v4386 = vadd.f32 %v4385, %v3874
        %v4387 = vadd.f32 %v4386, %v3875
        %v4388 = vadd.f32 %v4387, %v3876
        %v4389 = vadd.f32 %v4388, %v3877
        %v4390 = vadd.f32 %v4389, %v3878
        %v4391 = vadd.f32 %v4390, %v3879
        %v4392 = vadd.f32 %v4391, %v3880
        %v4393 = vadd.f32 %v4392, %v3881
        %v4394 = vadd.f32 %v4393, %v3882
        %v4395 = vadd.f32 %v4394, %v3883
        %v4396 = vadd.f32 %v4395, %v3884
        %v4397 = vadd.f32 %v4396, %v3885
        %v4398 = vadd.f32 %v4397, %v3886
        %v4399 = vadd.f32 %v4398, %v3887
        %v4400 = vadd.f32 %v4399, %v3888
        %v4401 = vadd.f32 %v4400, %v3889
        %v4402 = vadd.f32 %v4401, %v3890
        %v4403 = vadd.f32 %v4402, %v3891
        %v4404 = vadd.f32 %v4403, %v3892
        %v4405 = vadd.f32 %v4404, %v3893
        %v4406 = vadd.f32 %v4405, %v3894
        %v4407 = vadd.f32 %v4406, %v3895
        %v4408 = vadd.f32 %v4407, %v3896
        %v4409 = vadd.f32 %v4408, %v3897
        %v4410 = vadd.f32 %v4409, %v3898
        %v4411 = vadd.f32 %v4410, %v3899
        %v4412 = vadd.f32 %v4411, %v3900
        %v4413 = vadd.f32 %v4412, %v3901
        %v4414 = vadd.f32 %v4413, %v3902
        %v4415 = vadd.f32 %v4414, %v3903
        %v4416 = vadd.f32 %v4415, %v3904
        %v4417 = vadd.f32 %v4416, %v3905
        %v4418 = vadd.f32 %v4417, %v3906
        %v4419 = vadd.f32 %v4418, %v3907
        %v4420 = vadd.f32 %v4419, %v3908
        %v4421 = vadd.f32 %v4420, %v3909
        %v4422 = vadd.f32 %v4421, %v3910
        %v4423 = vadd.f32 %v4422, %v3911
        %v4424 = vadd.f32 %v4423, %v3912
        %v4425 = vadd.f32 %v4424, %v3913
        %v4426 = vadd.f32 %v4425, %v3914
        %v4427 = vadd.f32 %v4426, %v3915
        %v4428 = vadd.f32 %v4427, %v3916
        %v4429 = vadd.f32 %v4428, %v3917
        %v4430 = vadd.f32 %v4429, %v3918
        %v4431 = vadd.f32 %v4430, %v3919
        %v4432 = vadd.f32 %v4431, %v3920
        %v4433 = vadd.f32 %v4432, %v3921
        %v4434 = vadd.f32 %v4433, %v3922
        %v4435 = vadd.f32 %v4434, %v3923
        %v4436 = vadd.f32 %v4435, %v3924
        %v4437 = vadd.f32 %v4436, %v3925
        %v4438 = vadd.f32 %v4437, %v3926
        %v4439 = vadd.f32 %v4438, %v3927
        %v4440 = vadd.f32 %v4439, %v3928
        %v4441 = vadd.f32 %v4440, %v3929
        %v4442 = vadd.f32 %v4441, %v3930
        %v4443 = vadd.f32 %v4442, %v3931
        %v4444 = vadd.f32 %v4443, %v3932
        %v4445 = vadd.f32 %v4444, %v3933
        %v4446 = vadd.f32 %v4445, %v3934
        %v4447 = vadd.f32 %v4446, %v3935
        %v4448 = vadd.f32 %v4447, %v3936
        %v4449 = vadd.f32 %v4448, %v3937
        %v4450 = vadd.f32 %v4449, %v3938
        %v4451 = vadd.f32 %v4450, %v3939
        %v4452 = vadd.f32 %v4451, %v3940
        %v4453 = vadd.f32 %v4452, %v3941
        %v4454 = vadd.f32 %v4453, %v3942
        %v4455 = vadd.f32 %v4454, %v3943
        %v4456 = vadd.f32 %v4455, %v3944
        %v4457 = vadd.f32 %v4456, %v3945
        %v4458 = vadd.f32 %v4457, %v3946
        %v4459 = vadd.f32 %v4458, %v3947
        %v4460 = vadd.f32 %v4459, %v3948
        %v4461 = vadd.f32 %v4460, %v3949
        %v4462 = vadd.f32 %v4461, %v3950
        %v4463 = vadd.f32 %v4462, %v3951
        %v4464 = vadd.f32 %v4463, %v3952
        %v4465 = vadd.f32 %v4464, %v3953
        %v4466 = vadd.f32 %v4465, %v3954
        %v4467 = vadd.f32 %v4466, %v3955
        %v4468 = vadd.f32 %v4467, %v3956
        %v4469 = vadd.f32 %v4468, %v3957
        %v4470 = vadd.f32 %v4469, %v3958
        %v4471 = vadd.f32 %v4470, %v3959
        %v4472 = vadd.f32 %v4471, %v3960
        %v4473 = vadd.f32 %v4472, %v3961
        %v4474 = vadd.f32 %v4473, %v3962
        %v4475 = vadd.f32 %v4474, %v3963
        %v4476 = vadd.f32 %v4475, %v3964
        %v4477 = vadd.f32 %v4476, %v3965
        %v4478 = vadd.f32 %v4477, %v3966
        %v4479 = vadd.f32 %v4478, %v3967
        %v4480 = vadd.f32 %v4479, %v3968
        %v4481 = vadd.f32 %v4480, %v3969
        %v4482 = vadd.f32 %v4481, %v3970
        %v4483 = vadd.f32 %v4482, %v3971
        %v4484 = vadd.f32 %v4483, %v3972
        %v4485 = vadd.f32 %v4484, %v3973
        %v4486 = vadd.f32 %v4485, %v3974
        %v4487 = vadd.f32 %v4486, %v3975
        %v4488 = vadd.f32 %v4487, %v3976
        %v4489 = vadd.f32 %v4488, %v3977
        %v4490 = vadd.f32 %v4489, %v3978
        %v4491 = vadd.f32 %v4490, %v3979
        %v4492 = vadd.f32 %v4491, %v3980
        %v4493 = vadd.f32 %v4492, %v3981
        %v4494 = vadd.f32 %v4493, %v3982
        %v4495 = vadd.f32 %v4494, %v3983
        %v4496 = vadd.f32 %v4495, %v3984
        %v4497 = vadd.f32 %v4496, %v3985
        %v4498 = vadd.f32 %v4497, %v3986
        %v4499 = vadd.f32 %v4498, %v3987
        %v4500 = vadd.f32 %v4499, %v3988
        %v4501 = vadd.f32 %v4500, %v3989
        %v4502 = vadd.f32 %v4501, %v3990
        %v4503 = vadd.f32 %v4502, %v3991
        %v4504 = vadd.f32 %v4503, %v3992
        %v4505 = vadd.f32 %v4504, %v3993
        %v4506 = vadd.f32 %v4505, %v3994
        %v4507 = vadd.f32 %v4506, %v3995
        %v4508 = vadd.f32 %v4507, %v3996
        %v4509 = vadd.f32 %v4508, %v3997
        %v4510 = vadd.f32 %v4509, %v3998
        %v4511 = vadd.f32 %v4510, %v3999
        %v4512 = vadd.f32 %v4511, %v4000
        %v4513 = vadd.f32 %v4512, %v4001
        %v4514 = vadd.f32 %v4513, %v4002
        %v4515 = vadd.f32 %v4514, %v4003
        %v4516 = vadd.f32 %v4515, %v4004
        %v4517 = vadd.f32 %v4516, %v4005
        %v4518 = vadd.f32 %v4517, %v4006
        %v4519 = vadd.f32 %v4518, %v4007
        %v4520 = vadd.f32 %v4519, %v4008
        %v4521 = vadd.f32 %v4520, %v4009
        %v4522 = vadd.f32 %v4521, %v4010
        %v4523 = vadd.f32 %v4522, %v4011
        %v4524 = vadd.f32 %v4523, %v4012
        %v4525 = vadd.f32 %v4524, %v4013
        %v4526 = vadd.f32 %v4525, %v4014
        %v4527 = vadd.f32 %v4526, %v4015
        %v4528 = vadd.f32 %v4527, %v4016
        %v4529 = vadd.f32 %v4528, %v4017
        %v4530 = vadd.f32 %v4529, %v4018
        %v4531 = vadd.f32 %v4530, %v4019
        %v4532 = vadd.f32 %v4531, %v4020
        %v4533 = vadd.f32 %v4532, %v4021
        %v4534 = vadd.f32 %v4533, %v4022
        %v4535 = vadd.f32 %v4534, %v4023
        %v4536 = vadd.f32 %v4535, %v4024
        %v4537 = vadd.f32 %v4536, %v4025
        %v4538 = vadd.f32 %v4537, %v4026
        %v4539 = vadd.f32 %v4538, %v4027
        %v4540 = vadd.f32 %v4539, %v4028
        %v4541 = vadd.f32 %v4540, %v4029
        %v4542 = vadd.f32 %v4541, %v4030
        %v4543 = vadd.f32 %v4542, %v4031
        %v4544 = vadd.f32 %v4543, %v4032
        %v4545 = vadd.f32 %v4544, %v4033
        %v4546 = vadd.f32 %v4545, %v4034
        %v4547 = vadd.f32 %v4546, %v4035
        %v4548 = vadd.f32 %v4547, %v4036
        %v4549 = vadd.f32 %v4548, %v4037
        %v4550 = vadd.f32 %v4549, %v4038
        %v4551 = vadd.f32 %v4550, %v4039
        %v4552 = vadd.f32 %v4551, %v4040
        %v4553 = vadd.f32 %v4552, %v4041
        %v4554 = vadd.f32 %v4553, %v4042
        %v4555 = vadd.f32 %v4554, %v4043
        %v4556 = vadd.f32 %v4555, %v4044
        %v4557 = vadd.f32 %v4556, %v4045
        %v4558 = vadd.f32 %v4557, %v4046
        %v4559 = vadd.f32 %v4558, %v4047
        %v4560 = vadd.f32 %v4559, %v4048
        %v4561 = vadd.f32 %v4560, %v4049
        %v4562 = vadd.f32 %v4561, %v4050
        %v4563 = vadd.f32 %v4562, %v4051
        %v4564 = vadd.f32 %v4563, %v4052
        %v4565 = vadd.f32 %v4564, %v4053
        %v4566 = vadd.f32 %v4565, %v4054
        %v4567 = vadd.f32 %v4566, %v4055
        %v4568 = vadd.f32 %v4567, %v4056
        %v4569 = vadd.f32 %v4568, %v4057
        %v4570 = vadd.f32 %v4569, %v4058
        %v4571 = vadd.f32 %v4570, %v4059
        %v4572 = vadd.f32 %v4571, %v4060
        %v4573 = vadd.f32 %v4572, %v4061
        %v4574 = vadd.f32 %v4573, %v4062
        %v4575 = vadd.f32 %v4574, %v4063
        %v4576 = vadd.f32 %v4575, %v4064
        %v4577 = vadd.f32 %v4576, %v4065
        %v4578 = vadd.f32 %v4577, %v4066
        %v4579 = vadd.f32 %v4578, %v4067
        %v4580 = vadd.f32 %v4579, %v4068
        %v4581 = vadd.f32 %v4580, %v4069
        %v4582 = vadd.f32 %v4581, %v4070
        %v4583 = vadd.f32 %v4582, %v4071
        %v4584 = vadd.f32 %v4583, %v4072
        %v4585 = vadd.f32 %v4584, %v4073
        %v4586 = vadd.f32 %v4585, %v4074
        %v4587 = vadd.f32 %v4586, %v4075
        %v4588 = vadd.f32 %v4587, %v4076
        %v4589 = vadd.f32 %v4588, %v4077
        %v4590 = vadd.f32 %v4589, %v4078
        %v4591 = vadd.f32 %v4590, %v4079
        %v4592 = vadd.f32 %v4591, %v4080
        %v4593 = vadd.f32 %v4592, %v4081
        %v4594 = vadd.f32 %v4593, %v4082
        %v4595 = vadd.f32 %v4594, %v4083
        %v4596 = vadd.f32 %v4595, %v4084
        %v4597 = vadd.f32 %v4596, %v4085
        %v4598 = vadd.f32 %v4597, %v4086
        %v4599 = vadd.f32 %v4598, %v4087
        %v4600 = vadd.f32 %v4599, %v4088
        %v4601 = vadd.f32 %v4600, %v4089
        %v4602 = vadd.f32 %v4601, %v4090
        %v4603 = vadd.f32 %v4602, %v4091
        %v4604 = vadd.f32 %v4603, %v4092
        %v4605 = vadd.f32 %v4604, %v4093
        %v4606 = vadd.f32 %v4605, %v4094
        %v4607 = vadd.f32 %v4606, %v4095
        %v4608 = vadd.f32 %v4607, %v4096
        %v4609 = vadd.f32 %v4608, %v4097
        %v4610 = vadd.f32 %v4609, %v4098
        %v4611 = vadd.f32 %v4610, %v4099
        %v4612 = vadd.f32 %v4611, %v4100
        %v4613 = vadd.f32 %v4612, %v4101
        %v4614 = vadd.f32 %v4613, %v4102
        %v4615 = vadd.f32 %v4614, %v4103
        %v4616 = vadd.f32 %v4615, %v4104
        %v4617 = vadd.f32 %v4616, %v4105
        %v4618 = vadd.f32 %v4617, %v4106
        %v4619 = vadd.f32 %v4618, %v4107
        %v4620 = vadd.f32 %v4619, %v4108
        %v4621 = vadd.f32 %v4620, %v4109
        %v4622 = vadd.f32 %v4621, %v4110
        %v4623 = vadd.f32 %v4622, %v4111
        %v4624 = vadd.f32 %v4623, %v4112
        %v4625 = vadd.f32 %v4624, %v4113
        %v4626 = vadd.f32 %v4625, %v4114
        %v4627 = vadd.f32 %v4626, %v4115
        %v4628 = vadd.f32 %v4627, %v4116
        %v4629 = vadd.f32 %v4628, %v4117
        %v4630 = vadd.f32 %v4629, %v4118
        %v4631 = vadd.f32 %v4630, %v4119
        %v4632 = vadd.f32 %v4631, %v4120
        %v4633 = vadd.f32 %v4632, %v4121
        %v4634 = vadd.f32 %v4633, %v4122
        %v4635 = vadd.f32 %v4634, %v4123
        %v4636 = vadd.f32 %v4635, %v4124
        %v4637 = vadd.f32 %v4636, %v4125
        %v4638 = vadd.f32 %v4637, %v4126
        %v4639 = vadd.f32 %v4638, %v4127
        %v4640 = vadd.f32 %v4639, %v4128
        %v4641 = vadd.f32 %v4640, %v4129
        %v4642 = vadd.f32 %v4641, %v4130
        %v4643 = vadd.f32 %v4642, %v4131
        %v4644 = vadd.f32 %v4643, %v4132
        %v4645 = vadd.f32 %v4644, %v4133
        %v4646 = vadd.f32 %v4645, %v4134
        %v4647 = vadd.f32 %v4646, %v4135
        %v4648 = vadd.f32 %v4647, %v4136
        %v4649 = vadd.f32 %v4648, %v4137
        %v4650 = vadd.f32 %v4649, %v4138
        %v4651 = vadd.f32 %v4650, %v4139
        %v4652 = vadd.f32 %v4651, %v4140
        %v4653 = vadd.f32 %v4652, %v4141
        %v4654 = vadd.f32 %v4653, %v4142
        %v4655 = vadd.f32 %v4654, %v4143
        %v4656 = vadd.f32 %v4655, %v4144
        %v4657 = vadd.f32 %v4656, %v4145
        %v4658 = vadd.f32 %v4657, %v4146
        %v4659 = vadd.f32 %v4658, %v4147
        %v4660 = vadd.f32 %v4659, %v4148
        %v4661 = vadd.f32 %v4660, %v4149
        %v4662 = vadd.f32 %v4661, %v4150
        %v4663 = vadd.f32 %v4662, %v4151
        %v4664 = vadd.f32 %v4663, %v4152
        %v4665 = vadd.f32 %v4664, %v4153
        %v4666 = vadd.f32 %v4665, %v4154
        %v4667 = vadd.f32 %v4666, %v4155
        %v4668 = vadd.f32 %v4667, %v4156
        %v4669 = vadd.f32 %v4668, %v4157
        %v4670 = vadd.f32 %v4669, %v4158
        %v4671 = vadd.f32 %v4670, %v4159
        %v4672 = vadd.f32 %v4671, %v4160
        %v4673 = vadd.f32 %v4672, %v4161
        %v4674 = vadd.f32 %v4673, %v4162
        %v4675 = vadd.f32 %v4674, %v4163
        %v4676 = vadd.f32 %v4675, %v4164
        %v4677 = vadd.f32 %v4676, %v4165
        %v4678 = vadd.f32 %v4677, %v4166
        %v4679 = vadd.f32 %v4678, %v4167
        %v4680 = vadd.f32 %v4679, %v4168
        %v4681 = vadd.f32 %v4680, %v4169
        %v4682 = vadd.f32 %v4681, %v4170
        %v4683 = vadd.f32 %v4682, %v4171
        %v4684 = vadd.f32 %v4683, %v4172
        %v4685 = vadd.f32 %v4684, %v4173
        %v4686 = vadd.f32 %v4685, %v4174
        %v4687 = vadd.f32 %v4686, %v4175
        %v4688 = vadd.f32 %v4687, %v4176
        %v4689 = vadd.f32 %v4688, %v4177
        %v4690 = vadd.f32 %v4689, %v4178
        %v4691 = vadd.f32 %v4690, %v4179
        %v4692 = vadd.f32 %v4691, %v4180
        %v4693 = vadd.f32 %v4692, %v4181
        %v4694 = vadd.f32 %v4693, %v4182
        %v4695 = vadd.f32 %v4694, %v4183
        %v4696 = vadd.f32 %v4695, %v4184
        %v4697 = vadd.f32 %v4696, %v4185
        %v4698 = vadd.f32 %v4697, %v4186
        %v4699 = vadd.f32 %v4698, %v4187
        %v4700 = vadd.f32 %v4699, %v4188
        %v4701 = vadd.f32 %v4700, %v4189
        %v4702 = vadd.f32 %v4701, %v4190
        %v4703 = vadd.f32 %v4702, %v4191
        %v4704 = vadd.f32 %v4703, %v4192
        %v4705 = vadd.f32 %v4704, %v4193
        %v4706 = vadd.f32 %v4705, %v4194
        %v4707 = vadd.f32 %v4706, %v4195
        %v4708 = vadd.f32 %v4707, %v4196
        %v4709 = vadd.f32 %v4708, %v4197
        %v4710 = vadd.f32 %v4709, %v4198
        %v4711 = vadd.f32 %v4710, %v4199
        %v4712 = vadd.f32 %v4711, %v4200
        %v4713 = vadd.f32 %v4712, %v4201
        %v4714 = vadd.f32 %v4713, %v4202
        %v4715 = vadd.f32 %v4714, %v4203
        %v4716 = vadd.f32 %v4715, %v4204
        %v4717 = vadd.f32 %v4716, %v4205
        %v4718 = vadd.f32 %v4717, %v4206
        %v4719 = vadd.f32 %v4718, %v4207
        %v4720 = vadd.f32 %v4719, %v4208
        %v4721 = vadd.f32 %v4720, %v4209
        %v4722 = vadd.f32 %v4721, %v4210
        %v4723 = vadd.f32 %v4722, %v4211
        %v4724 = vadd.f32 %v4723, %v4212
        %v4725 = vadd.f32 %v4724, %v4213
        %v4726 = vadd.f32 %v4725, %v4214
        %v4727 = vadd.f32 %v4726, %v4215
        %v4728 = vadd.f32 %v4727, %v4216
        %v4729 = vadd.f32 %v4728, %v4217
        %v4730 = vadd.f32 %v4729, %v4218
        %v4731 = vadd.f32 %v4730, %v4219
        %v4732 = vadd.f32 %v4731, %v4220
        %v4733 = vadd.f32 %v4732, %v4221
        %v4734 = vadd.f32 %v4733, %v4222
        %v4735 = vadd.f32 %v4734, %v4223
        %v4736 = vadd.f32 %v4735, %v4224
        %v4737 = vadd.f32 %v4736, %v4225
        %v4738 = vadd.f32 %v4737, %v4226
        %v4739 = vadd.f32 %v4738, %v4227
        %v4740 = vadd.f32 %v4739, %v4228
        %v4741 = vadd.f32 %v4740, %v4229
        %v4742 = vadd.f32 %v4741, %v4230
        %v4743 = vadd.f32 %v4742, %v4231
        %v4744 = vadd.f32 %v4743, %v4232
        %v4745 = vadd.f32 %v4744, %v4233
        %v4746 = vadd.f32 %v4745, %v4234
        %v4747 = vadd.f32 %v4746, %v4235
        %v4748 = vadd.f32 %v4747, %v4236
        %v4749 = vadd.f32 %v4748, %v4237
        %v4750 = vadd.f32 %v4749, %v4238
        %v4751 = vadd.f32 %v4750, %v4239
        %v4752 = vadd.f32 %v4751, %v4240
        %v4753 = vadd.f32 %v4752, %v4241
        %v4754 = vadd.f32 %v4753, %v4242
        %v4755 = vadd.f32 %v4754, %v4243
        %v4756 = vadd.f32 %v4755, %v4244
        %v4757 = vadd.f32 %v4756, %v4245
        %v4758 = vadd.f32 %v4757, %v4246
        %v4759 = vadd.f32 %v4758, %v4247
        %v4760 = vadd.f32 %v4759, %v4248
        %v4761 = vadd.f32 %v4760, %v4249
        %v4762 = vadd.f32 %v4761, %v4250
        %v4763 = vadd.f32 %v4762, %v4251
        %v4764 = vadd.f32 %v4763, %v4252
        %v4765 = vadd.f32 %v4764, %v4253
        %v4766 = vadd.f32 %v4765, %v4254
        %v4767 = vadd.f32 %v4766, %v4255
        %v4768 = vadd.f32 %v4767, %v4256
        %v4769 = vadd.f32 %v4768, %v4257
        %v4770 = vadd.f32 %v4769, %v4258
        %v4771 = vadd.f32 %v4770, %v4259
        %v4772 = vadd.f32 %v4771, %v4260
        %v4773 = vadd.f32 %v4772, %v4261
        %v4774 = vadd.f32 %v4773, %v4262
        %v4775 = vadd.f32 %v4774, %v4263
        %v4776 = vadd.f32 %v4775, %v4264
        %v4777 = vadd.f32 %v4776, %v4265
        %v4778 = vadd.f32 %v4777, %v4266
        %v4779 = vadd.f32 %v4778, %v4267
        %v4780 = vadd.f32 %v4779, %v4268
        %v4781 = vadd.f32 %v4780, %v4269
        %v4782 = vadd.f32 %v4781, %v4270
        %v4783 = vadd.f32 %v4782, %v4271
        %v4784 = vadd.f32 %v4783, %v4272
        %v4785 = vadd.f32 %v4784, %v4273
        %v4786 = vadd.f32 %v4785, %v4274
        %v4787 = vadd.f32 %v4786, %v4275
        %v4788 = vadd.f32 %v4787, %v4276
        %v4789 = vadd.f32 %v4788, %v4277
        %v4790 = vadd.f32 %v4789, %v4278
        %v4791 = vadd.f32 %v4790, %v4279
        %v4792 = vadd.f32 %v4791, %v4280
        %v4793 = vadd.f32 %v4792, %v4281
        %v4794 = vadd.f32 %v4793, %v4282
        %v4795 = vadd.f32 %v4794, %v4283
        %v4796 = vadd.f32 %v4795, %v4284
        %v4797 = vadd.f32 %v4796, %v4285
        %v4798 = vadd.f32 %v4797, %v4286
        %v4799 = vadd.f32 %v4798, %v4287
        %v4800 = vadd.f32 %v4799, %v4288
        %v4801 = vadd.f32 %v4800, %v4289
        %v4802 = vadd.f32 %v4801, %v4290
        %v4803 = vadd.f32 %v4802, %v4291
        %v4804 = vadd.f32 %v4803, %v4292
        %v4805 = vadd.f32 %v4804, %v4293
        %v4806 = vadd.f32 %v4805, %v4294
        %v4807 = vadd.f32 %v4806, %v4295
        %v4808 = vadd.f32 %v4807, %v4296
        %v4809 = vadd.f32 %v4808, %v4297
        %v4810 = vadd.f32 %v4809, %v4298
        %v4811 = vadd.f32 %v4810, %v4299
        %v4812 = vadd.f32 %v4811, %v4300
        %v4813 = vadd.f32 %v4812, %v4301
        %v4814 = vadd.f32 %v4813, %v4302
        %v4815 = vadd.f32 %v4814, %v4303
        %v4816 = vadd.f32 %v4815, %v4304
        %v4817 = vadd.f32 %v4816, %v4305
        %v4818 = vadd.f32 %v4817, %v4306
        %v4819 = vadd.f32 %v4818, %v4307
        %v4820 = vadd.f32 %v4819, %v4308
        %v4821 = vadd.f32 %v4820, %v4309
        %v4822 = vadd.f32 %v4821, %v4310
        %v4823 = vadd.f32 %v4822, %v4311
        %v4824 = vadd.f32 %v4823, %v4312
        %v4825 = vadd.f32 %v4824, %v4313
        %v4826 = vadd.f32 %v4825, %v4314
        %v4827 = vadd.f32 %v4826, %v4315
        %v4828 = vadd.f32 %v4827, %v4316
        %v4829 = vadd.f32 %v4828, %v4317
        %v4830 = vadd.f32 %v4829, %v4318
        %v4831 = vadd.f32 %v4830, %v4319
        %v4832 = vadd.f32 %v4831, %v4320
        %v4833 = vadd.f32 %v4832, %v4321
        %v4834 = vadd.f32 %v4833, %v4322
        %v4835 = vadd.f32 %v4834, %v4323
        %v4836 = vadd.f32 %v4835, %v4324
        %v4837 = vadd.f32 %v4836, %v4325
        %v4838 = vadd.f32 %v4837, %v4326
        %v4839 = vadd.f32 %v4838, %v4327
        %v4840 = vadd.f32 %v4839, %v4328
        %v4841 = vadd.f32 %v4840, %v4329
        %v4842 = vadd.f32 %v4841, %v4330
        %v4843 = vadd.f32 %v4842, %v4331
        %v4844 = vadd.f32 %v4843, %v4332
        %v4845 = vadd.f32 %v4844, %v4333
        %v4846 = vadd.f32 %v4845, %v4334
        %v4847 = vadd.f32 %v4846, %v4335
        %v4848 = vadd.f32 %v4847, %v4336
        %v4849 = vadd.f32 %v4848, %v4337
        %v4850 = vadd.f32 %v4849, %v4338
        %v4851 = vadd.f32 %v4850, %v4339
        %v4852 = vadd.f32 %v4851, %v4340
        %v4853 = vadd.f32 %v4852, %v4341
        %v4854 = vadd.f32 %v4853, %v4342
        %v4855 = vadd.f32 %v4854, %v4343
        %v4856 = vadd.f32 %v4855, %v4344
        %v4857 = vadd.f32 %v4856, %v4345
        %v4858 = vadd.f32 %v4857, %v4346
        %v4859 = vadd.f32 %v4858, %v4347
        %v4860 = vadd.f32 %v4859, %v4348
        %v4861 = vadd.f32 %v4860, %v4349
        %v4862 = vadd.f32 %v4861, %v4350
        %v4863 = vadd.f32 %v4862, %v4351
        %v4864 = vadd.f32 %v4863, %v4352
        %v4865 = vadd.f32 %v4864, %v4353
        %v4866 = vadd.f32 %v4865, %v4354
        %v4867 = vadd.f32 %v4866, %v4355
        %v4868 = vadd.f32 %v4867, %v4356
        %v4869 = vadd.f32 %v4357, %v4868
        %4870 = vst [vmem:[#allocation2] sm:$0xff] %v4869
        // Predicated region
        $region41: #{tpu_custom_call.1} parent=27 // pred_check
          %p4871 = pneg %p252
        $region42: #{tpu_custom_call.1} parent=27 // pred_check_branch
          %4873 = sbr.rel (%p4871) target = $region44
        $region43: #{tpu_custom_call.1} parent=27 // pred_region
          %v4874 = vld [vmem:[#allocation2] sm:$0xff]
          %4875 = vst [vmem:[%s239] sm:$0xff] %v4874
        $region44: #{tpu_custom_call.1} parent=27 // pred_fallthru
          _
        %s4876 = sand.u32 %s106, 1
        %s4877 = scalar_lea.sflag [#allocation5], %s4876
        %s4878 = sand.u32 %s106, 1
        %s4879 = smul.addr %s4878, 8
        %s4880 = scalar_lea.vmem [#allocation8], %s4879
        // Predicated region
        $region45: #{tpu_custom_call.1} parent=27 // pred_check
          %p4881 = pneg %p116
        $region46: #{tpu_custom_call.1} parent=27 // pred_check_branch
          %4883 = sbr.rel (%p4881) target = $region48
        $region47: #{tpu_custom_call.1} parent=27 // pred_region
          %s4885 = ssub.s32 128, 128
          %4886 = vsyncadd %s4877, %s4885
          %s4887 = smul.addr %s26, 128
          %s4888 = scalar_lea.hbm %s2, %s4887
          %s4890 = sshll.u32 %s4880, 4
          %s4891 = int_to_ptr.vmem [resolvable:$true] %s4890
          %4893 = dma.vmem_to_hbm [thread:$0]  %s4891, 128, %s4888, %s4877
        $region48: #{tpu_custom_call.1} parent=27 // pred_fallthru
          _
      $region28: #{tpu_custom_call.1} parent=5 // pred_fallthru
        _
      %p4894 = scmp.le.s32.totalorder 2, %s17
      // Predicated region
      $region49: #{tpu_custom_call.1} parent=5 // pred_check
        %p4895 = pneg %p4894
      $region50: #{tpu_custom_call.1} parent=5 // pred_check_branch
        %4897 = sbr.rel (%p4895) target = $region52
      $region51: #{tpu_custom_call.1} parent=5 // pred_region
        %s4898 = ssub.s32 %s17, 2
        // Predicated region
        $region53: #{tpu_custom_call.1} parent=51 // pred_check
          %p4899 = pneg %p122
        $region54: #{tpu_custom_call.1} parent=51 // pred_check_branch
          %4901 = sbr.rel (%p4899) target = $region56
        $region55: #{tpu_custom_call.1} parent=51 // pred_region
          %s4902 = sand.u32 %s107, 1
          %s4903 = scalar_lea.sflag [#allocation5], %s4902
          %s4904 = sand.u32 %s107, 1
          %s4905 = smul.addr %s4904, 8
          %s4906 = scalar_lea.vmem [#allocation8], %s4905
          %4907 = dma.done %s4903, 128
        $region56: #{tpu_custom_call.1} parent=51 // pred_fallthru
          _
      $region52: #{tpu_custom_call.1} parent=5 // pred_fallthru
        _
    $region6: #{tpu_custom_call.1} parent=1 // loop_footer
      %s21 = sadd.s32 1, %s17
    $region7: #{tpu_custom_call.1} parent=1 // loop_footer_branch
      %16 = sbr.rel target = $region3
    $region8: #{tpu_custom_call.1} parent=1 // loop_exit
      _
    %4908 = vsyncpa [#allocation4], 1
    %s4909 = scalar_lea.sflag [#allocation4], 1
    %4910 = vsyncpa %s4909, 1
    %4911 = vsyncpa [#allocation7], 1
    %s4912 = scalar_lea.sflag [#allocation7], 1
    %4913 = vsyncpa %s4912, 1
    %4914 = vsyncpa [#allocation5], 1
    %s4915 = scalar_lea.sflag [#allocation5], 1
    %4916 = vsyncpa %s4915, 1

</llo_original>
